<compile_context>
chip_gen: v7x
topology: tpu7x:2x2x1
jax: 0.10.0
libtpu: 0.0.40
codegen_flags: <defaults>
</compile_context>

<pallas_src>
import jax
import jax.numpy as jnp
from jax.experimental import pallas as pl
from jax.experimental.pallas import tpu as pltpu


def lstm_fc_logsoftmax_kernel(xt_ref, wih_ref, b_ref, whh_ref, fcw_ref, fcb_ref,
                              out_ref):
    T = xt_ref.shape[0]
    B = xt_ref.shape[1]
    H = whh_ref.shape[1]

    # ---- hoisted input projection (off the recurrence critical path) -------
    # x is time-major (T, B, 1); input size is 1, so x_t @ W_ih == x_t * w_ih.
    x3 = xt_ref[...]                               # (T, B, 1)
    pre_i = x3 * wih_ref[0] + b_ref[0]             # (T, B, H), lane-aligned
    pre_f = x3 * wih_ref[1] + b_ref[1]
    pre_g = x3 * wih_ref[2] + b_ref[2]
    pre_o = x3 * wih_ref[3] + b_ref[3]

    # Per-gate recurrent weights -> four (H,H) dots, no post-matmul lane slicing.
    whh_i = whh_ref[0]
    whh_f = whh_ref[1]
    whh_g = whh_ref[2]
    whh_o = whh_ref[3]

    # ---- recurrence: h/c live in vregs (carried values, no VMEM scratch) ---
    h = jnp.zeros((B, H), jnp.float32)
    c = jnp.zeros((B, H), jnp.float32)
    for t in range(T):   # static trip count -> fully unrolled for the scheduler
        i_g = jax.nn.sigmoid(
            pre_i[t] + jnp.dot(h, whh_i, preferred_element_type=jnp.float32))
        f_g = jax.nn.sigmoid(
            pre_f[t] + jnp.dot(h, whh_f, preferred_element_type=jnp.float32))
        g_g = jnp.tanh(
            pre_g[t] + jnp.dot(h, whh_g, preferred_element_type=jnp.float32))
        o_g = jax.nn.sigmoid(
            pre_o[t] + jnp.dot(h, whh_o, preferred_element_type=jnp.float32))
        c = f_g * c + i_g * g_g
        h = o_g * jnp.tanh(c)

    # ---- FC head + log_softmax over the batch axis ---------------------------
    # PyTorch: F.log_softmax(fc(h_n).unsqueeze(0), dim=1) -> softmax over the
    # batch axis of (1, B, O); here that is axis 0 of (B, O).
    logits = (jnp.dot(h, fcw_ref[...], preferred_element_type=jnp.float32)
              + fcb_ref[...])                                   # (B, O)
    m = jnp.max(logits, axis=0, keepdims=True)
    z = logits - m
    lse = jnp.log(jnp.sum(jnp.exp(z), axis=0, keepdims=True))
    out_ref[...] = z - lse


def lstm_model_forward(x, params):
    """x: (B, T) float32.  Returns (1, B, O) log-probabilities (over batch)."""
    wih, whh, b, fcw, fcb = params      # (4,1,H), (4,H,H), (4,1,H), (H,O), (1,O)
    B, T = x.shape
    H = whh.shape[1]
    O = fcw.shape[1]
    x_t = x.T[:, :, None]               # time-major (T, B, 1)
    out = pl.pallas_call(
        lstm_fc_logsoftmax_kernel,
        out_shape=jax.ShapeDtypeStruct((B, O), jnp.float32),
        in_specs=[pl.BlockSpec(memory_space=pltpu.MemorySpace.VMEM)] * 6,
        out_specs=pl.BlockSpec(memory_space=pltpu.MemorySpace.VMEM),
    )(x_t, wih, b, whh, fcw, fcb)
    return out.reshape(1, B, O)


def init_params(key, hidden_dim, output_dim):
    """Deterministic init mirroring nn.LSTM / nn.Linear (gate order i,f,g,o).
    Stored pre-split per gate: W_ih (4,1,H), W_hh (4,H,H), b = b_ih+b_hh (4,1,H),
    fc_w (H,O), fc_b (1,O)."""
    H, O = hidden_dim, output_dim
    k = 1.0 / jnp.sqrt(jnp.float32(H))
    ks = jax.random.split(key, 6)
    wih = jax.random.uniform(ks[0], (4, 1, H), jnp.float32, -k, k)
    whh = jax.random.uniform(ks[1], (4, H, H), jnp.float32, -k, k)
    b_ih = jax.random.uniform(ks[2], (4, 1, H), jnp.float32, -k, k)
    b_hh = jax.random.uniform(ks[3], (4, 1, H), jnp.float32, -k, k)
    fcw = jax.random.uniform(ks[4], (H, O), jnp.float32, -k, k)
    fcb = jax.random.uniform(ks[5], (1, O), jnp.float32, -k, k)
    return wih, whh, b_ih + b_hh, fcw, fcb


def reference_forward(x, params):
    """Pure-JAX reference mirroring the PyTorch forward, for a sanity check."""
    wih, whh, b, fcw, fcb = params
    B, T = x.shape
    H = whh.shape[1]
    h = jnp.zeros((B, H), jnp.float32)
    c = jnp.zeros((B, H), jnp.float32)
    for t in range(T):
        xt = x[:, t:t + 1]                                   # (B, 1)
        i_g = jax.nn.sigmoid(xt * wih[0] + h @ whh[0] + b[0])
        f_g = jax.nn.sigmoid(xt * wih[1] + h @ whh[1] + b[1])
        g_g = jnp.tanh(xt * wih[2] + h @ whh[2] + b[2])
        o_g = jax.nn.sigmoid(xt * wih[3] + h @ whh[3] + b[3])
        c = f_g * c + i_g * g_g
        h = o_g * jnp.tanh(c)
    logits = h @ fcw + fcb                                   # (B, O)
    return jax.nn.log_softmax(logits[None, :, :], axis=1)


if __name__ == "__main__":
    B, T = 2, 8          # batch, sequence length
    hidden_dim = 32
    output_dim = 16      # ctor input_dim is unused by the PyTorch forward

    key = jax.random.PRNGKey(0)
    kx, kp = jax.random.split(key)
    x = jax.random.normal(kx, (B, T), jnp.float32)
    params = init_params(kp, hidden_dim, output_dim)

    out = lstm_model_forward(x, params)
    out = jax.block_until_ready(out)

    ref = reference_forward(x, params)
    assert out.shape == (1, B, output_dim)
    assert jnp.allclose(out, ref, atol=1e-4, rtol=1e-4), "mismatch vs reference"

    print("KERNEL_OK")
</pallas_src>

<mosaic_0001>
module attributes {stable_mosaic.version = 11 : i64} {
  func.func @lstm_fc_logsoftmax_kernel(%arg0: memref<8x2x1xf32, #tpu.memory_space<vmem>>, %arg1: memref<4x1x32xf32, #tpu.memory_space<vmem>>, %arg2: memref<4x1x32xf32, #tpu.memory_space<vmem>>, %arg3: memref<4x32x32xf32, #tpu.memory_space<vmem>>, %arg4: memref<32x16xf32, #tpu.memory_space<vmem>>, %arg5: memref<1x16xf32, #tpu.memory_space<vmem>>, %arg6: memref<2x16xf32, #tpu.memory_space<vmem>>) attributes {dimension_semantics = [], scalar_prefetch = 0 : i64, scratch_operands = 0 : i64, tpu.core_type = #tpu.core_type<tc>} {
    %c0 = arith.constant 0 : index
    %c0_0 = arith.constant 0 : index
    %c0_1 = arith.constant 0 : index
    %0 = vector.load %arg0[%c0, %c0_0, %c0_1] : memref<8x2x1xf32, #tpu.memory_space<vmem>>, vector<8x2x1xf32>
    %c0_2 = arith.constant 0 : index
    %c0_3 = arith.constant 0 : index
    %c0_4 = arith.constant 0 : index
    %1 = vector.load %arg1[%c0_2, %c0_3, %c0_4] : memref<4x1x32xf32, #tpu.memory_space<vmem>>, vector<1x1x32xf32>
    %2 = vector.shape_cast %1 : vector<1x1x32xf32> to vector<1x32xf32>
    %3 = vector.shape_cast %2 : vector<1x32xf32> to vector<1x1x32xf32>
    %4 = vector.broadcast %0 : vector<8x2x1xf32> to vector<8x2x32xf32>
    %5 = vector.broadcast %3 : vector<1x1x32xf32> to vector<8x2x32xf32>
    %6 = arith.mulf %4, %5 : vector<8x2x32xf32>
    %c0_5 = arith.constant 0 : index
    %c0_6 = arith.constant 0 : index
    %c0_7 = arith.constant 0 : index
    %7 = vector.load %arg2[%c0_5, %c0_6, %c0_7] : memref<4x1x32xf32, #tpu.memory_space<vmem>>, vector<1x1x32xf32>
    %8 = vector.shape_cast %7 : vector<1x1x32xf32> to vector<1x32xf32>
    %9 = vector.shape_cast %8 : vector<1x32xf32> to vector<1x1x32xf32>
    %10 = vector.broadcast %9 : vector<1x1x32xf32> to vector<8x2x32xf32>
    %11 = arith.addf %6, %10 : vector<8x2x32xf32>
    %c1 = arith.constant 1 : index
    %c0_8 = arith.constant 0 : index
    %c0_9 = arith.constant 0 : index
    %12 = vector.load %arg1[%c1, %c0_8, %c0_9] : memref<4x1x32xf32, #tpu.memory_space<vmem>>, vector<1x1x32xf32>
    %13 = vector.shape_cast %12 : vector<1x1x32xf32> to vector<1x32xf32>
    %14 = vector.shape_cast %13 : vector<1x32xf32> to vector<1x1x32xf32>
    %15 = vector.broadcast %0 : vector<8x2x1xf32> to vector<8x2x32xf32>
    %16 = vector.broadcast %14 : vector<1x1x32xf32> to vector<8x2x32xf32>
    %17 = arith.mulf %15, %16 : vector<8x2x32xf32>
    %c1_10 = arith.constant 1 : index
    %c0_11 = arith.constant 0 : index
    %c0_12 = arith.constant 0 : index
    %18 = vector.load %arg2[%c1_10, %c0_11, %c0_12] : memref<4x1x32xf32, #tpu.memory_space<vmem>>, vector<1x1x32xf32>
    %19 = vector.shape_cast %18 : vector<1x1x32xf32> to vector<1x32xf32>
    %20 = vector.shape_cast %19 : vector<1x32xf32> to vector<1x1x32xf32>
    %21 = vector.broadcast %20 : vector<1x1x32xf32> to vector<8x2x32xf32>
    %22 = arith.addf %17, %21 : vector<8x2x32xf32>
    %c2 = arith.constant 2 : index
    %c0_13 = arith.constant 0 : index
    %c0_14 = arith.constant 0 : index
    %23 = vector.load %arg1[%c2, %c0_13, %c0_14] : memref<4x1x32xf32, #tpu.memory_space<vmem>>, vector<1x1x32xf32>
    %24 = vector.shape_cast %23 : vector<1x1x32xf32> to vector<1x32xf32>
    %25 = vector.shape_cast %24 : vector<1x32xf32> to vector<1x1x32xf32>
    %26 = vector.broadcast %0 : vector<8x2x1xf32> to vector<8x2x32xf32>
    %27 = vector.broadcast %25 : vector<1x1x32xf32> to vector<8x2x32xf32>
    %28 = arith.mulf %26, %27 : vector<8x2x32xf32>
    %c2_15 = arith.constant 2 : index
    %c0_16 = arith.constant 0 : index
    %c0_17 = arith.constant 0 : index
    %29 = vector.load %arg2[%c2_15, %c0_16, %c0_17] : memref<4x1x32xf32, #tpu.memory_space<vmem>>, vector<1x1x32xf32>
    %30 = vector.shape_cast %29 : vector<1x1x32xf32> to vector<1x32xf32>
    %31 = vector.shape_cast %30 : vector<1x32xf32> to vector<1x1x32xf32>
    %32 = vector.broadcast %31 : vector<1x1x32xf32> to vector<8x2x32xf32>
    %33 = arith.addf %28, %32 : vector<8x2x32xf32>
    %c3 = arith.constant 3 : index
    %c0_18 = arith.constant 0 : index
    %c0_19 = arith.constant 0 : index
    %34 = vector.load %arg1[%c3, %c0_18, %c0_19] : memref<4x1x32xf32, #tpu.memory_space<vmem>>, vector<1x1x32xf32>
    %35 = vector.shape_cast %34 : vector<1x1x32xf32> to vector<1x32xf32>
    %36 = vector.shape_cast %35 : vector<1x32xf32> to vector<1x1x32xf32>
    %37 = vector.broadcast %0 : vector<8x2x1xf32> to vector<8x2x32xf32>
    %38 = vector.broadcast %36 : vector<1x1x32xf32> to vector<8x2x32xf32>
    %39 = arith.mulf %37, %38 : vector<8x2x32xf32>
    %c3_20 = arith.constant 3 : index
    %c0_21 = arith.constant 0 : index
    %c0_22 = arith.constant 0 : index
    %40 = vector.load %arg2[%c3_20, %c0_21, %c0_22] : memref<4x1x32xf32, #tpu.memory_space<vmem>>, vector<1x1x32xf32>
    %41 = vector.shape_cast %40 : vector<1x1x32xf32> to vector<1x32xf32>
    %42 = vector.shape_cast %41 : vector<1x32xf32> to vector<1x1x32xf32>
    %43 = vector.broadcast %42 : vector<1x1x32xf32> to vector<8x2x32xf32>
    %44 = arith.addf %39, %43 : vector<8x2x32xf32>
    %c0_23 = arith.constant 0 : index
    %c0_24 = arith.constant 0 : index
    %c0_25 = arith.constant 0 : index
    %45 = vector.load %arg3[%c0_23, %c0_24, %c0_25] : memref<4x32x32xf32, #tpu.memory_space<vmem>>, vector<1x32x32xf32>
    %46 = vector.shape_cast %45 : vector<1x32x32xf32> to vector<32x32xf32>
    %c1_26 = arith.constant 1 : index
    %c0_27 = arith.constant 0 : index
    %c0_28 = arith.constant 0 : index
    %47 = vector.load %arg3[%c1_26, %c0_27, %c0_28] : memref<4x32x32xf32, #tpu.memory_space<vmem>>, vector<1x32x32xf32>
    %48 = vector.shape_cast %47 : vector<1x32x32xf32> to vector<32x32xf32>
    %c2_29 = arith.constant 2 : index
    %c0_30 = arith.constant 0 : index
    %c0_31 = arith.constant 0 : index
    %49 = vector.load %arg3[%c2_29, %c0_30, %c0_31] : memref<4x32x32xf32, #tpu.memory_space<vmem>>, vector<1x32x32xf32>
    %50 = vector.shape_cast %49 : vector<1x32x32xf32> to vector<32x32xf32>
    %c3_32 = arith.constant 3 : index
    %c0_33 = arith.constant 0 : index
    %c0_34 = arith.constant 0 : index
    %51 = vector.load %arg3[%c3_32, %c0_33, %c0_34] : memref<4x32x32xf32, #tpu.memory_space<vmem>>, vector<1x32x32xf32>
    %52 = vector.shape_cast %51 : vector<1x32x32xf32> to vector<32x32xf32>
    %cst = arith.constant 0.000000e+00 : f32
    %53 = vector.broadcast %cst : f32 to vector<2x32xf32>
    %cst_35 = arith.constant 0.000000e+00 : f32
    %54 = vector.broadcast %cst_35 : f32 to vector<2x32xf32>
    %55 = vector.extract_strided_slice %11 {offsets = [0, 0, 0], sizes = [1, 2, 32], strides = [1, 1, 1]} : vector<8x2x32xf32> to vector<1x2x32xf32>
    %56 = vector.shape_cast %55 : vector<1x2x32xf32> to vector<2x32xf32>
    %cst_36 = arith.constant dense<0.000000e+00> : vector<2x32xf32>
    %57 = tpu.matmul %53, %46, %cst_36 {dimension_numbers = #tpu.dot_dimension_numbers<[1], [0], [0], [1], [0, 0, 1, 1], [], []>} : vector<2x32xf32>, vector<32x32xf32>, vector<2x32xf32> -> vector<2x32xf32>
    %58 = arith.addf %56, %57 : vector<2x32xf32>
    %59 = arith.negf %58 : vector<2x32xf32>
    %60 = math.exp %59 : vector<2x32xf32>
    %cst_37 = arith.constant 1.000000e+00 : f32
    %61 = vector.broadcast %cst_37 : f32 to vector<2x32xf32>
    %62 = arith.addf %61, %60 : vector<2x32xf32>
    %63 = arith.divf %61, %62 : vector<2x32xf32>
    %64 = vector.extract_strided_slice %22 {offsets = [0, 0, 0], sizes = [1, 2, 32], strides = [1, 1, 1]} : vector<8x2x32xf32> to vector<1x2x32xf32>
    %65 = vector.shape_cast %64 : vector<1x2x32xf32> to vector<2x32xf32>
    %cst_38 = arith.constant dense<0.000000e+00> : vector<2x32xf32>
    %66 = tpu.matmul %53, %48, %cst_38 {dimension_numbers = #tpu.dot_dimension_numbers<[1], [0], [0], [1], [0, 0, 1, 1], [], []>} : vector<2x32xf32>, vector<32x32xf32>, vector<2x32xf32> -> vector<2x32xf32>
    %67 = arith.addf %65, %66 : vector<2x32xf32>
    %68 = arith.negf %67 : vector<2x32xf32>
    %69 = math.exp %68 : vector<2x32xf32>
    %cst_39 = arith.constant 1.000000e+00 : f32
    %70 = vector.broadcast %cst_39 : f32 to vector<2x32xf32>
    %71 = arith.addf %70, %69 : vector<2x32xf32>
    %72 = arith.divf %70, %71 : vector<2x32xf32>
    %73 = vector.extract_strided_slice %33 {offsets = [0, 0, 0], sizes = [1, 2, 32], strides = [1, 1, 1]} : vector<8x2x32xf32> to vector<1x2x32xf32>
    %74 = vector.shape_cast %73 : vector<1x2x32xf32> to vector<2x32xf32>
    %cst_40 = arith.constant dense<0.000000e+00> : vector<2x32xf32>
    %75 = tpu.matmul %53, %50, %cst_40 {dimension_numbers = #tpu.dot_dimension_numbers<[1], [0], [0], [1], [0, 0, 1, 1], [], []>} : vector<2x32xf32>, vector<32x32xf32>, vector<2x32xf32> -> vector<2x32xf32>
    %76 = arith.addf %74, %75 : vector<2x32xf32>
    %77 = math.tanh %76 : vector<2x32xf32>
    %78 = vector.extract_strided_slice %44 {offsets = [0, 0, 0], sizes = [1, 2, 32], strides = [1, 1, 1]} : vector<8x2x32xf32> to vector<1x2x32xf32>
    %79 = vector.shape_cast %78 : vector<1x2x32xf32> to vector<2x32xf32>
    %cst_41 = arith.constant dense<0.000000e+00> : vector<2x32xf32>
    %80 = tpu.matmul %53, %52, %cst_41 {dimension_numbers = #tpu.dot_dimension_numbers<[1], [0], [0], [1], [0, 0, 1, 1], [], []>} : vector<2x32xf32>, vector<32x32xf32>, vector<2x32xf32> -> vector<2x32xf32>
    %81 = arith.addf %79, %80 : vector<2x32xf32>
    %82 = arith.negf %81 : vector<2x32xf32>
    %83 = math.exp %82 : vector<2x32xf32>
    %cst_42 = arith.constant 1.000000e+00 : f32
    %84 = vector.broadcast %cst_42 : f32 to vector<2x32xf32>
    %85 = arith.addf %84, %83 : vector<2x32xf32>
    %86 = arith.divf %84, %85 : vector<2x32xf32>
    %87 = arith.mulf %72, %54 : vector<2x32xf32>
    %88 = arith.mulf %63, %77 : vector<2x32xf32>
    %89 = arith.addf %87, %88 : vector<2x32xf32>
    %90 = math.tanh %89 : vector<2x32xf32>
    %91 = arith.mulf %86, %90 : vector<2x32xf32>
    %92 = vector.extract_strided_slice %11 {offsets = [1, 0, 0], sizes = [1, 2, 32], strides = [1, 1, 1]} : vector<8x2x32xf32> to vector<1x2x32xf32>
    %93 = vector.shape_cast %92 : vector<1x2x32xf32> to vector<2x32xf32>
    %cst_43 = arith.constant dense<0.000000e+00> : vector<2x32xf32>
    %94 = tpu.matmul %91, %46, %cst_43 {dimension_numbers = #tpu.dot_dimension_numbers<[1], [0], [0], [1], [0, 0, 1, 1], [], []>} : vector<2x32xf32>, vector<32x32xf32>, vector<2x32xf32> -> vector<2x32xf32>
    %95 = arith.addf %93, %94 : vector<2x32xf32>
    %96 = arith.negf %95 : vector<2x32xf32>
    %97 = math.exp %96 : vector<2x32xf32>
    %cst_44 = arith.constant 1.000000e+00 : f32
    %98 = vector.broadcast %cst_44 : f32 to vector<2x32xf32>
    %99 = arith.addf %98, %97 : vector<2x32xf32>
    %100 = arith.divf %98, %99 : vector<2x32xf32>
    %101 = vector.extract_strided_slice %22 {offsets = [1, 0, 0], sizes = [1, 2, 32], strides = [1, 1, 1]} : vector<8x2x32xf32> to vector<1x2x32xf32>
    %102 = vector.shape_cast %101 : vector<1x2x32xf32> to vector<2x32xf32>
    %cst_45 = arith.constant dense<0.000000e+00> : vector<2x32xf32>
    %103 = tpu.matmul %91, %48, %cst_45 {dimension_numbers = #tpu.dot_dimension_numbers<[1], [0], [0], [1], [0, 0, 1, 1], [], []>} : vector<2x32xf32>, vector<32x32xf32>, vector<2x32xf32> -> vector<2x32xf32>
    %104 = arith.addf %102, %103 : vector<2x32xf32>
    %105 = arith.negf %104 : vector<2x32xf32>
    %106 = math.exp %105 : vector<2x32xf32>
    %cst_46 = arith.constant 1.000000e+00 : f32
    %107 = vector.broadcast %cst_46 : f32 to vector<2x32xf32>
    %108 = arith.addf %107, %106 : vector<2x32xf32>
    %109 = arith.divf %107, %108 : vector<2x32xf32>
    %110 = vector.extract_strided_slice %33 {offsets = [1, 0, 0], sizes = [1, 2, 32], strides = [1, 1, 1]} : vector<8x2x32xf32> to vector<1x2x32xf32>
    %111 = vector.shape_cast %110 : vector<1x2x32xf32> to vector<2x32xf32>
    %cst_47 = arith.constant dense<0.000000e+00> : vector<2x32xf32>
    %112 = tpu.matmul %91, %50, %cst_47 {dimension_numbers = #tpu.dot_dimension_numbers<[1], [0], [0], [1], [0, 0, 1, 1], [], []>} : vector<2x32xf32>, vector<32x32xf32>, vector<2x32xf32> -> vector<2x32xf32>
    %113 = arith.addf %111, %112 : vector<2x32xf32>
    %114 = math.tanh %113 : vector<2x32xf32>
    %115 = vector.extract_strided_slice %44 {offsets = [1, 0, 0], sizes = [1, 2, 32], strides = [1, 1, 1]} : vector<8x2x32xf32> to vector<1x2x32xf32>
    %116 = vector.shape_cast %115 : vector<1x2x32xf32> to vector<2x32xf32>
    %cst_48 = arith.constant dense<0.000000e+00> : vector<2x32xf32>
    %117 = tpu.matmul %91, %52, %cst_48 {dimension_numbers = #tpu.dot_dimension_numbers<[1], [0], [0], [1], [0, 0, 1, 1], [], []>} : vector<2x32xf32>, vector<32x32xf32>, vector<2x32xf32> -> vector<2x32xf32>
    %118 = arith.addf %116, %117 : vector<2x32xf32>
    %119 = arith.negf %118 : vector<2x32xf32>
    %120 = math.exp %119 : vector<2x32xf32>
    %cst_49 = arith.constant 1.000000e+00 : f32
    %121 = vector.broadcast %cst_49 : f32 to vector<2x32xf32>
    %122 = arith.addf %121, %120 : vector<2x32xf32>
    %123 = arith.divf %121, %122 : vector<2x32xf32>
    %124 = arith.mulf %109, %89 : vector<2x32xf32>
    %125 = arith.mulf %100, %114 : vector<2x32xf32>
    %126 = arith.addf %124, %125 : vector<2x32xf32>
    %127 = math.tanh %126 : vector<2x32xf32>
    %128 = arith.mulf %123, %127 : vector<2x32xf32>
    %129 = vector.extract_strided_slice %11 {offsets = [2, 0, 0], sizes = [1, 2, 32], strides = [1, 1, 1]} : vector<8x2x32xf32> to vector<1x2x32xf32>
    %130 = vector.shape_cast %129 : vector<1x2x32xf32> to vector<2x32xf32>
    %cst_50 = arith.constant dense<0.000000e+00> : vector<2x32xf32>
    %131 = tpu.matmul %128, %46, %cst_50 {dimension_numbers = #tpu.dot_dimension_numbers<[1], [0], [0], [1], [0, 0, 1, 1], [], []>} : vector<2x32xf32>, vector<32x32xf32>, vector<2x32xf32> -> vector<2x32xf32>
    %132 = arith.addf %130, %131 : vector<2x32xf32>
    %133 = arith.negf %132 : vector<2x32xf32>
    %134 = math.exp %133 : vector<2x32xf32>
    %cst_51 = arith.constant 1.000000e+00 : f32
    %135 = vector.broadcast %cst_51 : f32 to vector<2x32xf32>
    %136 = arith.addf %135, %134 : vector<2x32xf32>
    %137 = arith.divf %135, %136 : vector<2x32xf32>
    %138 = vector.extract_strided_slice %22 {offsets = [2, 0, 0], sizes = [1, 2, 32], strides = [1, 1, 1]} : vector<8x2x32xf32> to vector<1x2x32xf32>
    %139 = vector.shape_cast %138 : vector<1x2x32xf32> to vector<2x32xf32>
    %cst_52 = arith.constant dense<0.000000e+00> : vector<2x32xf32>
    %140 = tpu.matmul %128, %48, %cst_52 {dimension_numbers = #tpu.dot_dimension_numbers<[1], [0], [0], [1], [0, 0, 1, 1], [], []>} : vector<2x32xf32>, vector<32x32xf32>, vector<2x32xf32> -> vector<2x32xf32>
    %141 = arith.addf %139, %140 : vector<2x32xf32>
    %142 = arith.negf %141 : vector<2x32xf32>
    %143 = math.exp %142 : vector<2x32xf32>
    %cst_53 = arith.constant 1.000000e+00 : f32
    %144 = vector.broadcast %cst_53 : f32 to vector<2x32xf32>
    %145 = arith.addf %144, %143 : vector<2x32xf32>
    %146 = arith.divf %144, %145 : vector<2x32xf32>
    %147 = vector.extract_strided_slice %33 {offsets = [2, 0, 0], sizes = [1, 2, 32], strides = [1, 1, 1]} : vector<8x2x32xf32> to vector<1x2x32xf32>
    %148 = vector.shape_cast %147 : vector<1x2x32xf32> to vector<2x32xf32>
    %cst_54 = arith.constant dense<0.000000e+00> : vector<2x32xf32>
    %149 = tpu.matmul %128, %50, %cst_54 {dimension_numbers = #tpu.dot_dimension_numbers<[1], [0], [0], [1], [0, 0, 1, 1], [], []>} : vector<2x32xf32>, vector<32x32xf32>, vector<2x32xf32> -> vector<2x32xf32>
    %150 = arith.addf %148, %149 : vector<2x32xf32>
    %151 = math.tanh %150 : vector<2x32xf32>
    %152 = vector.extract_strided_slice %44 {offsets = [2, 0, 0], sizes = [1, 2, 32], strides = [1, 1, 1]} : vector<8x2x32xf32> to vector<1x2x32xf32>
    %153 = vector.shape_cast %152 : vector<1x2x32xf32> to vector<2x32xf32>
    %cst_55 = arith.constant dense<0.000000e+00> : vector<2x32xf32>
    %154 = tpu.matmul %128, %52, %cst_55 {dimension_numbers = #tpu.dot_dimension_numbers<[1], [0], [0], [1], [0, 0, 1, 1], [], []>} : vector<2x32xf32>, vector<32x32xf32>, vector<2x32xf32> -> vector<2x32xf32>
    %155 = arith.addf %153, %154 : vector<2x32xf32>
    %156 = arith.negf %155 : vector<2x32xf32>
    %157 = math.exp %156 : vector<2x32xf32>
    %cst_56 = arith.constant 1.000000e+00 : f32
    %158 = vector.broadcast %cst_56 : f32 to vector<2x32xf32>
    %159 = arith.addf %158, %157 : vector<2x32xf32>
    %160 = arith.divf %158, %159 : vector<2x32xf32>
    %161 = arith.mulf %146, %126 : vector<2x32xf32>
    %162 = arith.mulf %137, %151 : vector<2x32xf32>
    %163 = arith.addf %161, %162 : vector<2x32xf32>
    %164 = math.tanh %163 : vector<2x32xf32>
    %165 = arith.mulf %160, %164 : vector<2x32xf32>
    %166 = vector.extract_strided_slice %11 {offsets = [3, 0, 0], sizes = [1, 2, 32], strides = [1, 1, 1]} : vector<8x2x32xf32> to vector<1x2x32xf32>
    %167 = vector.shape_cast %166 : vector<1x2x32xf32> to vector<2x32xf32>
    %cst_57 = arith.constant dense<0.000000e+00> : vector<2x32xf32>
    %168 = tpu.matmul %165, %46, %cst_57 {dimension_numbers = #tpu.dot_dimension_numbers<[1], [0], [0], [1], [0, 0, 1, 1], [], []>} : vector<2x32xf32>, vector<32x32xf32>, vector<2x32xf32> -> vector<2x32xf32>
    %169 = arith.addf %167, %168 : vector<2x32xf32>
    %170 = arith.negf %169 : vector<2x32xf32>
    %171 = math.exp %170 : vector<2x32xf32>
    %cst_58 = arith.constant 1.000000e+00 : f32
    %172 = vector.broadcast %cst_58 : f32 to vector<2x32xf32>
    %173 = arith.addf %172, %171 : vector<2x32xf32>
    %174 = arith.divf %172, %173 : vector<2x32xf32>
    %175 = vector.extract_strided_slice %22 {offsets = [3, 0, 0], sizes = [1, 2, 32], strides = [1, 1, 1]} : vector<8x2x32xf32> to vector<1x2x32xf32>
    %176 = vector.shape_cast %175 : vector<1x2x32xf32> to vector<2x32xf32>
    %cst_59 = arith.constant dense<0.000000e+00> : vector<2x32xf32>
    %177 = tpu.matmul %165, %48, %cst_59 {dimension_numbers = #tpu.dot_dimension_numbers<[1], [0], [0], [1], [0, 0, 1, 1], [], []>} : vector<2x32xf32>, vector<32x32xf32>, vector<2x32xf32> -> vector<2x32xf32>
    %178 = arith.addf %176, %177 : vector<2x32xf32>
    %179 = arith.negf %178 : vector<2x32xf32>
    %180 = math.exp %179 : vector<2x32xf32>
    %cst_60 = arith.constant 1.000000e+00 : f32
    %181 = vector.broadcast %cst_60 : f32 to vector<2x32xf32>
    %182 = arith.addf %181, %180 : vector<2x32xf32>
    %183 = arith.divf %181, %182 : vector<2x32xf32>
    %184 = vector.extract_strided_slice %33 {offsets = [3, 0, 0], sizes = [1, 2, 32], strides = [1, 1, 1]} : vector<8x2x32xf32> to vector<1x2x32xf32>
    %185 = vector.shape_cast %184 : vector<1x2x32xf32> to vector<2x32xf32>
    %cst_61 = arith.constant dense<0.000000e+00> : vector<2x32xf32>
    %186 = tpu.matmul %165, %50, %cst_61 {dimension_numbers = #tpu.dot_dimension_numbers<[1], [0], [0], [1], [0, 0, 1, 1], [], []>} : vector<2x32xf32>, vector<32x32xf32>, vector<2x32xf32> -> vector<2x32xf32>
    %187 = arith.addf %185, %186 : vector<2x32xf32>
    %188 = math.tanh %187 : vector<2x32xf32>
    %189 = vector.extract_strided_slice %44 {offsets = [3, 0, 0], sizes = [1, 2, 32], strides = [1, 1, 1]} : vector<8x2x32xf32> to vector<1x2x32xf32>
    %190 = vector.shape_cast %189 : vector<1x2x32xf32> to vector<2x32xf32>
    %cst_62 = arith.constant dense<0.000000e+00> : vector<2x32xf32>
    %191 = tpu.matmul %165, %52, %cst_62 {dimension_numbers = #tpu.dot_dimension_numbers<[1], [0], [0], [1], [0, 0, 1, 1], [], []>} : vector<2x32xf32>, vector<32x32xf32>, vector<2x32xf32> -> vector<2x32xf32>
    %192 = arith.addf %190, %191 : vector<2x32xf32>
    %193 = arith.negf %192 : vector<2x32xf32>
    %194 = math.exp %193 : vector<2x32xf32>
    %cst_63 = arith.constant 1.000000e+00 : f32
    %195 = vector.broadcast %cst_63 : f32 to vector<2x32xf32>
    %196 = arith.addf %195, %194 : vector<2x32xf32>
    %197 = arith.divf %195, %196 : vector<2x32xf32>
    %198 = arith.mulf %183, %163 : vector<2x32xf32>
    %199 = arith.mulf %174, %188 : vector<2x32xf32>
    %200 = arith.addf %198, %199 : vector<2x32xf32>
    %201 = math.tanh %200 : vector<2x32xf32>
    %202 = arith.mulf %197, %201 : vector<2x32xf32>
    %203 = vector.extract_strided_slice %11 {offsets = [4, 0, 0], sizes = [1, 2, 32], strides = [1, 1, 1]} : vector<8x2x32xf32> to vector<1x2x32xf32>
    %204 = vector.shape_cast %203 : vector<1x2x32xf32> to vector<2x32xf32>
    %cst_64 = arith.constant dense<0.000000e+00> : vector<2x32xf32>
    %205 = tpu.matmul %202, %46, %cst_64 {dimension_numbers = #tpu.dot_dimension_numbers<[1], [0], [0], [1], [0, 0, 1, 1], [], []>} : vector<2x32xf32>, vector<32x32xf32>, vector<2x32xf32> -> vector<2x32xf32>
    %206 = arith.addf %204, %205 : vector<2x32xf32>
    %207 = arith.negf %206 : vector<2x32xf32>
    %208 = math.exp %207 : vector<2x32xf32>
    %cst_65 = arith.constant 1.000000e+00 : f32
    %209 = vector.broadcast %cst_65 : f32 to vector<2x32xf32>
    %210 = arith.addf %209, %208 : vector<2x32xf32>
    %211 = arith.divf %209, %210 : vector<2x32xf32>
    %212 = vector.extract_strided_slice %22 {offsets = [4, 0, 0], sizes = [1, 2, 32], strides = [1, 1, 1]} : vector<8x2x32xf32> to vector<1x2x32xf32>
    %213 = vector.shape_cast %212 : vector<1x2x32xf32> to vector<2x32xf32>
    %cst_66 = arith.constant dense<0.000000e+00> : vector<2x32xf32>
    %214 = tpu.matmul %202, %48, %cst_66 {dimension_numbers = #tpu.dot_dimension_numbers<[1], [0], [0], [1], [0, 0, 1, 1], [], []>} : vector<2x32xf32>, vector<32x32xf32>, vector<2x32xf32> -> vector<2x32xf32>
    %215 = arith.addf %213, %214 : vector<2x32xf32>
    %216 = arith.negf %215 : vector<2x32xf32>
    %217 = math.exp %216 : vector<2x32xf32>
    %cst_67 = arith.constant 1.000000e+00 : f32
    %218 = vector.broadcast %cst_67 : f32 to vector<2x32xf32>
    %219 = arith.addf %218, %217 : vector<2x32xf32>
    %220 = arith.divf %218, %219 : vector<2x32xf32>
    %221 = vector.extract_strided_slice %33 {offsets = [4, 0, 0], sizes = [1, 2, 32], strides = [1, 1, 1]} : vector<8x2x32xf32> to vector<1x2x32xf32>
    %222 = vector.shape_cast %221 : vector<1x2x32xf32> to vector<2x32xf32>
    %cst_68 = arith.constant dense<0.000000e+00> : vector<2x32xf32>
    %223 = tpu.matmul %202, %50, %cst_68 {dimension_numbers = #tpu.dot_dimension_numbers<[1], [0], [0], [1], [0, 0, 1, 1], [], []>} : vector<2x32xf32>, vector<32x32xf32>, vector<2x32xf32> -> vector<2x32xf32>
    %224 = arith.addf %222, %223 : vector<2x32xf32>
    %225 = math.tanh %224 : vector<2x32xf32>
    %226 = vector.extract_strided_slice %44 {offsets = [4, 0, 0], sizes = [1, 2, 32], strides = [1, 1, 1]} : vector<8x2x32xf32> to vector<1x2x32xf32>
    %227 = vector.shape_cast %226 : vector<1x2x32xf32> to vector<2x32xf32>
    %cst_69 = arith.constant dense<0.000000e+00> : vector<2x32xf32>
    %228 = tpu.matmul %202, %52, %cst_69 {dimension_numbers = #tpu.dot_dimension_numbers<[1], [0], [0], [1], [0, 0, 1, 1], [], []>} : vector<2x32xf32>, vector<32x32xf32>, vector<2x32xf32> -> vector<2x32xf32>
    %229 = arith.addf %227, %228 : vector<2x32xf32>
    %230 = arith.negf %229 : vector<2x32xf32>
    %231 = math.exp %230 : vector<2x32xf32>
    %cst_70 = arith.constant 1.000000e+00 : f32
    %232 = vector.broadcast %cst_70 : f32 to vector<2x32xf32>
    %233 = arith.addf %232, %231 : vector<2x32xf32>
    %234 = arith.divf %232, %233 : vector<2x32xf32>
    %235 = arith.mulf %220, %200 : vector<2x32xf32>
    %236 = arith.mulf %211, %225 : vector<2x32xf32>
    %237 = arith.addf %235, %236 : vector<2x32xf32>
    %238 = math.tanh %237 : vector<2x32xf32>
    %239 = arith.mulf %234, %238 : vector<2x32xf32>
    %240 = vector.extract_strided_slice %11 {offsets = [5, 0, 0], sizes = [1, 2, 32], strides = [1, 1, 1]} : vector<8x2x32xf32> to vector<1x2x32xf32>
    %241 = vector.shape_cast %240 : vector<1x2x32xf32> to vector<2x32xf32>
    %cst_71 = arith.constant dense<0.000000e+00> : vector<2x32xf32>
    %242 = tpu.matmul %239, %46, %cst_71 {dimension_numbers = #tpu.dot_dimension_numbers<[1], [0], [0], [1], [0, 0, 1, 1], [], []>} : vector<2x32xf32>, vector<32x32xf32>, vector<2x32xf32> -> vector<2x32xf32>
    %243 = arith.addf %241, %242 : vector<2x32xf32>
    %244 = arith.negf %243 : vector<2x32xf32>
    %245 = math.exp %244 : vector<2x32xf32>
    %cst_72 = arith.constant 1.000000e+00 : f32
    %246 = vector.broadcast %cst_72 : f32 to vector<2x32xf32>
    %247 = arith.addf %246, %245 : vector<2x32xf32>
    %248 = arith.divf %246, %247 : vector<2x32xf32>
    %249 = vector.extract_strided_slice %22 {offsets = [5, 0, 0], sizes = [1, 2, 32], strides = [1, 1, 1]} : vector<8x2x32xf32> to vector<1x2x32xf32>
    %250 = vector.shape_cast %249 : vector<1x2x32xf32> to vector<2x32xf32>
    %cst_73 = arith.constant dense<0.000000e+00> : vector<2x32xf32>
    %251 = tpu.matmul %239, %48, %cst_73 {dimension_numbers = #tpu.dot_dimension_numbers<[1], [0], [0], [1], [0, 0, 1, 1], [], []>} : vector<2x32xf32>, vector<32x32xf32>, vector<2x32xf32> -> vector<2x32xf32>
    %252 = arith.addf %250, %251 : vector<2x32xf32>
    %253 = arith.negf %252 : vector<2x32xf32>
    %254 = math.exp %253 : vector<2x32xf32>
    %cst_74 = arith.constant 1.000000e+00 : f32
    %255 = vector.broadcast %cst_74 : f32 to vector<2x32xf32>
    %256 = arith.addf %255, %254 : vector<2x32xf32>
    %257 = arith.divf %255, %256 : vector<2x32xf32>
    %258 = vector.extract_strided_slice %33 {offsets = [5, 0, 0], sizes = [1, 2, 32], strides = [1, 1, 1]} : vector<8x2x32xf32> to vector<1x2x32xf32>
    %259 = vector.shape_cast %258 : vector<1x2x32xf32> to vector<2x32xf32>
    %cst_75 = arith.constant dense<0.000000e+00> : vector<2x32xf32>
    %260 = tpu.matmul %239, %50, %cst_75 {dimension_numbers = #tpu.dot_dimension_numbers<[1], [0], [0], [1], [0, 0, 1, 1], [], []>} : vector<2x32xf32>, vector<32x32xf32>, vector<2x32xf32> -> vector<2x32xf32>
    %261 = arith.addf %259, %260 : vector<2x32xf32>
    %262 = math.tanh %261 : vector<2x32xf32>
    %263 = vector.extract_strided_slice %44 {offsets = [5, 0, 0], sizes = [1, 2, 32], strides = [1, 1, 1]} : vector<8x2x32xf32> to vector<1x2x32xf32>
    %264 = vector.shape_cast %263 : vector<1x2x32xf32> to vector<2x32xf32>
    %cst_76 = arith.constant dense<0.000000e+00> : vector<2x32xf32>
    %265 = tpu.matmul %239, %52, %cst_76 {dimension_numbers = #tpu.dot_dimension_numbers<[1], [0], [0], [1], [0, 0, 1, 1], [], []>} : vector<2x32xf32>, vector<32x32xf32>, vector<2x32xf32> -> vector<2x32xf32>
    %266 = arith.addf %264, %265 : vector<2x32xf32>
    %267 = arith.negf %266 : vector<2x32xf32>
    %268 = math.exp %267 : vector<2x32xf32>
    %cst_77 = arith.constant 1.000000e+00 : f32
    %269 = vector.broadcast %cst_77 : f32 to vector<2x32xf32>
    %270 = arith.addf %269, %268 : vector<2x32xf32>
    %271 = arith.divf %269, %270 : vector<2x32xf32>
    %272 = arith.mulf %257, %237 : vector<2x32xf32>
    %273 = arith.mulf %248, %262 : vector<2x32xf32>
    %274 = arith.addf %272, %273 : vector<2x32xf32>
    %275 = math.tanh %274 : vector<2x32xf32>
    %276 = arith.mulf %271, %275 : vector<2x32xf32>
    %277 = vector.extract_strided_slice %11 {offsets = [6, 0, 0], sizes = [1, 2, 32], strides = [1, 1, 1]} : vector<8x2x32xf32> to vector<1x2x32xf32>
    %278 = vector.shape_cast %277 : vector<1x2x32xf32> to vector<2x32xf32>
    %cst_78 = arith.constant dense<0.000000e+00> : vector<2x32xf32>
    %279 = tpu.matmul %276, %46, %cst_78 {dimension_numbers = #tpu.dot_dimension_numbers<[1], [0], [0], [1], [0, 0, 1, 1], [], []>} : vector<2x32xf32>, vector<32x32xf32>, vector<2x32xf32> -> vector<2x32xf32>
    %280 = arith.addf %278, %279 : vector<2x32xf32>
    %281 = arith.negf %280 : vector<2x32xf32>
    %282 = math.exp %281 : vector<2x32xf32>
    %cst_79 = arith.constant 1.000000e+00 : f32
    %283 = vector.broadcast %cst_79 : f32 to vector<2x32xf32>
    %284 = arith.addf %283, %282 : vector<2x32xf32>
    %285 = arith.divf %283, %284 : vector<2x32xf32>
    %286 = vector.extract_strided_slice %22 {offsets = [6, 0, 0], sizes = [1, 2, 32], strides = [1, 1, 1]} : vector<8x2x32xf32> to vector<1x2x32xf32>
    %287 = vector.shape_cast %286 : vector<1x2x32xf32> to vector<2x32xf32>
    %cst_80 = arith.constant dense<0.000000e+00> : vector<2x32xf32>
    %288 = tpu.matmul %276, %48, %cst_80 {dimension_numbers = #tpu.dot_dimension_numbers<[1], [0], [0], [1], [0, 0, 1, 1], [], []>} : vector<2x32xf32>, vector<32x32xf32>, vector<2x32xf32> -> vector<2x32xf32>
    %289 = arith.addf %287, %288 : vector<2x32xf32>
    %290 = arith.negf %289 : vector<2x32xf32>
    %291 = math.exp %290 : vector<2x32xf32>
    %cst_81 = arith.constant 1.000000e+00 : f32
    %292 = vector.broadcast %cst_81 : f32 to vector<2x32xf32>
    %293 = arith.addf %292, %291 : vector<2x32xf32>
    %294 = arith.divf %292, %293 : vector<2x32xf32>
    %295 = vector.extract_strided_slice %33 {offsets = [6, 0, 0], sizes = [1, 2, 32], strides = [1, 1, 1]} : vector<8x2x32xf32> to vector<1x2x32xf32>
    %296 = vector.shape_cast %295 : vector<1x2x32xf32> to vector<2x32xf32>
    %cst_82 = arith.constant dense<0.000000e+00> : vector<2x32xf32>
    %297 = tpu.matmul %276, %50, %cst_82 {dimension_numbers = #tpu.dot_dimension_numbers<[1], [0], [0], [1], [0, 0, 1, 1], [], []>} : vector<2x32xf32>, vector<32x32xf32>, vector<2x32xf32> -> vector<2x32xf32>
    %298 = arith.addf %296, %297 : vector<2x32xf32>
    %299 = math.tanh %298 : vector<2x32xf32>
    %300 = vector.extract_strided_slice %44 {offsets = [6, 0, 0], sizes = [1, 2, 32], strides = [1, 1, 1]} : vector<8x2x32xf32> to vector<1x2x32xf32>
    %301 = vector.shape_cast %300 : vector<1x2x32xf32> to vector<2x32xf32>
    %cst_83 = arith.constant dense<0.000000e+00> : vector<2x32xf32>
    %302 = tpu.matmul %276, %52, %cst_83 {dimension_numbers = #tpu.dot_dimension_numbers<[1], [0], [0], [1], [0, 0, 1, 1], [], []>} : vector<2x32xf32>, vector<32x32xf32>, vector<2x32xf32> -> vector<2x32xf32>
    %303 = arith.addf %301, %302 : vector<2x32xf32>
    %304 = arith.negf %303 : vector<2x32xf32>
    %305 = math.exp %304 : vector<2x32xf32>
    %cst_84 = arith.constant 1.000000e+00 : f32
    %306 = vector.broadcast %cst_84 : f32 to vector<2x32xf32>
    %307 = arith.addf %306, %305 : vector<2x32xf32>
    %308 = arith.divf %306, %307 : vector<2x32xf32>
    %309 = arith.mulf %294, %274 : vector<2x32xf32>
    %310 = arith.mulf %285, %299 : vector<2x32xf32>
    %311 = arith.addf %309, %310 : vector<2x32xf32>
    %312 = math.tanh %311 : vector<2x32xf32>
    %313 = arith.mulf %308, %312 : vector<2x32xf32>
    %314 = vector.extract_strided_slice %11 {offsets = [7, 0, 0], sizes = [1, 2, 32], strides = [1, 1, 1]} : vector<8x2x32xf32> to vector<1x2x32xf32>
    %315 = vector.shape_cast %314 : vector<1x2x32xf32> to vector<2x32xf32>
    %cst_85 = arith.constant dense<0.000000e+00> : vector<2x32xf32>
    %316 = tpu.matmul %313, %46, %cst_85 {dimension_numbers = #tpu.dot_dimension_numbers<[1], [0], [0], [1], [0, 0, 1, 1], [], []>} : vector<2x32xf32>, vector<32x32xf32>, vector<2x32xf32> -> vector<2x32xf32>
    %317 = arith.addf %315, %316 : vector<2x32xf32>
    %318 = arith.negf %317 : vector<2x32xf32>
    %319 = math.exp %318 : vector<2x32xf32>
    %cst_86 = arith.constant 1.000000e+00 : f32
    %320 = vector.broadcast %cst_86 : f32 to vector<2x32xf32>
    %321 = arith.addf %320, %319 : vector<2x32xf32>
    %322 = arith.divf %320, %321 : vector<2x32xf32>
    %323 = vector.extract_strided_slice %22 {offsets = [7, 0, 0], sizes = [1, 2, 32], strides = [1, 1, 1]} : vector<8x2x32xf32> to vector<1x2x32xf32>
    %324 = vector.shape_cast %323 : vector<1x2x32xf32> to vector<2x32xf32>
    %cst_87 = arith.constant dense<0.000000e+00> : vector<2x32xf32>
    %325 = tpu.matmul %313, %48, %cst_87 {dimension_numbers = #tpu.dot_dimension_numbers<[1], [0], [0], [1], [0, 0, 1, 1], [], []>} : vector<2x32xf32>, vector<32x32xf32>, vector<2x32xf32> -> vector<2x32xf32>
    %326 = arith.addf %324, %325 : vector<2x32xf32>
    %327 = arith.negf %326 : vector<2x32xf32>
    %328 = math.exp %327 : vector<2x32xf32>
    %cst_88 = arith.constant 1.000000e+00 : f32
    %329 = vector.broadcast %cst_88 : f32 to vector<2x32xf32>
    %330 = arith.addf %329, %328 : vector<2x32xf32>
    %331 = arith.divf %329, %330 : vector<2x32xf32>
    %332 = vector.extract_strided_slice %33 {offsets = [7, 0, 0], sizes = [1, 2, 32], strides = [1, 1, 1]} : vector<8x2x32xf32> to vector<1x2x32xf32>
    %333 = vector.shape_cast %332 : vector<1x2x32xf32> to vector<2x32xf32>
    %cst_89 = arith.constant dense<0.000000e+00> : vector<2x32xf32>
    %334 = tpu.matmul %313, %50, %cst_89 {dimension_numbers = #tpu.dot_dimension_numbers<[1], [0], [0], [1], [0, 0, 1, 1], [], []>} : vector<2x32xf32>, vector<32x32xf32>, vector<2x32xf32> -> vector<2x32xf32>
    %335 = arith.addf %333, %334 : vector<2x32xf32>
    %336 = math.tanh %335 : vector<2x32xf32>
    %337 = vector.extract_strided_slice %44 {offsets = [7, 0, 0], sizes = [1, 2, 32], strides = [1, 1, 1]} : vector<8x2x32xf32> to vector<1x2x32xf32>
    %338 = vector.shape_cast %337 : vector<1x2x32xf32> to vector<2x32xf32>
    %cst_90 = arith.constant dense<0.000000e+00> : vector<2x32xf32>
    %339 = tpu.matmul %313, %52, %cst_90 {dimension_numbers = #tpu.dot_dimension_numbers<[1], [0], [0], [1], [0, 0, 1, 1], [], []>} : vector<2x32xf32>, vector<32x32xf32>, vector<2x32xf32> -> vector<2x32xf32>
    %340 = arith.addf %338, %339 : vector<2x32xf32>
    %341 = arith.negf %340 : vector<2x32xf32>
    %342 = math.exp %341 : vector<2x32xf32>
    %cst_91 = arith.constant 1.000000e+00 : f32
    %343 = vector.broadcast %cst_91 : f32 to vector<2x32xf32>
    %344 = arith.addf %343, %342 : vector<2x32xf32>
    %345 = arith.divf %343, %344 : vector<2x32xf32>
    %346 = arith.mulf %331, %311 : vector<2x32xf32>
    %347 = arith.mulf %322, %336 : vector<2x32xf32>
    %348 = arith.addf %346, %347 : vector<2x32xf32>
    %349 = math.tanh %348 : vector<2x32xf32>
    %350 = arith.mulf %345, %349 : vector<2x32xf32>
    %c0_92 = arith.constant 0 : index
    %c0_93 = arith.constant 0 : index
    %351 = vector.load %arg4[%c0_92, %c0_93] : memref<32x16xf32, #tpu.memory_space<vmem>>, vector<32x16xf32>
    %cst_94 = arith.constant dense<0.000000e+00> : vector<2x16xf32>
    %352 = tpu.matmul %350, %351, %cst_94 {dimension_numbers = #tpu.dot_dimension_numbers<[1], [0], [0], [1], [0, 0, 1, 1], [], []>} : vector<2x32xf32>, vector<32x16xf32>, vector<2x16xf32> -> vector<2x16xf32>
    %c0_95 = arith.constant 0 : index
    %c0_96 = arith.constant 0 : index
    %353 = vector.load %arg5[%c0_95, %c0_96] : memref<1x16xf32, #tpu.memory_space<vmem>>, vector<1x16xf32>
    %354 = vector.broadcast %353 : vector<1x16xf32> to vector<2x16xf32>
    %355 = arith.addf %352, %354 : vector<2x16xf32>
    %cst_97 = arith.constant dense<0xFF800000> : vector<16xf32>
    %356 = vector.multi_reduction <maximumf>, %355, %cst_97 [0] : vector<2x16xf32> to vector<16xf32>
    %357 = vector.shape_cast %356 : vector<16xf32> to vector<1x16xf32>
    %358 = vector.broadcast %357 : vector<1x16xf32> to vector<2x16xf32>
    %359 = arith.subf %355, %358 : vector<2x16xf32>
    %360 = math.exp %359 : vector<2x16xf32>
    %cst_98 = arith.constant dense<0.000000e+00> : vector<16xf32>
    %361 = vector.multi_reduction <add>, %360, %cst_98 [0] : vector<2x16xf32> to vector<16xf32>
    %362 = vector.shape_cast %361 : vector<16xf32> to vector<1x16xf32>
    %363 = math.log %362 : vector<1x16xf32>
    %364 = vector.broadcast %363 : vector<1x16xf32> to vector<2x16xf32>
    %365 = arith.subf %359, %364 : vector<2x16xf32>
    %c0_99 = arith.constant 0 : index
    %c0_100 = arith.constant 0 : index
    %366 = vector.load %arg6[%c0_99, %c0_100] : memref<2x16xf32, #tpu.memory_space<vmem>>, vector<2x16xf32>
    tpu.vector_store %arg6[%c0_99, %c0_100], %365 {strides = array<i32>} : memref<2x16xf32, #tpu.memory_space<vmem>>, vector<2x16xf32>,
    return
  }
}

</mosaic_0001>

<llo_original>
// kernel: tpu_custom_call.1
$region0: #{tpu_custom_call.1}
  #allocation0 [shape = 'u32[]', space=smem, size = 0x4, offset = 0x4, fixed_abs, tag = 'smem constant byte address 0x4 - core index']
  #allocation1 [shape = 'u32[144,128]{1,0:T(1,128)}', space=vmem, size = 0x12000, scoped, tag = 'internal scratch']
  %s0 = inlined_call_operand.vmem [shape: f32[8,2,1], index: 0, kind: input, shape index: {}]
  %s1 = inlined_call_operand.vmem [shape: f32[4,1,32], index: 1, kind: input, shape index: {}]
  %s2 = inlined_call_operand.vmem [shape: f32[4,1,32], index: 2, kind: input, shape index: {}]
  %s3 = inlined_call_operand.hbm [shape: f32[4,32,32], index: 3, kind: input, shape index: {}]
  %s4 = inlined_call_operand.vmem [shape: f32[32,16], index: 4, kind: input, shape index: {}]
  %s5 = inlined_call_operand.vmem [shape: f32[1,16], index: 5, kind: input, shape index: {}]
  %s6 = inlined_call_operand.hbm [shape: f32[2,16], index: 6, kind: output, shape index: {}]
  %s7 = sld [smem:[#allocation0]]
  $region38: #{tpu_custom_call.1} parent=0
    _
  %s9 = ssub.s32 1, %s7
  %s10 = scalar_select 0, %s9, %s7
  $region1: #{tpu_custom_call.1} parent=0
    #allocation2 [shape = 'u8[65536]{0}', space=vmem, size = 0x10000, scoped, tag = 'input window, operand 3, single buffered']
    #allocation3 [shape = 's32[1]{0}', space=sflag, size = 0x4, scoped, tag = 'scoped memory for tpu_custom_call.1']
    #allocation4 [shape = 's32[1]{0}', space=sflag, size = 0x4, scoped, tag = 'scoped memory for tpu_custom_call.1']
    #allocation5 [shape = 'u8[1024]{0}', space=vmem, size = 0x400, scoped, tag = 'output window, operand 0, single buffered']
    %11 = vsyncpa [#allocation3], 0
    %12 = vsyncpa [#allocation4], 0
    // Predicated region
    $region2: #{tpu_custom_call.1} parent=1 // pred_check
      _
    $region3: #{tpu_custom_call.1} parent=1 // pred_check_branch
      %14 = sbr.rel (0) target = $region5
    $region4: #{tpu_custom_call.1} parent=1 // pred_region
      _
    $region5: #{tpu_custom_call.1} parent=1 // pred_fallthru
      _
    // Predicated region
    $region6: #{tpu_custom_call.1} parent=1 // pred_check
      _
    $region7: #{tpu_custom_call.1} parent=1 // pred_check_branch
      %16 = sbr.rel (0) target = $region9
    $region8: #{tpu_custom_call.1} parent=1 // pred_region
      _
    $region9: #{tpu_custom_call.1} parent=1 // pred_fallthru
      _
    // Predicated region
    $region10: #{tpu_custom_call.1} parent=1 // pred_check
      _
    $region11: #{tpu_custom_call.1} parent=1 // pred_check_branch
      %18 = sbr.rel (0) target = $region13
    $region12: #{tpu_custom_call.1} parent=1 // pred_region
      _
    $region13: #{tpu_custom_call.1} parent=1 // pred_fallthru
      _
    // Predicated region
    $region14: #{tpu_custom_call.1} parent=1 // pred_check
      _
    $region15: #{tpu_custom_call.1} parent=1 // pred_check_branch
      %20 = sbr.rel (0) target = $region17
    $region16: #{tpu_custom_call.1} parent=1 // pred_region
      %s22 = ssub.s32 2048, 2048
      %23 = vsyncadd [#allocation3], %s22
      %s24 = sshll.u32 [#allocation2], 4
      %s25 = int_to_ptr.vmem [resolvable:$true] %s24
      %30 = dma.hbm_to_vmem [thread:$0]  %s3, 2048, %s25, [#allocation3], 128, 128, 8
    $region17: #{tpu_custom_call.1} parent=1 // pred_fallthru
      _
    // Predicated region
    $region18: #{tpu_custom_call.1} parent=1 // pred_check
      _
    $region19: #{tpu_custom_call.1} parent=1 // pred_check_branch
      %32 = sbr.rel (0) target = $region21
    $region20: #{tpu_custom_call.1} parent=1 // pred_region
      _
    $region21: #{tpu_custom_call.1} parent=1 // pred_fallthru
      _
    // Predicated region
    $region22: #{tpu_custom_call.1} parent=1 // pred_check
      _
    $region23: #{tpu_custom_call.1} parent=1 // pred_check_branch
      %34 = sbr.rel (0) target = $region25
    $region24: #{tpu_custom_call.1} parent=1 // pred_region
      _
    $region25: #{tpu_custom_call.1} parent=1 // pred_fallthru
      _
    // Predicated region
    $region26: #{tpu_custom_call.1} parent=1 // pred_check
      _
    $region27: #{tpu_custom_call.1} parent=1 // pred_check_branch
      %36 = sbr.rel (0) target = $region29
    $region28: #{tpu_custom_call.1} parent=1 // pred_region
      %37 = dma.done [#allocation3], 2048
    $region29: #{tpu_custom_call.1} parent=1 // pred_fallthru
      _
    %v38 = vld [vmem:[%s0] sm:$0x3]
    %v39 = vld [vmem:[%s0 + $0x2] sm:$0x3]
    %v40 = vld [vmem:[%s0 + $0x4] sm:$0x3]
    %v41 = vld [vmem:[%s0 + $0x6] sm:$0x3]
    %v42 = vld [vmem:[%s0 + $0x8] sm:$0x3]
    %v43 = vld [vmem:[%s0 + $0xa] sm:$0x3]
    %v44 = vld [vmem:[%s0 + $0xc] sm:$0x3]
    %v45 = vld [vmem:[%s0 + $0xe] sm:$0x3]
    %v46 = vld [vmem:[%s1] sm:$0x1]
    %48 = vset.pattern.permute.xlu0 0
    %49 = vperm.xlu0 %48, %v38
    %v50 = vpop.permute.xlu0 %49
    %53 = vset.pattern.permute.xlu0 0
    %54 = vperm.xlu0 %53, %v39
    %v55 = vpop.permute.xlu0 %54
    %58 = vset.pattern.permute.xlu0 0
    %59 = vperm.xlu0 %58, %v40
    %v60 = vpop.permute.xlu0 %59
    %63 = vset.pattern.permute.xlu0 0
    %64 = vperm.xlu0 %63, %v41
    %v65 = vpop.permute.xlu0 %64
    %68 = vset.pattern.permute.xlu0 0
    %69 = vperm.xlu0 %68, %v42
    %v70 = vpop.permute.xlu0 %69
    %73 = vset.pattern.permute.xlu0 0
    %74 = vperm.xlu0 %73, %v43
    %v75 = vpop.permute.xlu0 %74
    %78 = vset.pattern.permute.xlu0 0
    %79 = vperm.xlu0 %78, %v44
    %v80 = vpop.permute.xlu0 %79
    %83 = vset.pattern.permute.xlu0 0
    %84 = vperm.xlu0 %83, %v45
    %v85 = vpop.permute.xlu0 %84
    %v88 = vlaneseq
    %v89 = vshrl.u32 %v88, 7
    %v90 = vsub.s32 0, %v89
    %v91 = vrot.slane %v46, %v90
    %v93 = vmul.f32 %v50, %v91
    %v94 = vmul.f32 %v55, %v91
    %v95 = vmul.f32 %v60, %v91
    %v96 = vmul.f32 %v65, %v91
    %v97 = vmul.f32 %v70, %v91
    %v98 = vmul.f32 %v75, %v91
    %v99 = vmul.f32 %v80, %v91
    %v100 = vmul.f32 %v85, %v91
    %v101 = vld [vmem:[%s2] sm:$0x1]
    %v103 = vlaneseq
    %v104 = vshrl.u32 %v103, 7
    %v105 = vsub.s32 0, %v104
    %v106 = vrot.slane %v101, %v105
    %v108 = vadd.f32 %v93, %v106
    %v109 = vadd.f32 %v94, %v106
    %v110 = vadd.f32 %v95, %v106
    %v111 = vadd.f32 %v96, %v106
    %v112 = vadd.f32 %v97, %v106
    %v113 = vadd.f32 %v98, %v106
    %v114 = vadd.f32 %v99, %v106
    %v115 = vadd.f32 %v100, %v106
    %s116 = scalar_lea.vmem %s1, 1
    %v117 = vld [vmem:[%s116] sm:$0x1]
    %v119 = vlaneseq
    %v120 = vshrl.u32 %v119, 7
    %v121 = vsub.s32 0, %v120
    %v122 = vrot.slane %v117, %v121
    %v124 = vmul.f32 %v50, %v122
    %v125 = vmul.f32 %v55, %v122
    %v126 = vmul.f32 %v60, %v122
    %v127 = vmul.f32 %v65, %v122
    %v128 = vmul.f32 %v70, %v122
    %v129 = vmul.f32 %v75, %v122
    %v130 = vmul.f32 %v80, %v122
    %v131 = vmul.f32 %v85, %v122
    %s132 = scalar_lea.vmem %s2, 1
    %v133 = vld [vmem:[%s132] sm:$0x1]
    %v135 = vlaneseq
    %v136 = vshrl.u32 %v135, 7
    %v137 = vsub.s32 0, %v136
    %v138 = vrot.slane %v133, %v137
    %v140 = vadd.f32 %v124, %v138
    %v141 = vadd.f32 %v125, %v138
    %v142 = vadd.f32 %v126, %v138
    %v143 = vadd.f32 %v127, %v138
    %v144 = vadd.f32 %v128, %v138
    %v145 = vadd.f32 %v129, %v138
    %v146 = vadd.f32 %v130, %v138
    %v147 = vadd.f32 %v131, %v138
    %s148 = scalar_lea.vmem %s1, 2
    %v149 = vld [vmem:[%s148] sm:$0x1]
    %v151 = vlaneseq
    %v152 = vshrl.u32 %v151, 7
    %v153 = vsub.s32 0, %v152
    %v154 = vrot.slane %v149, %v153
    %v156 = vmul.f32 %v50, %v154
    %v157 = vmul.f32 %v55, %v154
    %v158 = vmul.f32 %v60, %v154
    %v159 = vmul.f32 %v65, %v154
    %v160 = vmul.f32 %v70, %v154
    %v161 = vmul.f32 %v75, %v154
    %v162 = vmul.f32 %v80, %v154
    %v163 = vmul.f32 %v85, %v154
    %s164 = scalar_lea.vmem %s2, 2
    %v165 = vld [vmem:[%s164] sm:$0x1]
    %v167 = vlaneseq
    %v168 = vshrl.u32 %v167, 7
    %v169 = vsub.s32 0, %v168
    %v170 = vrot.slane %v165, %v169
    %v172 = vadd.f32 %v156, %v170
    %v173 = vadd.f32 %v157, %v170
    %v174 = vadd.f32 %v158, %v170
    %v175 = vadd.f32 %v159, %v170
    %v176 = vadd.f32 %v160, %v170
    %v177 = vadd.f32 %v161, %v170
    %v178 = vadd.f32 %v162, %v170
    %v179 = vadd.f32 %v163, %v170
    %s180 = scalar_lea.vmem %s1, 3
    %v181 = vld [vmem:[%s180] sm:$0x1]
    %v183 = vlaneseq
    %v184 = vshrl.u32 %v183, 7
    %v185 = vsub.s32 0, %v184
    %v186 = vrot.slane %v181, %v185
    %v188 = vmul.f32 %v50, %v186
    %v189 = vmul.f32 %v55, %v186
    %v190 = vmul.f32 %v60, %v186
    %v191 = vmul.f32 %v65, %v186
    %v192 = vmul.f32 %v70, %v186
    %v193 = vmul.f32 %v75, %v186
    %v194 = vmul.f32 %v80, %v186
    %v195 = vmul.f32 %v85, %v186
    %s196 = scalar_lea.vmem %s2, 3
    %v197 = vld [vmem:[%s196] sm:$0x1]
    %v199 = vlaneseq
    %v200 = vshrl.u32 %v199, 7
    %v201 = vsub.s32 0, %v200
    %v202 = vrot.slane %v197, %v201
    %v204 = vadd.f32 %v188, %v202
    %v205 = vadd.f32 %v189, %v202
    %v206 = vadd.f32 %v190, %v202
    %v207 = vadd.f32 %v191, %v202
    %v208 = vadd.f32 %v192, %v202
    %v209 = vadd.f32 %v193, %v202
    %v210 = vadd.f32 %v194, %v202
    %v211 = vadd.f32 %v195, %v202
    %v212 = vld [vmem:[#allocation2] sm:$0xff]
    %v213 = vld [vmem:[#allocation2 + $0x8] sm:$0xff]
    %v214 = vld [vmem:[#allocation2 + $0x10] sm:$0xff]
    %v215 = vld [vmem:[#allocation2 + $0x18] sm:$0xff]
    %s216 = scalar_lea.vmem [#allocation2], 32
    %v217 = vld [vmem:[%s216] sm:$0xff]
    %v218 = vld [vmem:[%s216 + $0x8] sm:$0xff]
    %v219 = vld [vmem:[%s216 + $0x10] sm:$0xff]
    %v220 = vld [vmem:[%s216 + $0x18] sm:$0xff]
    %s221 = scalar_lea.vmem [#allocation2], 64
    %v222 = vld [vmem:[%s221] sm:$0xff]
    %v223 = vld [vmem:[%s221 + $0x8] sm:$0xff]
    %v224 = vld [vmem:[%s221 + $0x10] sm:$0xff]
    %v225 = vld [vmem:[%s221 + $0x18] sm:$0xff]
    %s226 = scalar_lea.vmem [#allocation2], 96
    %v227 = vld [vmem:[%s226] sm:$0xff]
    %v228 = vld [vmem:[%s226 + $0x8] sm:$0xff]
    %v229 = vld [vmem:[%s226 + $0x10] sm:$0xff]
    %v230 = vld [vmem:[%s226 + $0x18] sm:$0xff]
    %vm231 = vcmask 261120
    %v233 = vsel %vm231, 0.0, 0
    %235 = vmatprep.subr.mxu0 0.0
    %236 = vmatpush1.msra.mxu0 %v212
    %237 = vmatprep.subr.mxu0 0.0
    %238 = vmatpush1.msra.mxu0 %v213
    %239 = vmatprep.subr.mxu0 0.0
    %240 = vmatpush1.msra.mxu0 %v214
    %241 = vmatprep.subr.mxu0 0.0
    %242 = vmatpush1.msra.mxu0 %v215
    %243 = vmatprep.subr.mxu0 0.0
    %244 = vmatpush1.msra.mxu0 0.0
    %245 = vmatprep.subr.mxu0 0.0
    %246 = vmatpush1.msra.mxu0 0.0
    %247 = vmatprep.subr.mxu0 0.0
    %248 = vmatpush1.msra.mxu0 0.0
    %249 = vmatprep.subr.mxu0 0.0
    %250 = vmatpush1.msra.mxu0 0.0
    %251 = vmatprep.subr.mxu0 0.0
    %252 = vmatpush1.msra.mxu0 0.0
    %253 = vmatprep.subr.mxu0 0.0
    %254 = vmatpush1.msra.mxu0 0.0
    %255 = vmatprep.subr.mxu0 0.0
    %256 = vmatpush1.msra.mxu0 0.0
    %257 = vmatprep.subr.mxu0 0.0
    %258 = vmatpush1.msra.mxu0 0.0
    %259 = vmatprep.subr.mxu0 0.0
    %260 = vmatpush1.msra.mxu0 0.0
    %261 = vmatprep.subr.mxu0 0.0
    %262 = vmatpush1.msra.mxu0 0.0
    %263 = vmatprep.subr.mxu0 0.0
    %264 = vmatpush1.msra.mxu0 0.0
    %265 = vmatprep.subr.mxu0 0.0
    %266 = vmatpush1.msra.mxu0 0.0
    %267 = vmatprep.subr.mxu0 0.0
    %268 = vmatpush1.msra.mxu0 0.0
    %269 = vmatprep.subr.mxu0 0.0
    %270 = vmatpush1.msra.mxu0 0.0
    %271 = vmatprep.subr.mxu0 0.0
    %272 = vmatpush1.msra.mxu0 0.0
    %273 = vmatprep.subr.mxu0 0.0
    %274 = vmatpush1.msra.mxu0 0.0
    %275 = vmatprep.subr.mxu0 0.0
    %276 = vmatpush1.msra.mxu0 0.0
    %277 = vmatprep.subr.mxu0 0.0
    %278 = vmatpush1.msra.mxu0 0.0
    %279 = vmatprep.subr.mxu0 0.0
    %280 = vmatpush1.msra.mxu0 0.0
    %281 = vmatprep.subr.mxu0 0.0
    %282 = vmatpush1.msra.mxu0 0.0
    %283 = vmatprep.subr.mxu0 0.0
    %284 = vmatpush1.msra.mxu0 0.0
    %285 = vmatprep.subr.mxu0 0.0
    %286 = vmatpush1.msra.mxu0 0.0
    %287 = vmatprep.subr.mxu0 0.0
    %288 = vmatpush1.msra.mxu0 0.0
    %289 = vmatprep.subr.mxu0 0.0
    %290 = vmatpush1.msra.mxu0 0.0
    %291 = vmatprep.subr.mxu0 0.0
    %292 = vmatpush1.msra.mxu0 0.0
    %293 = vmatprep.subr.mxu0 0.0
    %294 = vmatpush1.msra.mxu0 0.0
    %295 = vmatprep.subr.mxu0 0.0
    %296 = vmatpush1.msra.mxu0 0.0
    %297 = vmatprep.subr.mxu0 0.0
    %298 = vmatpush1.msra.mxu0 0.0
    %299 = vmatprep.mubr.f32.mxu0 0.0
    %300 = vmatmul.mubr.f32.gmra.mrb[0].mxu0 %v233
    %v301 = vpop.f32.mrb[0].mxu0
    %v302 = vadd.f32 0.0, %v301
    %v303 = vpop.f32.mrb[0].mxu0
    %304 = vdwg.mxu0
    %v305 = vadd.f32 %v108, %v302
    %v306 = vxor.u32 %v305, 2147483648
    %v307 = vmul.f32 %v306, 1.442695
    %v308 = vpow.pop %v307
    %v309 = vadd.f32 %v308, 1.0
    %v310 = vrcp.pop %v309
    %v311 = vmul.f32 1.0, %v310
    %312 = vmatprep.subr.mxu0 0.0
    %313 = vmatpush1.msra.mxu0 %v217
    %314 = vmatprep.subr.mxu0 0.0
    %315 = vmatpush1.msra.mxu0 %v218
    %316 = vmatprep.subr.mxu0 0.0
    %317 = vmatpush1.msra.mxu0 %v219
    %318 = vmatprep.subr.mxu0 0.0
    %319 = vmatpush1.msra.mxu0 %v220
    %320 = vmatprep.subr.mxu0 0.0
    %321 = vmatpush1.msra.mxu0 0.0
    %322 = vmatprep.subr.mxu0 0.0
    %323 = vmatpush1.msra.mxu0 0.0
    %324 = vmatprep.subr.mxu0 0.0
    %325 = vmatpush1.msra.mxu0 0.0
    %326 = vmatprep.subr.mxu0 0.0
    %327 = vmatpush1.msra.mxu0 0.0
    %328 = vmatprep.subr.mxu0 0.0
    %329 = vmatpush1.msra.mxu0 0.0
    %330 = vmatprep.subr.mxu0 0.0
    %331 = vmatpush1.msra.mxu0 0.0
    %332 = vmatprep.subr.mxu0 0.0
    %333 = vmatpush1.msra.mxu0 0.0
    %334 = vmatprep.subr.mxu0 0.0
    %335 = vmatpush1.msra.mxu0 0.0
    %336 = vmatprep.subr.mxu0 0.0
    %337 = vmatpush1.msra.mxu0 0.0
    %338 = vmatprep.subr.mxu0 0.0
    %339 = vmatpush1.msra.mxu0 0.0
    %340 = vmatprep.subr.mxu0 0.0
    %341 = vmatpush1.msra.mxu0 0.0
    %342 = vmatprep.subr.mxu0 0.0
    %343 = vmatpush1.msra.mxu0 0.0
    %344 = vmatprep.subr.mxu0 0.0
    %345 = vmatpush1.msra.mxu0 0.0
    %346 = vmatprep.subr.mxu0 0.0
    %347 = vmatpush1.msra.mxu0 0.0
    %348 = vmatprep.subr.mxu0 0.0
    %349 = vmatpush1.msra.mxu0 0.0
    %350 = vmatprep.subr.mxu0 0.0
    %351 = vmatpush1.msra.mxu0 0.0
    %352 = vmatprep.subr.mxu0 0.0
    %353 = vmatpush1.msra.mxu0 0.0
    %354 = vmatprep.subr.mxu0 0.0
    %355 = vmatpush1.msra.mxu0 0.0
    %356 = vmatprep.subr.mxu0 0.0
    %357 = vmatpush1.msra.mxu0 0.0
    %358 = vmatprep.subr.mxu0 0.0
    %359 = vmatpush1.msra.mxu0 0.0
    %360 = vmatprep.subr.mxu0 0.0
    %361 = vmatpush1.msra.mxu0 0.0
    %362 = vmatprep.subr.mxu0 0.0
    %363 = vmatpush1.msra.mxu0 0.0
    %364 = vmatprep.subr.mxu0 0.0
    %365 = vmatpush1.msra.mxu0 0.0
    %366 = vmatprep.subr.mxu0 0.0
    %367 = vmatpush1.msra.mxu0 0.0
    %368 = vmatprep.subr.mxu0 0.0
    %369 = vmatpush1.msra.mxu0 0.0
    %370 = vmatprep.subr.mxu0 0.0
    %371 = vmatpush1.msra.mxu0 0.0
    %372 = vmatprep.subr.mxu0 0.0
    %373 = vmatpush1.msra.mxu0 0.0
    %374 = vmatprep.subr.mxu0 0.0
    %375 = vmatpush1.msra.mxu0 0.0
    %376 = vmatprep.mubr.f32.mxu0 0.0
    %377 = vmatmul.mubr.f32.gmra.mrb[0].mxu0 %v233
    %v378 = vpop.f32.mrb[0].mxu0
    %v379 = vadd.f32 0.0, %v378
    %v380 = vpop.f32.mrb[0].mxu0
    %381 = vdwg.mxu0
    %v382 = vadd.f32 %v140, %v379
    %v383 = vxor.u32 %v382, 2147483648
    %v384 = vmul.f32 %v383, 1.442695
    %v385 = vpow.pop %v384
    %v386 = vadd.f32 %v385, 1.0
    %v387 = vrcp.pop %v386
    %v388 = vmul.f32 1.0, %v387
    %389 = vmatprep.subr.mxu0 0.0
    %390 = vmatpush1.msra.mxu0 %v222
    %391 = vmatprep.subr.mxu0 0.0
    %392 = vmatpush1.msra.mxu0 %v223
    %393 = vmatprep.subr.mxu0 0.0
    %394 = vmatpush1.msra.mxu0 %v224
    %395 = vmatprep.subr.mxu0 0.0
    %396 = vmatpush1.msra.mxu0 %v225
    %397 = vmatprep.subr.mxu0 0.0
    %398 = vmatpush1.msra.mxu0 0.0
    %399 = vmatprep.subr.mxu0 0.0
    %400 = vmatpush1.msra.mxu0 0.0
    %401 = vmatprep.subr.mxu0 0.0
    %402 = vmatpush1.msra.mxu0 0.0
    %403 = vmatprep.subr.mxu0 0.0
    %404 = vmatpush1.msra.mxu0 0.0
    %405 = vmatprep.subr.mxu0 0.0
    %406 = vmatpush1.msra.mxu0 0.0
    %407 = vmatprep.subr.mxu0 0.0
    %408 = vmatpush1.msra.mxu0 0.0
    %409 = vmatprep.subr.mxu0 0.0
    %410 = vmatpush1.msra.mxu0 0.0
    %411 = vmatprep.subr.mxu0 0.0
    %412 = vmatpush1.msra.mxu0 0.0
    %413 = vmatprep.subr.mxu0 0.0
    %414 = vmatpush1.msra.mxu0 0.0
    %415 = vmatprep.subr.mxu0 0.0
    %416 = vmatpush1.msra.mxu0 0.0
    %417 = vmatprep.subr.mxu0 0.0
    %418 = vmatpush1.msra.mxu0 0.0
    %419 = vmatprep.subr.mxu0 0.0
    %420 = vmatpush1.msra.mxu0 0.0
    %421 = vmatprep.subr.mxu0 0.0
    %422 = vmatpush1.msra.mxu0 0.0
    %423 = vmatprep.subr.mxu0 0.0
    %424 = vmatpush1.msra.mxu0 0.0
    %425 = vmatprep.subr.mxu0 0.0
    %426 = vmatpush1.msra.mxu0 0.0
    %427 = vmatprep.subr.mxu0 0.0
    %428 = vmatpush1.msra.mxu0 0.0
    %429 = vmatprep.subr.mxu0 0.0
    %430 = vmatpush1.msra.mxu0 0.0
    %431 = vmatprep.subr.mxu0 0.0
    %432 = vmatpush1.msra.mxu0 0.0
    %433 = vmatprep.subr.mxu0 0.0
    %434 = vmatpush1.msra.mxu0 0.0
    %435 = vmatprep.subr.mxu0 0.0
    %436 = vmatpush1.msra.mxu0 0.0
    %437 = vmatprep.subr.mxu0 0.0
    %438 = vmatpush1.msra.mxu0 0.0
    %439 = vmatprep.subr.mxu0 0.0
    %440 = vmatpush1.msra.mxu0 0.0
    %441 = vmatprep.subr.mxu0 0.0
    %442 = vmatpush1.msra.mxu0 0.0
    %443 = vmatprep.subr.mxu0 0.0
    %444 = vmatpush1.msra.mxu0 0.0
    %445 = vmatprep.subr.mxu0 0.0
    %446 = vmatpush1.msra.mxu0 0.0
    %447 = vmatprep.subr.mxu0 0.0
    %448 = vmatpush1.msra.mxu0 0.0
    %449 = vmatprep.subr.mxu0 0.0
    %450 = vmatpush1.msra.mxu0 0.0
    %451 = vmatprep.subr.mxu0 0.0
    %452 = vmatpush1.msra.mxu0 0.0
    %453 = vmatprep.mubr.f32.mxu0 0.0
    %454 = vmatmul.mubr.f32.gmra.mrb[0].mxu0 %v233
    %v455 = vpop.f32.mrb[0].mxu0
    %v456 = vadd.f32 0.0, %v455
    %v457 = vpop.f32.mrb[0].mxu0
    %458 = vdwg.mxu0
    %v459 = vadd.f32 %v172, %v456
    %v460 = vtanh.pop %v459
    %461 = vmatprep.subr.mxu0 0.0
    %462 = vmatpush1.msra.mxu0 %v227
    %463 = vmatprep.subr.mxu0 0.0
    %464 = vmatpush1.msra.mxu0 %v228
    %465 = vmatprep.subr.mxu0 0.0
    %466 = vmatpush1.msra.mxu0 %v229
    %467 = vmatprep.subr.mxu0 0.0
    %468 = vmatpush1.msra.mxu0 %v230
    %469 = vmatprep.subr.mxu0 0.0
    %470 = vmatpush1.msra.mxu0 0.0
    %471 = vmatprep.subr.mxu0 0.0
    %472 = vmatpush1.msra.mxu0 0.0
    %473 = vmatprep.subr.mxu0 0.0
    %474 = vmatpush1.msra.mxu0 0.0
    %475 = vmatprep.subr.mxu0 0.0
    %476 = vmatpush1.msra.mxu0 0.0
    %477 = vmatprep.subr.mxu0 0.0
    %478 = vmatpush1.msra.mxu0 0.0
    %479 = vmatprep.subr.mxu0 0.0
    %480 = vmatpush1.msra.mxu0 0.0
    %481 = vmatprep.subr.mxu0 0.0
    %482 = vmatpush1.msra.mxu0 0.0
    %483 = vmatprep.subr.mxu0 0.0
    %484 = vmatpush1.msra.mxu0 0.0
    %485 = vmatprep.subr.mxu0 0.0
    %486 = vmatpush1.msra.mxu0 0.0
    %487 = vmatprep.subr.mxu0 0.0
    %488 = vmatpush1.msra.mxu0 0.0
    %489 = vmatprep.subr.mxu0 0.0
    %490 = vmatpush1.msra.mxu0 0.0
    %491 = vmatprep.subr.mxu0 0.0
    %492 = vmatpush1.msra.mxu0 0.0
    %493 = vmatprep.subr.mxu0 0.0
    %494 = vmatpush1.msra.mxu0 0.0
    %495 = vmatprep.subr.mxu0 0.0
    %496 = vmatpush1.msra.mxu0 0.0
    %497 = vmatprep.subr.mxu0 0.0
    %498 = vmatpush1.msra.mxu0 0.0
    %499 = vmatprep.subr.mxu0 0.0
    %500 = vmatpush1.msra.mxu0 0.0
    %501 = vmatprep.subr.mxu0 0.0
    %502 = vmatpush1.msra.mxu0 0.0
    %503 = vmatprep.subr.mxu0 0.0
    %504 = vmatpush1.msra.mxu0 0.0
    %505 = vmatprep.subr.mxu0 0.0
    %506 = vmatpush1.msra.mxu0 0.0
    %507 = vmatprep.subr.mxu0 0.0
    %508 = vmatpush1.msra.mxu0 0.0
    %509 = vmatprep.subr.mxu0 0.0
    %510 = vmatpush1.msra.mxu0 0.0
    %511 = vmatprep.subr.mxu0 0.0
    %512 = vmatpush1.msra.mxu0 0.0
    %513 = vmatprep.subr.mxu0 0.0
    %514 = vmatpush1.msra.mxu0 0.0
    %515 = vmatprep.subr.mxu0 0.0
    %516 = vmatpush1.msra.mxu0 0.0
    %517 = vmatprep.subr.mxu0 0.0
    %518 = vmatpush1.msra.mxu0 0.0
    %519 = vmatprep.subr.mxu0 0.0
    %520 = vmatpush1.msra.mxu0 0.0
    %521 = vmatprep.subr.mxu0 0.0
    %522 = vmatpush1.msra.mxu0 0.0
    %523 = vmatprep.subr.mxu0 0.0
    %524 = vmatpush1.msra.mxu0 0.0
    %525 = vmatprep.mubr.f32.mxu0 0.0
    %526 = vmatmul.mubr.f32.gmra.mrb[0].mxu0 %v233
    %v527 = vpop.f32.mrb[0].mxu0
    %v528 = vadd.f32 0.0, %v527
    %v529 = vpop.f32.mrb[0].mxu0
    %530 = vdwg.mxu0
    %v531 = vadd.f32 %v204, %v528
    %v532 = vxor.u32 %v531, 2147483648
    %v533 = vmul.f32 %v532, 1.442695
    %v534 = vpow.pop %v533
    %v535 = vadd.f32 %v534, 1.0
    %v536 = vrcp.pop %v535
    %v537 = vmul.f32 1.0, %v536
    %v538 = vmul.f32 %v388, 0.0
    %v539 = vmul.f32 %v311, %v460
    %v540 = vadd.f32 %v538, %v539
    %v541 = vtanh.pop %v540
    %v542 = vmul.f32 %v537, %v541
    %v544 = vsel %vm231, %v542, 0
    %546 = vmatprep.subr.mxu0 0.0
    %547 = vmatpush1.msra.mxu0 %v212
    %548 = vmatprep.subr.mxu0 0.0
    %549 = vmatpush1.msra.mxu0 %v213
    %550 = vmatprep.subr.mxu0 0.0
    %551 = vmatpush1.msra.mxu0 %v214
    %552 = vmatprep.subr.mxu0 0.0
    %553 = vmatpush1.msra.mxu0 %v215
    %554 = vmatprep.subr.mxu0 0.0
    %555 = vmatpush1.msra.mxu0 0.0
    %556 = vmatprep.subr.mxu0 0.0
    %557 = vmatpush1.msra.mxu0 0.0
    %558 = vmatprep.subr.mxu0 0.0
    %559 = vmatpush1.msra.mxu0 0.0
    %560 = vmatprep.subr.mxu0 0.0
    %561 = vmatpush1.msra.mxu0 0.0
    %562 = vmatprep.subr.mxu0 0.0
    %563 = vmatpush1.msra.mxu0 0.0
    %564 = vmatprep.subr.mxu0 0.0
    %565 = vmatpush1.msra.mxu0 0.0
    %566 = vmatprep.subr.mxu0 0.0
    %567 = vmatpush1.msra.mxu0 0.0
    %568 = vmatprep.subr.mxu0 0.0
    %569 = vmatpush1.msra.mxu0 0.0
    %570 = vmatprep.subr.mxu0 0.0
    %571 = vmatpush1.msra.mxu0 0.0
    %572 = vmatprep.subr.mxu0 0.0
    %573 = vmatpush1.msra.mxu0 0.0
    %574 = vmatprep.subr.mxu0 0.0
    %575 = vmatpush1.msra.mxu0 0.0
    %576 = vmatprep.subr.mxu0 0.0
    %577 = vmatpush1.msra.mxu0 0.0
    %578 = vmatprep.subr.mxu0 0.0
    %579 = vmatpush1.msra.mxu0 0.0
    %580 = vmatprep.subr.mxu0 0.0
    %581 = vmatpush1.msra.mxu0 0.0
    %582 = vmatprep.subr.mxu0 0.0
    %583 = vmatpush1.msra.mxu0 0.0
    %584 = vmatprep.subr.mxu0 0.0
    %585 = vmatpush1.msra.mxu0 0.0
    %586 = vmatprep.subr.mxu0 0.0
    %587 = vmatpush1.msra.mxu0 0.0
    %588 = vmatprep.subr.mxu0 0.0
    %589 = vmatpush1.msra.mxu0 0.0
    %590 = vmatprep.subr.mxu0 0.0
    %591 = vmatpush1.msra.mxu0 0.0
    %592 = vmatprep.subr.mxu0 0.0
    %593 = vmatpush1.msra.mxu0 0.0
    %594 = vmatprep.subr.mxu0 0.0
    %595 = vmatpush1.msra.mxu0 0.0
    %596 = vmatprep.subr.mxu0 0.0
    %597 = vmatpush1.msra.mxu0 0.0
    %598 = vmatprep.subr.mxu0 0.0
    %599 = vmatpush1.msra.mxu0 0.0
    %600 = vmatprep.subr.mxu0 0.0
    %601 = vmatpush1.msra.mxu0 0.0
    %602 = vmatprep.subr.mxu0 0.0
    %603 = vmatpush1.msra.mxu0 0.0
    %604 = vmatprep.subr.mxu0 0.0
    %605 = vmatpush1.msra.mxu0 0.0
    %606 = vmatprep.subr.mxu0 0.0
    %607 = vmatpush1.msra.mxu0 0.0
    %608 = vmatprep.subr.mxu0 0.0
    %609 = vmatpush1.msra.mxu0 0.0
    %610 = vmatprep.mubr.f32.mxu0 0.0
    %611 = vmatmul.mubr.f32.gmra.mrb[0].mxu0 %v544
    %v612 = vpop.f32.mrb[0].mxu0
    %v613 = vadd.f32 0.0, %v612
    %v614 = vpop.f32.mrb[0].mxu0
    %615 = vdwg.mxu0
    %v616 = vadd.f32 %v109, %v613
    %v617 = vxor.u32 %v616, 2147483648
    %v618 = vmul.f32 %v617, 1.442695
    %v619 = vpow.pop %v618
    %v620 = vadd.f32 %v619, 1.0
    %v621 = vrcp.pop %v620
    %v622 = vmul.f32 1.0, %v621
    %623 = vmatprep.subr.mxu0 0.0
    %624 = vmatpush1.msra.mxu0 %v217
    %625 = vmatprep.subr.mxu0 0.0
    %626 = vmatpush1.msra.mxu0 %v218
    %627 = vmatprep.subr.mxu0 0.0
    %628 = vmatpush1.msra.mxu0 %v219
    %629 = vmatprep.subr.mxu0 0.0
    %630 = vmatpush1.msra.mxu0 %v220
    %631 = vmatprep.subr.mxu0 0.0
    %632 = vmatpush1.msra.mxu0 0.0
    %633 = vmatprep.subr.mxu0 0.0
    %634 = vmatpush1.msra.mxu0 0.0
    %635 = vmatprep.subr.mxu0 0.0
    %636 = vmatpush1.msra.mxu0 0.0
    %637 = vmatprep.subr.mxu0 0.0
    %638 = vmatpush1.msra.mxu0 0.0
    %639 = vmatprep.subr.mxu0 0.0
    %640 = vmatpush1.msra.mxu0 0.0
    %641 = vmatprep.subr.mxu0 0.0
    %642 = vmatpush1.msra.mxu0 0.0
    %643 = vmatprep.subr.mxu0 0.0
    %644 = vmatpush1.msra.mxu0 0.0
    %645 = vmatprep.subr.mxu0 0.0
    %646 = vmatpush1.msra.mxu0 0.0
    %647 = vmatprep.subr.mxu0 0.0
    %648 = vmatpush1.msra.mxu0 0.0
    %649 = vmatprep.subr.mxu0 0.0
    %650 = vmatpush1.msra.mxu0 0.0
    %651 = vmatprep.subr.mxu0 0.0
    %652 = vmatpush1.msra.mxu0 0.0
    %653 = vmatprep.subr.mxu0 0.0
    %654 = vmatpush1.msra.mxu0 0.0
    %655 = vmatprep.subr.mxu0 0.0
    %656 = vmatpush1.msra.mxu0 0.0
    %657 = vmatprep.subr.mxu0 0.0
    %658 = vmatpush1.msra.mxu0 0.0
    %659 = vmatprep.subr.mxu0 0.0
    %660 = vmatpush1.msra.mxu0 0.0
    %661 = vmatprep.subr.mxu0 0.0
    %662 = vmatpush1.msra.mxu0 0.0
    %663 = vmatprep.subr.mxu0 0.0
    %664 = vmatpush1.msra.mxu0 0.0
    %665 = vmatprep.subr.mxu0 0.0
    %666 = vmatpush1.msra.mxu0 0.0
    %667 = vmatprep.subr.mxu0 0.0
    %668 = vmatpush1.msra.mxu0 0.0
    %669 = vmatprep.subr.mxu0 0.0
    %670 = vmatpush1.msra.mxu0 0.0
    %671 = vmatprep.subr.mxu0 0.0
    %672 = vmatpush1.msra.mxu0 0.0
    %673 = vmatprep.subr.mxu0 0.0
    %674 = vmatpush1.msra.mxu0 0.0
    %675 = vmatprep.subr.mxu0 0.0
    %676 = vmatpush1.msra.mxu0 0.0
    %677 = vmatprep.subr.mxu0 0.0
    %678 = vmatpush1.msra.mxu0 0.0
    %679 = vmatprep.subr.mxu0 0.0
    %680 = vmatpush1.msra.mxu0 0.0
    %681 = vmatprep.subr.mxu0 0.0
    %682 = vmatpush1.msra.mxu0 0.0
    %683 = vmatprep.subr.mxu0 0.0
    %684 = vmatpush1.msra.mxu0 0.0
    %685 = vmatprep.subr.mxu0 0.0
    %686 = vmatpush1.msra.mxu0 0.0
    %687 = vmatprep.mubr.f32.mxu0 0.0
    %688 = vmatmul.mubr.f32.gmra.mrb[0].mxu0 %v544
    %v689 = vpop.f32.mrb[0].mxu0
    %v690 = vadd.f32 0.0, %v689
    %v691 = vpop.f32.mrb[0].mxu0
    %692 = vdwg.mxu0
    %v693 = vadd.f32 %v141, %v690
    %v694 = vxor.u32 %v693, 2147483648
    %v695 = vmul.f32 %v694, 1.442695
    %v696 = vpow.pop %v695
    %v697 = vadd.f32 %v696, 1.0
    %v698 = vrcp.pop %v697
    %v699 = vmul.f32 1.0, %v698
    %700 = vmatprep.subr.mxu0 0.0
    %701 = vmatpush1.msra.mxu0 %v222
    %702 = vmatprep.subr.mxu0 0.0
    %703 = vmatpush1.msra.mxu0 %v223
    %704 = vmatprep.subr.mxu0 0.0
    %705 = vmatpush1.msra.mxu0 %v224
    %706 = vmatprep.subr.mxu0 0.0
    %707 = vmatpush1.msra.mxu0 %v225
    %708 = vmatprep.subr.mxu0 0.0
    %709 = vmatpush1.msra.mxu0 0.0
    %710 = vmatprep.subr.mxu0 0.0
    %711 = vmatpush1.msra.mxu0 0.0
    %712 = vmatprep.subr.mxu0 0.0
    %713 = vmatpush1.msra.mxu0 0.0
    %714 = vmatprep.subr.mxu0 0.0
    %715 = vmatpush1.msra.mxu0 0.0
    %716 = vmatprep.subr.mxu0 0.0
    %717 = vmatpush1.msra.mxu0 0.0
    %718 = vmatprep.subr.mxu0 0.0
    %719 = vmatpush1.msra.mxu0 0.0
    %720 = vmatprep.subr.mxu0 0.0
    %721 = vmatpush1.msra.mxu0 0.0
    %722 = vmatprep.subr.mxu0 0.0
    %723 = vmatpush1.msra.mxu0 0.0
    %724 = vmatprep.subr.mxu0 0.0
    %725 = vmatpush1.msra.mxu0 0.0
    %726 = vmatprep.subr.mxu0 0.0
    %727 = vmatpush1.msra.mxu0 0.0
    %728 = vmatprep.subr.mxu0 0.0
    %729 = vmatpush1.msra.mxu0 0.0
    %730 = vmatprep.subr.mxu0 0.0
    %731 = vmatpush1.msra.mxu0 0.0
    %732 = vmatprep.subr.mxu0 0.0
    %733 = vmatpush1.msra.mxu0 0.0
    %734 = vmatprep.subr.mxu0 0.0
    %735 = vmatpush1.msra.mxu0 0.0
    %736 = vmatprep.subr.mxu0 0.0
    %737 = vmatpush1.msra.mxu0 0.0
    %738 = vmatprep.subr.mxu0 0.0
    %739 = vmatpush1.msra.mxu0 0.0
    %740 = vmatprep.subr.mxu0 0.0
    %741 = vmatpush1.msra.mxu0 0.0
    %742 = vmatprep.subr.mxu0 0.0
    %743 = vmatpush1.msra.mxu0 0.0
    %744 = vmatprep.subr.mxu0 0.0
    %745 = vmatpush1.msra.mxu0 0.0
    %746 = vmatprep.subr.mxu0 0.0
    %747 = vmatpush1.msra.mxu0 0.0
    %748 = vmatprep.subr.mxu0 0.0
    %749 = vmatpush1.msra.mxu0 0.0
    %750 = vmatprep.subr.mxu0 0.0
    %751 = vmatpush1.msra.mxu0 0.0
    %752 = vmatprep.subr.mxu0 0.0
    %753 = vmatpush1.msra.mxu0 0.0
    %754 = vmatprep.subr.mxu0 0.0
    %755 = vmatpush1.msra.mxu0 0.0
    %756 = vmatprep.subr.mxu0 0.0
    %757 = vmatpush1.msra.mxu0 0.0
    %758 = vmatprep.subr.mxu0 0.0
    %759 = vmatpush1.msra.mxu0 0.0
    %760 = vmatprep.subr.mxu0 0.0
    %761 = vmatpush1.msra.mxu0 0.0
    %762 = vmatprep.subr.mxu0 0.0
    %763 = vmatpush1.msra.mxu0 0.0
    %764 = vmatprep.mubr.f32.mxu0 0.0
    %765 = vmatmul.mubr.f32.gmra.mrb[0].mxu0 %v544
    %v766 = vpop.f32.mrb[0].mxu0
    %v767 = vadd.f32 0.0, %v766
    %v768 = vpop.f32.mrb[0].mxu0
    %769 = vdwg.mxu0
    %v770 = vadd.f32 %v173, %v767
    %v771 = vtanh.pop %v770
    %772 = vmatprep.subr.mxu0 0.0
    %773 = vmatpush1.msra.mxu0 %v227
    %774 = vmatprep.subr.mxu0 0.0
    %775 = vmatpush1.msra.mxu0 %v228
    %776 = vmatprep.subr.mxu0 0.0
    %777 = vmatpush1.msra.mxu0 %v229
    %778 = vmatprep.subr.mxu0 0.0
    %779 = vmatpush1.msra.mxu0 %v230
    %780 = vmatprep.subr.mxu0 0.0
    %781 = vmatpush1.msra.mxu0 0.0
    %782 = vmatprep.subr.mxu0 0.0
    %783 = vmatpush1.msra.mxu0 0.0
    %784 = vmatprep.subr.mxu0 0.0
    %785 = vmatpush1.msra.mxu0 0.0
    %786 = vmatprep.subr.mxu0 0.0
    %787 = vmatpush1.msra.mxu0 0.0
    %788 = vmatprep.subr.mxu0 0.0
    %789 = vmatpush1.msra.mxu0 0.0
    %790 = vmatprep.subr.mxu0 0.0
    %791 = vmatpush1.msra.mxu0 0.0
    %792 = vmatprep.subr.mxu0 0.0
    %793 = vmatpush1.msra.mxu0 0.0
    %794 = vmatprep.subr.mxu0 0.0
    %795 = vmatpush1.msra.mxu0 0.0
    %796 = vmatprep.subr.mxu0 0.0
    %797 = vmatpush1.msra.mxu0 0.0
    %798 = vmatprep.subr.mxu0 0.0
    %799 = vmatpush1.msra.mxu0 0.0
    %800 = vmatprep.subr.mxu0 0.0
    %801 = vmatpush1.msra.mxu0 0.0
    %802 = vmatprep.subr.mxu0 0.0
    %803 = vmatpush1.msra.mxu0 0.0
    %804 = vmatprep.subr.mxu0 0.0
    %805 = vmatpush1.msra.mxu0 0.0
    %806 = vmatprep.subr.mxu0 0.0
    %807 = vmatpush1.msra.mxu0 0.0
    %808 = vmatprep.subr.mxu0 0.0
    %809 = vmatpush1.msra.mxu0 0.0
    %810 = vmatprep.subr.mxu0 0.0
    %811 = vmatpush1.msra.mxu0 0.0
    %812 = vmatprep.subr.mxu0 0.0
    %813 = vmatpush1.msra.mxu0 0.0
    %814 = vmatprep.subr.mxu0 0.0
    %815 = vmatpush1.msra.mxu0 0.0
    %816 = vmatprep.subr.mxu0 0.0
    %817 = vmatpush1.msra.mxu0 0.0
    %818 = vmatprep.subr.mxu0 0.0
    %819 = vmatpush1.msra.mxu0 0.0
    %820 = vmatprep.subr.mxu0 0.0
    %821 = vmatpush1.msra.mxu0 0.0
    %822 = vmatprep.subr.mxu0 0.0
    %823 = vmatpush1.msra.mxu0 0.0
    %824 = vmatprep.subr.mxu0 0.0
    %825 = vmatpush1.msra.mxu0 0.0
    %826 = vmatprep.subr.mxu0 0.0
    %827 = vmatpush1.msra.mxu0 0.0
    %828 = vmatprep.subr.mxu0 0.0
    %829 = vmatpush1.msra.mxu0 0.0
    %830 = vmatprep.subr.mxu0 0.0
    %831 = vmatpush1.msra.mxu0 0.0
    %832 = vmatprep.subr.mxu0 0.0
    %833 = vmatpush1.msra.mxu0 0.0
    %834 = vmatprep.subr.mxu0 0.0
    %835 = vmatpush1.msra.mxu0 0.0
    %836 = vmatprep.mubr.f32.mxu0 0.0
    %837 = vmatmul.mubr.f32.gmra.mrb[0].mxu0 %v544
    %v838 = vpop.f32.mrb[0].mxu0
    %v839 = vadd.f32 0.0, %v838
    %v840 = vpop.f32.mrb[0].mxu0
    %841 = vdwg.mxu0
    %v842 = vadd.f32 %v205, %v839
    %v843 = vxor.u32 %v842, 2147483648
    %v844 = vmul.f32 %v843, 1.442695
    %v845 = vpow.pop %v844
    %v846 = vadd.f32 %v845, 1.0
    %v847 = vrcp.pop %v846
    %v848 = vmul.f32 1.0, %v847
    %v849 = vmul.f32 %v699, %v540
    %v850 = vmul.f32 %v622, %v771
    %v851 = vadd.f32 %v849, %v850
    %v852 = vtanh.pop %v851
    %v853 = vmul.f32 %v848, %v852
    %v855 = vsel %vm231, %v853, 0
    %857 = vmatprep.subr.mxu0 0.0
    %858 = vmatpush1.msra.mxu0 %v212
    %859 = vmatprep.subr.mxu0 0.0
    %860 = vmatpush1.msra.mxu0 %v213
    %861 = vmatprep.subr.mxu0 0.0
    %862 = vmatpush1.msra.mxu0 %v214
    %863 = vmatprep.subr.mxu0 0.0
    %864 = vmatpush1.msra.mxu0 %v215
    %865 = vmatprep.subr.mxu0 0.0
    %866 = vmatpush1.msra.mxu0 0.0
    %867 = vmatprep.subr.mxu0 0.0
    %868 = vmatpush1.msra.mxu0 0.0
    %869 = vmatprep.subr.mxu0 0.0
    %870 = vmatpush1.msra.mxu0 0.0
    %871 = vmatprep.subr.mxu0 0.0
    %872 = vmatpush1.msra.mxu0 0.0
    %873 = vmatprep.subr.mxu0 0.0
    %874 = vmatpush1.msra.mxu0 0.0
    %875 = vmatprep.subr.mxu0 0.0
    %876 = vmatpush1.msra.mxu0 0.0
    %877 = vmatprep.subr.mxu0 0.0
    %878 = vmatpush1.msra.mxu0 0.0
    %879 = vmatprep.subr.mxu0 0.0
    %880 = vmatpush1.msra.mxu0 0.0
    %881 = vmatprep.subr.mxu0 0.0
    %882 = vmatpush1.msra.mxu0 0.0
    %883 = vmatprep.subr.mxu0 0.0
    %884 = vmatpush1.msra.mxu0 0.0
    %885 = vmatprep.subr.mxu0 0.0
    %886 = vmatpush1.msra.mxu0 0.0
    %887 = vmatprep.subr.mxu0 0.0
    %888 = vmatpush1.msra.mxu0 0.0
    %889 = vmatprep.subr.mxu0 0.0
    %890 = vmatpush1.msra.mxu0 0.0
    %891 = vmatprep.subr.mxu0 0.0
    %892 = vmatpush1.msra.mxu0 0.0
    %893 = vmatprep.subr.mxu0 0.0
    %894 = vmatpush1.msra.mxu0 0.0
    %895 = vmatprep.subr.mxu0 0.0
    %896 = vmatpush1.msra.mxu0 0.0
    %897 = vmatprep.subr.mxu0 0.0
    %898 = vmatpush1.msra.mxu0 0.0
    %899 = vmatprep.subr.mxu0 0.0
    %900 = vmatpush1.msra.mxu0 0.0
    %901 = vmatprep.subr.mxu0 0.0
    %902 = vmatpush1.msra.mxu0 0.0
    %903 = vmatprep.subr.mxu0 0.0
    %904 = vmatpush1.msra.mxu0 0.0
    %905 = vmatprep.subr.mxu0 0.0
    %906 = vmatpush1.msra.mxu0 0.0
    %907 = vmatprep.subr.mxu0 0.0
    %908 = vmatpush1.msra.mxu0 0.0
    %909 = vmatprep.subr.mxu0 0.0
    %910 = vmatpush1.msra.mxu0 0.0
    %911 = vmatprep.subr.mxu0 0.0
    %912 = vmatpush1.msra.mxu0 0.0
    %913 = vmatprep.subr.mxu0 0.0
    %914 = vmatpush1.msra.mxu0 0.0
    %915 = vmatprep.subr.mxu0 0.0
    %916 = vmatpush1.msra.mxu0 0.0
    %917 = vmatprep.subr.mxu0 0.0
    %918 = vmatpush1.msra.mxu0 0.0
    %919 = vmatprep.subr.mxu0 0.0
    %920 = vmatpush1.msra.mxu0 0.0
    %921 = vmatprep.mubr.f32.mxu0 0.0
    %922 = vmatmul.mubr.f32.gmra.mrb[0].mxu0 %v855
    %v923 = vpop.f32.mrb[0].mxu0
    %v924 = vadd.f32 0.0, %v923
    %v925 = vpop.f32.mrb[0].mxu0
    %926 = vdwg.mxu0
    %v927 = vadd.f32 %v110, %v924
    %v928 = vxor.u32 %v927, 2147483648
    %v929 = vmul.f32 %v928, 1.442695
    %v930 = vpow.pop %v929
    %v931 = vadd.f32 %v930, 1.0
    %v932 = vrcp.pop %v931
    %v933 = vmul.f32 1.0, %v932
    %934 = vmatprep.subr.mxu0 0.0
    %935 = vmatpush1.msra.mxu0 %v217
    %936 = vmatprep.subr.mxu0 0.0
    %937 = vmatpush1.msra.mxu0 %v218
    %938 = vmatprep.subr.mxu0 0.0
    %939 = vmatpush1.msra.mxu0 %v219
    %940 = vmatprep.subr.mxu0 0.0
    %941 = vmatpush1.msra.mxu0 %v220
    %942 = vmatprep.subr.mxu0 0.0
    %943 = vmatpush1.msra.mxu0 0.0
    %944 = vmatprep.subr.mxu0 0.0
    %945 = vmatpush1.msra.mxu0 0.0
    %946 = vmatprep.subr.mxu0 0.0
    %947 = vmatpush1.msra.mxu0 0.0
    %948 = vmatprep.subr.mxu0 0.0
    %949 = vmatpush1.msra.mxu0 0.0
    %950 = vmatprep.subr.mxu0 0.0
    %951 = vmatpush1.msra.mxu0 0.0
    %952 = vmatprep.subr.mxu0 0.0
    %953 = vmatpush1.msra.mxu0 0.0
    %954 = vmatprep.subr.mxu0 0.0
    %955 = vmatpush1.msra.mxu0 0.0
    %956 = vmatprep.subr.mxu0 0.0
    %957 = vmatpush1.msra.mxu0 0.0
    %958 = vmatprep.subr.mxu0 0.0
    %959 = vmatpush1.msra.mxu0 0.0
    %960 = vmatprep.subr.mxu0 0.0
    %961 = vmatpush1.msra.mxu0 0.0
    %962 = vmatprep.subr.mxu0 0.0
    %963 = vmatpush1.msra.mxu0 0.0
    %964 = vmatprep.subr.mxu0 0.0
    %965 = vmatpush1.msra.mxu0 0.0
    %966 = vmatprep.subr.mxu0 0.0
    %967 = vmatpush1.msra.mxu0 0.0
    %968 = vmatprep.subr.mxu0 0.0
    %969 = vmatpush1.msra.mxu0 0.0
    %970 = vmatprep.subr.mxu0 0.0
    %971 = vmatpush1.msra.mxu0 0.0
    %972 = vmatprep.subr.mxu0 0.0
    %973 = vmatpush1.msra.mxu0 0.0
    %974 = vmatprep.subr.mxu0 0.0
    %975 = vmatpush1.msra.mxu0 0.0
    %976 = vmatprep.subr.mxu0 0.0
    %977 = vmatpush1.msra.mxu0 0.0
    %978 = vmatprep.subr.mxu0 0.0
    %979 = vmatpush1.msra.mxu0 0.0
    %980 = vmatprep.subr.mxu0 0.0
    %981 = vmatpush1.msra.mxu0 0.0
    %982 = vmatprep.subr.mxu0 0.0
    %983 = vmatpush1.msra.mxu0 0.0
    %984 = vmatprep.subr.mxu0 0.0
    %985 = vmatpush1.msra.mxu0 0.0
    %986 = vmatprep.subr.mxu0 0.0
    %987 = vmatpush1.msra.mxu0 0.0
    %988 = vmatprep.subr.mxu0 0.0
    %989 = vmatpush1.msra.mxu0 0.0
    %990 = vmatprep.subr.mxu0 0.0
    %991 = vmatpush1.msra.mxu0 0.0
    %992 = vmatprep.subr.mxu0 0.0
    %993 = vmatpush1.msra.mxu0 0.0
    %994 = vmatprep.subr.mxu0 0.0
    %995 = vmatpush1.msra.mxu0 0.0
    %996 = vmatprep.subr.mxu0 0.0
    %997 = vmatpush1.msra.mxu0 0.0
    %998 = vmatprep.mubr.f32.mxu0 0.0
    %999 = vmatmul.mubr.f32.gmra.mrb[0].mxu0 %v855
    %v1000 = vpop.f32.mrb[0].mxu0
    %v1001 = vadd.f32 0.0, %v1000
    %v1002 = vpop.f32.mrb[0].mxu0
    %1003 = vdwg.mxu0
    %v1004 = vadd.f32 %v142, %v1001
    %v1005 = vxor.u32 %v1004, 2147483648
    %v1006 = vmul.f32 %v1005, 1.442695
    %v1007 = vpow.pop %v1006
    %v1008 = vadd.f32 %v1007, 1.0
    %v1009 = vrcp.pop %v1008
    %v1010 = vmul.f32 1.0, %v1009
    %1011 = vmatprep.subr.mxu0 0.0
    %1012 = vmatpush1.msra.mxu0 %v222
    %1013 = vmatprep.subr.mxu0 0.0
    %1014 = vmatpush1.msra.mxu0 %v223
    %1015 = vmatprep.subr.mxu0 0.0
    %1016 = vmatpush1.msra.mxu0 %v224
    %1017 = vmatprep.subr.mxu0 0.0
    %1018 = vmatpush1.msra.mxu0 %v225
    %1019 = vmatprep.subr.mxu0 0.0
    %1020 = vmatpush1.msra.mxu0 0.0
    %1021 = vmatprep.subr.mxu0 0.0
    %1022 = vmatpush1.msra.mxu0 0.0
    %1023 = vmatprep.subr.mxu0 0.0
    %1024 = vmatpush1.msra.mxu0 0.0
    %1025 = vmatprep.subr.mxu0 0.0
    %1026 = vmatpush1.msra.mxu0 0.0
    %1027 = vmatprep.subr.mxu0 0.0
    %1028 = vmatpush1.msra.mxu0 0.0
    %1029 = vmatprep.subr.mxu0 0.0
    %1030 = vmatpush1.msra.mxu0 0.0
    %1031 = vmatprep.subr.mxu0 0.0
    %1032 = vmatpush1.msra.mxu0 0.0
    %1033 = vmatprep.subr.mxu0 0.0
    %1034 = vmatpush1.msra.mxu0 0.0
    %1035 = vmatprep.subr.mxu0 0.0
    %1036 = vmatpush1.msra.mxu0 0.0
    %1037 = vmatprep.subr.mxu0 0.0
    %1038 = vmatpush1.msra.mxu0 0.0
    %1039 = vmatprep.subr.mxu0 0.0
    %1040 = vmatpush1.msra.mxu0 0.0
    %1041 = vmatprep.subr.mxu0 0.0
    %1042 = vmatpush1.msra.mxu0 0.0
    %1043 = vmatprep.subr.mxu0 0.0
    %1044 = vmatpush1.msra.mxu0 0.0
    %1045 = vmatprep.subr.mxu0 0.0
    %1046 = vmatpush1.msra.mxu0 0.0
    %1047 = vmatprep.subr.mxu0 0.0
    %1048 = vmatpush1.msra.mxu0 0.0
    %1049 = vmatprep.subr.mxu0 0.0
    %1050 = vmatpush1.msra.mxu0 0.0
    %1051 = vmatprep.subr.mxu0 0.0
    %1052 = vmatpush1.msra.mxu0 0.0
    %1053 = vmatprep.subr.mxu0 0.0
    %1054 = vmatpush1.msra.mxu0 0.0
    %1055 = vmatprep.subr.mxu0 0.0
    %1056 = vmatpush1.msra.mxu0 0.0
    %1057 = vmatprep.subr.mxu0 0.0
    %1058 = vmatpush1.msra.mxu0 0.0
    %1059 = vmatprep.subr.mxu0 0.0
    %1060 = vmatpush1.msra.mxu0 0.0
    %1061 = vmatprep.subr.mxu0 0.0
    %1062 = vmatpush1.msra.mxu0 0.0
    %1063 = vmatprep.subr.mxu0 0.0
    %1064 = vmatpush1.msra.mxu0 0.0
    %1065 = vmatprep.subr.mxu0 0.0
    %1066 = vmatpush1.msra.mxu0 0.0
    %1067 = vmatprep.subr.mxu0 0.0
    %1068 = vmatpush1.msra.mxu0 0.0
    %1069 = vmatprep.subr.mxu0 0.0
    %1070 = vmatpush1.msra.mxu0 0.0
    %1071 = vmatprep.subr.mxu0 0.0
    %1072 = vmatpush1.msra.mxu0 0.0
    %1073 = vmatprep.subr.mxu0 0.0
    %1074 = vmatpush1.msra.mxu0 0.0
    %1075 = vmatprep.mubr.f32.mxu0 0.0
    %1076 = vmatmul.mubr.f32.gmra.mrb[0].mxu0 %v855
    %v1077 = vpop.f32.mrb[0].mxu0
    %v1078 = vadd.f32 0.0, %v1077
    %v1079 = vpop.f32.mrb[0].mxu0
    %1080 = vdwg.mxu0
    %v1081 = vadd.f32 %v174, %v1078
    %v1082 = vtanh.pop %v1081
    %1083 = vmatprep.subr.mxu0 0.0
    %1084 = vmatpush1.msra.mxu0 %v227
    %1085 = vmatprep.subr.mxu0 0.0
    %1086 = vmatpush1.msra.mxu0 %v228
    %1087 = vmatprep.subr.mxu0 0.0
    %1088 = vmatpush1.msra.mxu0 %v229
    %1089 = vmatprep.subr.mxu0 0.0
    %1090 = vmatpush1.msra.mxu0 %v230
    %1091 = vmatprep.subr.mxu0 0.0
    %1092 = vmatpush1.msra.mxu0 0.0
    %1093 = vmatprep.subr.mxu0 0.0
    %1094 = vmatpush1.msra.mxu0 0.0
    %1095 = vmatprep.subr.mxu0 0.0
    %1096 = vmatpush1.msra.mxu0 0.0
    %1097 = vmatprep.subr.mxu0 0.0
    %1098 = vmatpush1.msra.mxu0 0.0
    %1099 = vmatprep.subr.mxu0 0.0
    %1100 = vmatpush1.msra.mxu0 0.0
    %1101 = vmatprep.subr.mxu0 0.0
    %1102 = vmatpush1.msra.mxu0 0.0
    %1103 = vmatprep.subr.mxu0 0.0
    %1104 = vmatpush1.msra.mxu0 0.0
    %1105 = vmatprep.subr.mxu0 0.0
    %1106 = vmatpush1.msra.mxu0 0.0
    %1107 = vmatprep.subr.mxu0 0.0
    %1108 = vmatpush1.msra.mxu0 0.0
    %1109 = vmatprep.subr.mxu0 0.0
    %1110 = vmatpush1.msra.mxu0 0.0
    %1111 = vmatprep.subr.mxu0 0.0
    %1112 = vmatpush1.msra.mxu0 0.0
    %1113 = vmatprep.subr.mxu0 0.0
    %1114 = vmatpush1.msra.mxu0 0.0
    %1115 = vmatprep.subr.mxu0 0.0
    %1116 = vmatpush1.msra.mxu0 0.0
    %1117 = vmatprep.subr.mxu0 0.0
    %1118 = vmatpush1.msra.mxu0 0.0
    %1119 = vmatprep.subr.mxu0 0.0
    %1120 = vmatpush1.msra.mxu0 0.0
    %1121 = vmatprep.subr.mxu0 0.0
    %1122 = vmatpush1.msra.mxu0 0.0
    %1123 = vmatprep.subr.mxu0 0.0
    %1124 = vmatpush1.msra.mxu0 0.0
    %1125 = vmatprep.subr.mxu0 0.0
    %1126 = vmatpush1.msra.mxu0 0.0
    %1127 = vmatprep.subr.mxu0 0.0
    %1128 = vmatpush1.msra.mxu0 0.0
    %1129 = vmatprep.subr.mxu0 0.0
    %1130 = vmatpush1.msra.mxu0 0.0
    %1131 = vmatprep.subr.mxu0 0.0
    %1132 = vmatpush1.msra.mxu0 0.0
    %1133 = vmatprep.subr.mxu0 0.0
    %1134 = vmatpush1.msra.mxu0 0.0
    %1135 = vmatprep.subr.mxu0 0.0
    %1136 = vmatpush1.msra.mxu0 0.0
    %1137 = vmatprep.subr.mxu0 0.0
    %1138 = vmatpush1.msra.mxu0 0.0
    %1139 = vmatprep.subr.mxu0 0.0
    %1140 = vmatpush1.msra.mxu0 0.0
    %1141 = vmatprep.subr.mxu0 0.0
    %1142 = vmatpush1.msra.mxu0 0.0
    %1143 = vmatprep.subr.mxu0 0.0
    %1144 = vmatpush1.msra.mxu0 0.0
    %1145 = vmatprep.subr.mxu0 0.0
    %1146 = vmatpush1.msra.mxu0 0.0
    %1147 = vmatprep.mubr.f32.mxu0 0.0
    %1148 = vmatmul.mubr.f32.gmra.mrb[0].mxu0 %v855
    %v1149 = vpop.f32.mrb[0].mxu0
    %v1150 = vadd.f32 0.0, %v1149
    %v1151 = vpop.f32.mrb[0].mxu0
    %1152 = vdwg.mxu0
    %v1153 = vadd.f32 %v206, %v1150
    %v1154 = vxor.u32 %v1153, 2147483648
    %v1155 = vmul.f32 %v1154, 1.442695
    %v1156 = vpow.pop %v1155
    %v1157 = vadd.f32 %v1156, 1.0
    %v1158 = vrcp.pop %v1157
    %v1159 = vmul.f32 1.0, %v1158
    %v1160 = vmul.f32 %v1010, %v851
    %v1161 = vmul.f32 %v933, %v1082
    %v1162 = vadd.f32 %v1160, %v1161
    %v1163 = vtanh.pop %v1162
    %v1164 = vmul.f32 %v1159, %v1163
    %v1166 = vsel %vm231, %v1164, 0
    %1168 = vmatprep.subr.mxu0 0.0
    %1169 = vmatpush1.msra.mxu0 %v212
    %1170 = vmatprep.subr.mxu0 0.0
    %1171 = vmatpush1.msra.mxu0 %v213
    %1172 = vmatprep.subr.mxu0 0.0
    %1173 = vmatpush1.msra.mxu0 %v214
    %1174 = vmatprep.subr.mxu0 0.0
    %1175 = vmatpush1.msra.mxu0 %v215
    %1176 = vmatprep.subr.mxu0 0.0
    %1177 = vmatpush1.msra.mxu0 0.0
    %1178 = vmatprep.subr.mxu0 0.0
    %1179 = vmatpush1.msra.mxu0 0.0
    %1180 = vmatprep.subr.mxu0 0.0
    %1181 = vmatpush1.msra.mxu0 0.0
    %1182 = vmatprep.subr.mxu0 0.0
    %1183 = vmatpush1.msra.mxu0 0.0
    %1184 = vmatprep.subr.mxu0 0.0
    %1185 = vmatpush1.msra.mxu0 0.0
    %1186 = vmatprep.subr.mxu0 0.0
    %1187 = vmatpush1.msra.mxu0 0.0
    %1188 = vmatprep.subr.mxu0 0.0
    %1189 = vmatpush1.msra.mxu0 0.0
    %1190 = vmatprep.subr.mxu0 0.0
    %1191 = vmatpush1.msra.mxu0 0.0
    %1192 = vmatprep.subr.mxu0 0.0
    %1193 = vmatpush1.msra.mxu0 0.0
    %1194 = vmatprep.subr.mxu0 0.0
    %1195 = vmatpush1.msra.mxu0 0.0
    %1196 = vmatprep.subr.mxu0 0.0
    %1197 = vmatpush1.msra.mxu0 0.0
    %1198 = vmatprep.subr.mxu0 0.0
    %1199 = vmatpush1.msra.mxu0 0.0
    %1200 = vmatprep.subr.mxu0 0.0
    %1201 = vmatpush1.msra.mxu0 0.0
    %1202 = vmatprep.subr.mxu0 0.0
    %1203 = vmatpush1.msra.mxu0 0.0
    %1204 = vmatprep.subr.mxu0 0.0
    %1205 = vmatpush1.msra.mxu0 0.0
    %1206 = vmatprep.subr.mxu0 0.0
    %1207 = vmatpush1.msra.mxu0 0.0
    %1208 = vmatprep.subr.mxu0 0.0
    %1209 = vmatpush1.msra.mxu0 0.0
    %1210 = vmatprep.subr.mxu0 0.0
    %1211 = vmatpush1.msra.mxu0 0.0
    %1212 = vmatprep.subr.mxu0 0.0
    %1213 = vmatpush1.msra.mxu0 0.0
    %1214 = vmatprep.subr.mxu0 0.0
    %1215 = vmatpush1.msra.mxu0 0.0
    %1216 = vmatprep.subr.mxu0 0.0
    %1217 = vmatpush1.msra.mxu0 0.0
    %1218 = vmatprep.subr.mxu0 0.0
    %1219 = vmatpush1.msra.mxu0 0.0
    %1220 = vmatprep.subr.mxu0 0.0
    %1221 = vmatpush1.msra.mxu0 0.0
    %1222 = vmatprep.subr.mxu0 0.0
    %1223 = vmatpush1.msra.mxu0 0.0
    %1224 = vmatprep.subr.mxu0 0.0
    %1225 = vmatpush1.msra.mxu0 0.0
    %1226 = vmatprep.subr.mxu0 0.0
    %1227 = vmatpush1.msra.mxu0 0.0
    %1228 = vmatprep.subr.mxu0 0.0
    %1229 = vmatpush1.msra.mxu0 0.0
    %1230 = vmatprep.subr.mxu0 0.0
    %1231 = vmatpush1.msra.mxu0 0.0
    %1232 = vmatprep.mubr.f32.mxu0 0.0
    %1233 = vmatmul.mubr.f32.gmra.mrb[0].mxu0 %v1166
    %v1234 = vpop.f32.mrb[0].mxu0
    %v1235 = vadd.f32 0.0, %v1234
    %v1236 = vpop.f32.mrb[0].mxu0
    %1237 = vdwg.mxu0
    %v1238 = vadd.f32 %v111, %v1235
    %v1239 = vxor.u32 %v1238, 2147483648
    %v1240 = vmul.f32 %v1239, 1.442695
    %v1241 = vpow.pop %v1240
    %v1242 = vadd.f32 %v1241, 1.0
    %v1243 = vrcp.pop %v1242
    %v1244 = vmul.f32 1.0, %v1243
    %1245 = vmatprep.subr.mxu0 0.0
    %1246 = vmatpush1.msra.mxu0 %v217
    %1247 = vmatprep.subr.mxu0 0.0
    %1248 = vmatpush1.msra.mxu0 %v218
    %1249 = vmatprep.subr.mxu0 0.0
    %1250 = vmatpush1.msra.mxu0 %v219
    %1251 = vmatprep.subr.mxu0 0.0
    %1252 = vmatpush1.msra.mxu0 %v220
    %1253 = vmatprep.subr.mxu0 0.0
    %1254 = vmatpush1.msra.mxu0 0.0
    %1255 = vmatprep.subr.mxu0 0.0
    %1256 = vmatpush1.msra.mxu0 0.0
    %1257 = vmatprep.subr.mxu0 0.0
    %1258 = vmatpush1.msra.mxu0 0.0
    %1259 = vmatprep.subr.mxu0 0.0
    %1260 = vmatpush1.msra.mxu0 0.0
    %1261 = vmatprep.subr.mxu0 0.0
    %1262 = vmatpush1.msra.mxu0 0.0
    %1263 = vmatprep.subr.mxu0 0.0
    %1264 = vmatpush1.msra.mxu0 0.0
    %1265 = vmatprep.subr.mxu0 0.0
    %1266 = vmatpush1.msra.mxu0 0.0
    %1267 = vmatprep.subr.mxu0 0.0
    %1268 = vmatpush1.msra.mxu0 0.0
    %1269 = vmatprep.subr.mxu0 0.0
    %1270 = vmatpush1.msra.mxu0 0.0
    %1271 = vmatprep.subr.mxu0 0.0
    %1272 = vmatpush1.msra.mxu0 0.0
    %1273 = vmatprep.subr.mxu0 0.0
    %1274 = vmatpush1.msra.mxu0 0.0
    %1275 = vmatprep.subr.mxu0 0.0
    %1276 = vmatpush1.msra.mxu0 0.0
    %1277 = vmatprep.subr.mxu0 0.0
    %1278 = vmatpush1.msra.mxu0 0.0
    %1279 = vmatprep.subr.mxu0 0.0
    %1280 = vmatpush1.msra.mxu0 0.0
    %1281 = vmatprep.subr.mxu0 0.0
    %1282 = vmatpush1.msra.mxu0 0.0
    %1283 = vmatprep.subr.mxu0 0.0
    %1284 = vmatpush1.msra.mxu0 0.0
    %1285 = vmatprep.subr.mxu0 0.0
    %1286 = vmatpush1.msra.mxu0 0.0
    %1287 = vmatprep.subr.mxu0 0.0
    %1288 = vmatpush1.msra.mxu0 0.0
    %1289 = vmatprep.subr.mxu0 0.0
    %1290 = vmatpush1.msra.mxu0 0.0
    %1291 = vmatprep.subr.mxu0 0.0
    %1292 = vmatpush1.msra.mxu0 0.0
    %1293 = vmatprep.subr.mxu0 0.0
    %1294 = vmatpush1.msra.mxu0 0.0
    %1295 = vmatprep.subr.mxu0 0.0
    %1296 = vmatpush1.msra.mxu0 0.0
    %1297 = vmatprep.subr.mxu0 0.0
    %1298 = vmatpush1.msra.mxu0 0.0
    %1299 = vmatprep.subr.mxu0 0.0
    %1300 = vmatpush1.msra.mxu0 0.0
    %1301 = vmatprep.subr.mxu0 0.0
    %1302 = vmatpush1.msra.mxu0 0.0
    %1303 = vmatprep.subr.mxu0 0.0
    %1304 = vmatpush1.msra.mxu0 0.0
    %1305 = vmatprep.subr.mxu0 0.0
    %1306 = vmatpush1.msra.mxu0 0.0
    %1307 = vmatprep.subr.mxu0 0.0
    %1308 = vmatpush1.msra.mxu0 0.0
    %1309 = vmatprep.mubr.f32.mxu0 0.0
    %1310 = vmatmul.mubr.f32.gmra.mrb[0].mxu0 %v1166
    %v1311 = vpop.f32.mrb[0].mxu0
    %v1312 = vadd.f32 0.0, %v1311
    %v1313 = vpop.f32.mrb[0].mxu0
    %1314 = vdwg.mxu0
    %v1315 = vadd.f32 %v143, %v1312
    %v1316 = vxor.u32 %v1315, 2147483648
    %v1317 = vmul.f32 %v1316, 1.442695
    %v1318 = vpow.pop %v1317
    %v1319 = vadd.f32 %v1318, 1.0
    %v1320 = vrcp.pop %v1319
    %v1321 = vmul.f32 1.0, %v1320
    %1322 = vmatprep.subr.mxu0 0.0
    %1323 = vmatpush1.msra.mxu0 %v222
    %1324 = vmatprep.subr.mxu0 0.0
    %1325 = vmatpush1.msra.mxu0 %v223
    %1326 = vmatprep.subr.mxu0 0.0
    %1327 = vmatpush1.msra.mxu0 %v224
    %1328 = vmatprep.subr.mxu0 0.0
    %1329 = vmatpush1.msra.mxu0 %v225
    %1330 = vmatprep.subr.mxu0 0.0
    %1331 = vmatpush1.msra.mxu0 0.0
    %1332 = vmatprep.subr.mxu0 0.0
    %1333 = vmatpush1.msra.mxu0 0.0
    %1334 = vmatprep.subr.mxu0 0.0
    %1335 = vmatpush1.msra.mxu0 0.0
    %1336 = vmatprep.subr.mxu0 0.0
    %1337 = vmatpush1.msra.mxu0 0.0
    %1338 = vmatprep.subr.mxu0 0.0
    %1339 = vmatpush1.msra.mxu0 0.0
    %1340 = vmatprep.subr.mxu0 0.0
    %1341 = vmatpush1.msra.mxu0 0.0
    %1342 = vmatprep.subr.mxu0 0.0
    %1343 = vmatpush1.msra.mxu0 0.0
    %1344 = vmatprep.subr.mxu0 0.0
    %1345 = vmatpush1.msra.mxu0 0.0
    %1346 = vmatprep.subr.mxu0 0.0
    %1347 = vmatpush1.msra.mxu0 0.0
    %1348 = vmatprep.subr.mxu0 0.0
    %1349 = vmatpush1.msra.mxu0 0.0
    %1350 = vmatprep.subr.mxu0 0.0
    %1351 = vmatpush1.msra.mxu0 0.0
    %1352 = vmatprep.subr.mxu0 0.0
    %1353 = vmatpush1.msra.mxu0 0.0
    %1354 = vmatprep.subr.mxu0 0.0
    %1355 = vmatpush1.msra.mxu0 0.0
    %1356 = vmatprep.subr.mxu0 0.0
    %1357 = vmatpush1.msra.mxu0 0.0
    %1358 = vmatprep.subr.mxu0 0.0
    %1359 = vmatpush1.msra.mxu0 0.0
    %1360 = vmatprep.subr.mxu0 0.0
    %1361 = vmatpush1.msra.mxu0 0.0
    %1362 = vmatprep.subr.mxu0 0.0
    %1363 = vmatpush1.msra.mxu0 0.0
    %1364 = vmatprep.subr.mxu0 0.0
    %1365 = vmatpush1.msra.mxu0 0.0
    %1366 = vmatprep.subr.mxu0 0.0
    %1367 = vmatpush1.msra.mxu0 0.0
    %1368 = vmatprep.subr.mxu0 0.0
    %1369 = vmatpush1.msra.mxu0 0.0
    %1370 = vmatprep.subr.mxu0 0.0
    %1371 = vmatpush1.msra.mxu0 0.0
    %1372 = vmatprep.subr.mxu0 0.0
    %1373 = vmatpush1.msra.mxu0 0.0
    %1374 = vmatprep.subr.mxu0 0.0
    %1375 = vmatpush1.msra.mxu0 0.0
    %1376 = vmatprep.subr.mxu0 0.0
    %1377 = vmatpush1.msra.mxu0 0.0
    %1378 = vmatprep.subr.mxu0 0.0
    %1379 = vmatpush1.msra.mxu0 0.0
    %1380 = vmatprep.subr.mxu0 0.0
    %1381 = vmatpush1.msra.mxu0 0.0
    %1382 = vmatprep.subr.mxu0 0.0
    %1383 = vmatpush1.msra.mxu0 0.0
    %1384 = vmatprep.subr.mxu0 0.0
    %1385 = vmatpush1.msra.mxu0 0.0
    %1386 = vmatprep.mubr.f32.mxu0 0.0
    %1387 = vmatmul.mubr.f32.gmra.mrb[0].mxu0 %v1166
    %v1388 = vpop.f32.mrb[0].mxu0
    %v1389 = vadd.f32 0.0, %v1388
    %v1390 = vpop.f32.mrb[0].mxu0
    %1391 = vdwg.mxu0
    %v1392 = vadd.f32 %v175, %v1389
    %v1393 = vtanh.pop %v1392
    %1394 = vmatprep.subr.mxu0 0.0
    %1395 = vmatpush1.msra.mxu0 %v227
    %1396 = vmatprep.subr.mxu0 0.0
    %1397 = vmatpush1.msra.mxu0 %v228
    %1398 = vmatprep.subr.mxu0 0.0
    %1399 = vmatpush1.msra.mxu0 %v229
    %1400 = vmatprep.subr.mxu0 0.0
    %1401 = vmatpush1.msra.mxu0 %v230
    %1402 = vmatprep.subr.mxu0 0.0
    %1403 = vmatpush1.msra.mxu0 0.0
    %1404 = vmatprep.subr.mxu0 0.0
    %1405 = vmatpush1.msra.mxu0 0.0
    %1406 = vmatprep.subr.mxu0 0.0
    %1407 = vmatpush1.msra.mxu0 0.0
    %1408 = vmatprep.subr.mxu0 0.0
    %1409 = vmatpush1.msra.mxu0 0.0
    %1410 = vmatprep.subr.mxu0 0.0
    %1411 = vmatpush1.msra.mxu0 0.0
    %1412 = vmatprep.subr.mxu0 0.0
    %1413 = vmatpush1.msra.mxu0 0.0
    %1414 = vmatprep.subr.mxu0 0.0
    %1415 = vmatpush1.msra.mxu0 0.0
    %1416 = vmatprep.subr.mxu0 0.0
    %1417 = vmatpush1.msra.mxu0 0.0
    %1418 = vmatprep.subr.mxu0 0.0
    %1419 = vmatpush1.msra.mxu0 0.0
    %1420 = vmatprep.subr.mxu0 0.0
    %1421 = vmatpush1.msra.mxu0 0.0
    %1422 = vmatprep.subr.mxu0 0.0
    %1423 = vmatpush1.msra.mxu0 0.0
    %1424 = vmatprep.subr.mxu0 0.0
    %1425 = vmatpush1.msra.mxu0 0.0
    %1426 = vmatprep.subr.mxu0 0.0
    %1427 = vmatpush1.msra.mxu0 0.0
    %1428 = vmatprep.subr.mxu0 0.0
    %1429 = vmatpush1.msra.mxu0 0.0
    %1430 = vmatprep.subr.mxu0 0.0
    %1431 = vmatpush1.msra.mxu0 0.0
    %1432 = vmatprep.subr.mxu0 0.0
    %1433 = vmatpush1.msra.mxu0 0.0
    %1434 = vmatprep.subr.mxu0 0.0
    %1435 = vmatpush1.msra.mxu0 0.0
    %1436 = vmatprep.subr.mxu0 0.0
    %1437 = vmatpush1.msra.mxu0 0.0
    %1438 = vmatprep.subr.mxu0 0.0
    %1439 = vmatpush1.msra.mxu0 0.0
    %1440 = vmatprep.subr.mxu0 0.0
    %1441 = vmatpush1.msra.mxu0 0.0
    %1442 = vmatprep.subr.mxu0 0.0
    %1443 = vmatpush1.msra.mxu0 0.0
    %1444 = vmatprep.subr.mxu0 0.0
    %1445 = vmatpush1.msra.mxu0 0.0
    %1446 = vmatprep.subr.mxu0 0.0
    %1447 = vmatpush1.msra.mxu0 0.0
    %1448 = vmatprep.subr.mxu0 0.0
    %1449 = vmatpush1.msra.mxu0 0.0
    %1450 = vmatprep.subr.mxu0 0.0
    %1451 = vmatpush1.msra.mxu0 0.0
    %1452 = vmatprep.subr.mxu0 0.0
    %1453 = vmatpush1.msra.mxu0 0.0
    %1454 = vmatprep.subr.mxu0 0.0
    %1455 = vmatpush1.msra.mxu0 0.0
    %1456 = vmatprep.subr.mxu0 0.0
    %1457 = vmatpush1.msra.mxu0 0.0
    %1458 = vmatprep.mubr.f32.mxu0 0.0
    %1459 = vmatmul.mubr.f32.gmra.mrb[0].mxu0 %v1166
    %v1460 = vpop.f32.mrb[0].mxu0
    %v1461 = vadd.f32 0.0, %v1460
    %v1462 = vpop.f32.mrb[0].mxu0
    %1463 = vdwg.mxu0
    %v1464 = vadd.f32 %v207, %v1461
    %v1465 = vxor.u32 %v1464, 2147483648
    %v1466 = vmul.f32 %v1465, 1.442695
    %v1467 = vpow.pop %v1466
    %v1468 = vadd.f32 %v1467, 1.0
    %v1469 = vrcp.pop %v1468
    %v1470 = vmul.f32 1.0, %v1469
    %v1471 = vmul.f32 %v1321, %v1162
    %v1472 = vmul.f32 %v1244, %v1393
    %v1473 = vadd.f32 %v1471, %v1472
    %v1474 = vtanh.pop %v1473
    %v1475 = vmul.f32 %v1470, %v1474
    %v1477 = vsel %vm231, %v1475, 0
    %1479 = vmatprep.subr.mxu0 0.0
    %1480 = vmatpush1.msra.mxu0 %v212
    %1481 = vmatprep.subr.mxu0 0.0
    %1482 = vmatpush1.msra.mxu0 %v213
    %1483 = vmatprep.subr.mxu0 0.0
    %1484 = vmatpush1.msra.mxu0 %v214
    %1485 = vmatprep.subr.mxu0 0.0
    %1486 = vmatpush1.msra.mxu0 %v215
    %1487 = vmatprep.subr.mxu0 0.0
    %1488 = vmatpush1.msra.mxu0 0.0
    %1489 = vmatprep.subr.mxu0 0.0
    %1490 = vmatpush1.msra.mxu0 0.0
    %1491 = vmatprep.subr.mxu0 0.0
    %1492 = vmatpush1.msra.mxu0 0.0
    %1493 = vmatprep.subr.mxu0 0.0
    %1494 = vmatpush1.msra.mxu0 0.0
    %1495 = vmatprep.subr.mxu0 0.0
    %1496 = vmatpush1.msra.mxu0 0.0
    %1497 = vmatprep.subr.mxu0 0.0
    %1498 = vmatpush1.msra.mxu0 0.0
    %1499 = vmatprep.subr.mxu0 0.0
    %1500 = vmatpush1.msra.mxu0 0.0
    %1501 = vmatprep.subr.mxu0 0.0
    %1502 = vmatpush1.msra.mxu0 0.0
    %1503 = vmatprep.subr.mxu0 0.0
    %1504 = vmatpush1.msra.mxu0 0.0
    %1505 = vmatprep.subr.mxu0 0.0
    %1506 = vmatpush1.msra.mxu0 0.0
    %1507 = vmatprep.subr.mxu0 0.0
    %1508 = vmatpush1.msra.mxu0 0.0
    %1509 = vmatprep.subr.mxu0 0.0
    %1510 = vmatpush1.msra.mxu0 0.0
    %1511 = vmatprep.subr.mxu0 0.0
    %1512 = vmatpush1.msra.mxu0 0.0
    %1513 = vmatprep.subr.mxu0 0.0
    %1514 = vmatpush1.msra.mxu0 0.0
    %1515 = vmatprep.subr.mxu0 0.0
    %1516 = vmatpush1.msra.mxu0 0.0
    %1517 = vmatprep.subr.mxu0 0.0
    %1518 = vmatpush1.msra.mxu0 0.0
    %1519 = vmatprep.subr.mxu0 0.0
    %1520 = vmatpush1.msra.mxu0 0.0
    %1521 = vmatprep.subr.mxu0 0.0
    %1522 = vmatpush1.msra.mxu0 0.0
    %1523 = vmatprep.subr.mxu0 0.0
    %1524 = vmatpush1.msra.mxu0 0.0
    %1525 = vmatprep.subr.mxu0 0.0
    %1526 = vmatpush1.msra.mxu0 0.0
    %1527 = vmatprep.subr.mxu0 0.0
    %1528 = vmatpush1.msra.mxu0 0.0
    %1529 = vmatprep.subr.mxu0 0.0
    %1530 = vmatpush1.msra.mxu0 0.0
    %1531 = vmatprep.subr.mxu0 0.0
    %1532 = vmatpush1.msra.mxu0 0.0
    %1533 = vmatprep.subr.mxu0 0.0
    %1534 = vmatpush1.msra.mxu0 0.0
    %1535 = vmatprep.subr.mxu0 0.0
    %1536 = vmatpush1.msra.mxu0 0.0
    %1537 = vmatprep.subr.mxu0 0.0
    %1538 = vmatpush1.msra.mxu0 0.0
    %1539 = vmatprep.subr.mxu0 0.0
    %1540 = vmatpush1.msra.mxu0 0.0
    %1541 = vmatprep.subr.mxu0 0.0
    %1542 = vmatpush1.msra.mxu0 0.0
    %1543 = vmatprep.mubr.f32.mxu0 0.0
    %1544 = vmatmul.mubr.f32.gmra.mrb[0].mxu0 %v1477
    %v1545 = vpop.f32.mrb[0].mxu0
    %v1546 = vadd.f32 0.0, %v1545
    %v1547 = vpop.f32.mrb[0].mxu0
    %1548 = vdwg.mxu0
    %v1549 = vadd.f32 %v112, %v1546
    %v1550 = vxor.u32 %v1549, 2147483648
    %v1551 = vmul.f32 %v1550, 1.442695
    %v1552 = vpow.pop %v1551
    %v1553 = vadd.f32 %v1552, 1.0
    %v1554 = vrcp.pop %v1553
    %v1555 = vmul.f32 1.0, %v1554
    %1556 = vmatprep.subr.mxu0 0.0
    %1557 = vmatpush1.msra.mxu0 %v217
    %1558 = vmatprep.subr.mxu0 0.0
    %1559 = vmatpush1.msra.mxu0 %v218
    %1560 = vmatprep.subr.mxu0 0.0
    %1561 = vmatpush1.msra.mxu0 %v219
    %1562 = vmatprep.subr.mxu0 0.0
    %1563 = vmatpush1.msra.mxu0 %v220
    %1564 = vmatprep.subr.mxu0 0.0
    %1565 = vmatpush1.msra.mxu0 0.0
    %1566 = vmatprep.subr.mxu0 0.0
    %1567 = vmatpush1.msra.mxu0 0.0
    %1568 = vmatprep.subr.mxu0 0.0
    %1569 = vmatpush1.msra.mxu0 0.0
    %1570 = vmatprep.subr.mxu0 0.0
    %1571 = vmatpush1.msra.mxu0 0.0
    %1572 = vmatprep.subr.mxu0 0.0
    %1573 = vmatpush1.msra.mxu0 0.0
    %1574 = vmatprep.subr.mxu0 0.0
    %1575 = vmatpush1.msra.mxu0 0.0
    %1576 = vmatprep.subr.mxu0 0.0
    %1577 = vmatpush1.msra.mxu0 0.0
    %1578 = vmatprep.subr.mxu0 0.0
    %1579 = vmatpush1.msra.mxu0 0.0
    %1580 = vmatprep.subr.mxu0 0.0
    %1581 = vmatpush1.msra.mxu0 0.0
    %1582 = vmatprep.subr.mxu0 0.0
    %1583 = vmatpush1.msra.mxu0 0.0
    %1584 = vmatprep.subr.mxu0 0.0
    %1585 = vmatpush1.msra.mxu0 0.0
    %1586 = vmatprep.subr.mxu0 0.0
    %1587 = vmatpush1.msra.mxu0 0.0
    %1588 = vmatprep.subr.mxu0 0.0
    %1589 = vmatpush1.msra.mxu0 0.0
    %1590 = vmatprep.subr.mxu0 0.0
    %1591 = vmatpush1.msra.mxu0 0.0
    %1592 = vmatprep.subr.mxu0 0.0
    %1593 = vmatpush1.msra.mxu0 0.0
    %1594 = vmatprep.subr.mxu0 0.0
    %1595 = vmatpush1.msra.mxu0 0.0
    %1596 = vmatprep.subr.mxu0 0.0
    %1597 = vmatpush1.msra.mxu0 0.0
    %1598 = vmatprep.subr.mxu0 0.0
    %1599 = vmatpush1.msra.mxu0 0.0
    %1600 = vmatprep.subr.mxu0 0.0
    %1601 = vmatpush1.msra.mxu0 0.0
    %1602 = vmatprep.subr.mxu0 0.0
    %1603 = vmatpush1.msra.mxu0 0.0
    %1604 = vmatprep.subr.mxu0 0.0
    %1605 = vmatpush1.msra.mxu0 0.0
    %1606 = vmatprep.subr.mxu0 0.0
    %1607 = vmatpush1.msra.mxu0 0.0
    %1608 = vmatprep.subr.mxu0 0.0
    %1609 = vmatpush1.msra.mxu0 0.0
    %1610 = vmatprep.subr.mxu0 0.0
    %1611 = vmatpush1.msra.mxu0 0.0
    %1612 = vmatprep.subr.mxu0 0.0
    %1613 = vmatpush1.msra.mxu0 0.0
    %1614 = vmatprep.subr.mxu0 0.0
    %1615 = vmatpush1.msra.mxu0 0.0
    %1616 = vmatprep.subr.mxu0 0.0
    %1617 = vmatpush1.msra.mxu0 0.0
    %1618 = vmatprep.subr.mxu0 0.0
    %1619 = vmatpush1.msra.mxu0 0.0
    %1620 = vmatprep.mubr.f32.mxu0 0.0
    %1621 = vmatmul.mubr.f32.gmra.mrb[0].mxu0 %v1477
    %v1622 = vpop.f32.mrb[0].mxu0
    %v1623 = vadd.f32 0.0, %v1622
    %v1624 = vpop.f32.mrb[0].mxu0
    %1625 = vdwg.mxu0
    %v1626 = vadd.f32 %v144, %v1623
    %v1627 = vxor.u32 %v1626, 2147483648
    %v1628 = vmul.f32 %v1627, 1.442695
    %v1629 = vpow.pop %v1628
    %v1630 = vadd.f32 %v1629, 1.0
    %v1631 = vrcp.pop %v1630
    %v1632 = vmul.f32 1.0, %v1631
    %1633 = vmatprep.subr.mxu0 0.0
    %1634 = vmatpush1.msra.mxu0 %v222
    %1635 = vmatprep.subr.mxu0 0.0
    %1636 = vmatpush1.msra.mxu0 %v223
    %1637 = vmatprep.subr.mxu0 0.0
    %1638 = vmatpush1.msra.mxu0 %v224
    %1639 = vmatprep.subr.mxu0 0.0
    %1640 = vmatpush1.msra.mxu0 %v225
    %1641 = vmatprep.subr.mxu0 0.0
    %1642 = vmatpush1.msra.mxu0 0.0
    %1643 = vmatprep.subr.mxu0 0.0
    %1644 = vmatpush1.msra.mxu0 0.0
    %1645 = vmatprep.subr.mxu0 0.0
    %1646 = vmatpush1.msra.mxu0 0.0
    %1647 = vmatprep.subr.mxu0 0.0
    %1648 = vmatpush1.msra.mxu0 0.0
    %1649 = vmatprep.subr.mxu0 0.0
    %1650 = vmatpush1.msra.mxu0 0.0
    %1651 = vmatprep.subr.mxu0 0.0
    %1652 = vmatpush1.msra.mxu0 0.0
    %1653 = vmatprep.subr.mxu0 0.0
    %1654 = vmatpush1.msra.mxu0 0.0
    %1655 = vmatprep.subr.mxu0 0.0
    %1656 = vmatpush1.msra.mxu0 0.0
    %1657 = vmatprep.subr.mxu0 0.0
    %1658 = vmatpush1.msra.mxu0 0.0
    %1659 = vmatprep.subr.mxu0 0.0
    %1660 = vmatpush1.msra.mxu0 0.0
    %1661 = vmatprep.subr.mxu0 0.0
    %1662 = vmatpush1.msra.mxu0 0.0
    %1663 = vmatprep.subr.mxu0 0.0
    %1664 = vmatpush1.msra.mxu0 0.0
    %1665 = vmatprep.subr.mxu0 0.0
    %1666 = vmatpush1.msra.mxu0 0.0
    %1667 = vmatprep.subr.mxu0 0.0
    %1668 = vmatpush1.msra.mxu0 0.0
    %1669 = vmatprep.subr.mxu0 0.0
    %1670 = vmatpush1.msra.mxu0 0.0
    %1671 = vmatprep.subr.mxu0 0.0
    %1672 = vmatpush1.msra.mxu0 0.0
    %1673 = vmatprep.subr.mxu0 0.0
    %1674 = vmatpush1.msra.mxu0 0.0
    %1675 = vmatprep.subr.mxu0 0.0
    %1676 = vmatpush1.msra.mxu0 0.0
    %1677 = vmatprep.subr.mxu0 0.0
    %1678 = vmatpush1.msra.mxu0 0.0
    %1679 = vmatprep.subr.mxu0 0.0
    %1680 = vmatpush1.msra.mxu0 0.0
    %1681 = vmatprep.subr.mxu0 0.0
    %1682 = vmatpush1.msra.mxu0 0.0
    %1683 = vmatprep.subr.mxu0 0.0
    %1684 = vmatpush1.msra.mxu0 0.0
    %1685 = vmatprep.subr.mxu0 0.0
    %1686 = vmatpush1.msra.mxu0 0.0
    %1687 = vmatprep.subr.mxu0 0.0
    %1688 = vmatpush1.msra.mxu0 0.0
    %1689 = vmatprep.subr.mxu0 0.0
    %1690 = vmatpush1.msra.mxu0 0.0
    %1691 = vmatprep.subr.mxu0 0.0
    %1692 = vmatpush1.msra.mxu0 0.0
    %1693 = vmatprep.subr.mxu0 0.0
    %1694 = vmatpush1.msra.mxu0 0.0
    %1695 = vmatprep.subr.mxu0 0.0
    %1696 = vmatpush1.msra.mxu0 0.0
    %1697 = vmatprep.mubr.f32.mxu0 0.0
    %1698 = vmatmul.mubr.f32.gmra.mrb[0].mxu0 %v1477
    %v1699 = vpop.f32.mrb[0].mxu0
    %v1700 = vadd.f32 0.0, %v1699
    %v1701 = vpop.f32.mrb[0].mxu0
    %1702 = vdwg.mxu0
    %v1703 = vadd.f32 %v176, %v1700
    %v1704 = vtanh.pop %v1703
    %1705 = vmatprep.subr.mxu0 0.0
    %1706 = vmatpush1.msra.mxu0 %v227
    %1707 = vmatprep.subr.mxu0 0.0
    %1708 = vmatpush1.msra.mxu0 %v228
    %1709 = vmatprep.subr.mxu0 0.0
    %1710 = vmatpush1.msra.mxu0 %v229
    %1711 = vmatprep.subr.mxu0 0.0
    %1712 = vmatpush1.msra.mxu0 %v230
    %1713 = vmatprep.subr.mxu0 0.0
    %1714 = vmatpush1.msra.mxu0 0.0
    %1715 = vmatprep.subr.mxu0 0.0
    %1716 = vmatpush1.msra.mxu0 0.0
    %1717 = vmatprep.subr.mxu0 0.0
    %1718 = vmatpush1.msra.mxu0 0.0
    %1719 = vmatprep.subr.mxu0 0.0
    %1720 = vmatpush1.msra.mxu0 0.0
    %1721 = vmatprep.subr.mxu0 0.0
    %1722 = vmatpush1.msra.mxu0 0.0
    %1723 = vmatprep.subr.mxu0 0.0
    %1724 = vmatpush1.msra.mxu0 0.0
    %1725 = vmatprep.subr.mxu0 0.0
    %1726 = vmatpush1.msra.mxu0 0.0
    %1727 = vmatprep.subr.mxu0 0.0
    %1728 = vmatpush1.msra.mxu0 0.0
    %1729 = vmatprep.subr.mxu0 0.0
    %1730 = vmatpush1.msra.mxu0 0.0
    %1731 = vmatprep.subr.mxu0 0.0
    %1732 = vmatpush1.msra.mxu0 0.0
    %1733 = vmatprep.subr.mxu0 0.0
    %1734 = vmatpush1.msra.mxu0 0.0
    %1735 = vmatprep.subr.mxu0 0.0
    %1736 = vmatpush1.msra.mxu0 0.0
    %1737 = vmatprep.subr.mxu0 0.0
    %1738 = vmatpush1.msra.mxu0 0.0
    %1739 = vmatprep.subr.mxu0 0.0
    %1740 = vmatpush1.msra.mxu0 0.0
    %1741 = vmatprep.subr.mxu0 0.0
    %1742 = vmatpush1.msra.mxu0 0.0
    %1743 = vmatprep.subr.mxu0 0.0
    %1744 = vmatpush1.msra.mxu0 0.0
    %1745 = vmatprep.subr.mxu0 0.0
    %1746 = vmatpush1.msra.mxu0 0.0
    %1747 = vmatprep.subr.mxu0 0.0
    %1748 = vmatpush1.msra.mxu0 0.0
    %1749 = vmatprep.subr.mxu0 0.0
    %1750 = vmatpush1.msra.mxu0 0.0
    %1751 = vmatprep.subr.mxu0 0.0
    %1752 = vmatpush1.msra.mxu0 0.0
    %1753 = vmatprep.subr.mxu0 0.0
    %1754 = vmatpush1.msra.mxu0 0.0
    %1755 = vmatprep.subr.mxu0 0.0
    %1756 = vmatpush1.msra.mxu0 0.0
    %1757 = vmatprep.subr.mxu0 0.0
    %1758 = vmatpush1.msra.mxu0 0.0
    %1759 = vmatprep.subr.mxu0 0.0
    %1760 = vmatpush1.msra.mxu0 0.0
    %1761 = vmatprep.subr.mxu0 0.0
    %1762 = vmatpush1.msra.mxu0 0.0
    %1763 = vmatprep.subr.mxu0 0.0
    %1764 = vmatpush1.msra.mxu0 0.0
    %1765 = vmatprep.subr.mxu0 0.0
    %1766 = vmatpush1.msra.mxu0 0.0
    %1767 = vmatprep.subr.mxu0 0.0
    %1768 = vmatpush1.msra.mxu0 0.0
    %1769 = vmatprep.mubr.f32.mxu0 0.0
    %1770 = vmatmul.mubr.f32.gmra.mrb[0].mxu0 %v1477
    %v1771 = vpop.f32.mrb[0].mxu0
    %v1772 = vadd.f32 0.0, %v1771
    %v1773 = vpop.f32.mrb[0].mxu0
    %1774 = vdwg.mxu0
    %v1775 = vadd.f32 %v208, %v1772
    %v1776 = vxor.u32 %v1775, 2147483648
    %v1777 = vmul.f32 %v1776, 1.442695
    %v1778 = vpow.pop %v1777
    %v1779 = vadd.f32 %v1778, 1.0
    %v1780 = vrcp.pop %v1779
    %v1781 = vmul.f32 1.0, %v1780
    %v1782 = vmul.f32 %v1632, %v1473
    %v1783 = vmul.f32 %v1555, %v1704
    %v1784 = vadd.f32 %v1782, %v1783
    %v1785 = vtanh.pop %v1784
    %v1786 = vmul.f32 %v1781, %v1785
    %v1788 = vsel %vm231, %v1786, 0
    %1790 = vmatprep.subr.mxu0 0.0
    %1791 = vmatpush1.msra.mxu0 %v212
    %1792 = vmatprep.subr.mxu0 0.0
    %1793 = vmatpush1.msra.mxu0 %v213
    %1794 = vmatprep.subr.mxu0 0.0
    %1795 = vmatpush1.msra.mxu0 %v214
    %1796 = vmatprep.subr.mxu0 0.0
    %1797 = vmatpush1.msra.mxu0 %v215
    %1798 = vmatprep.subr.mxu0 0.0
    %1799 = vmatpush1.msra.mxu0 0.0
    %1800 = vmatprep.subr.mxu0 0.0
    %1801 = vmatpush1.msra.mxu0 0.0
    %1802 = vmatprep.subr.mxu0 0.0
    %1803 = vmatpush1.msra.mxu0 0.0
    %1804 = vmatprep.subr.mxu0 0.0
    %1805 = vmatpush1.msra.mxu0 0.0
    %1806 = vmatprep.subr.mxu0 0.0
    %1807 = vmatpush1.msra.mxu0 0.0
    %1808 = vmatprep.subr.mxu0 0.0
    %1809 = vmatpush1.msra.mxu0 0.0
    %1810 = vmatprep.subr.mxu0 0.0
    %1811 = vmatpush1.msra.mxu0 0.0
    %1812 = vmatprep.subr.mxu0 0.0
    %1813 = vmatpush1.msra.mxu0 0.0
    %1814 = vmatprep.subr.mxu0 0.0
    %1815 = vmatpush1.msra.mxu0 0.0
    %1816 = vmatprep.subr.mxu0 0.0
    %1817 = vmatpush1.msra.mxu0 0.0
    %1818 = vmatprep.subr.mxu0 0.0
    %1819 = vmatpush1.msra.mxu0 0.0
    %1820 = vmatprep.subr.mxu0 0.0
    %1821 = vmatpush1.msra.mxu0 0.0
    %1822 = vmatprep.subr.mxu0 0.0
    %1823 = vmatpush1.msra.mxu0 0.0
    %1824 = vmatprep.subr.mxu0 0.0
    %1825 = vmatpush1.msra.mxu0 0.0
    %1826 = vmatprep.subr.mxu0 0.0
    %1827 = vmatpush1.msra.mxu0 0.0
    %1828 = vmatprep.subr.mxu0 0.0
    %1829 = vmatpush1.msra.mxu0 0.0
    %1830 = vmatprep.subr.mxu0 0.0
    %1831 = vmatpush1.msra.mxu0 0.0
    %1832 = vmatprep.subr.mxu0 0.0
    %1833 = vmatpush1.msra.mxu0 0.0
    %1834 = vmatprep.subr.mxu0 0.0
    %1835 = vmatpush1.msra.mxu0 0.0
    %1836 = vmatprep.subr.mxu0 0.0
    %1837 = vmatpush1.msra.mxu0 0.0
    %1838 = vmatprep.subr.mxu0 0.0
    %1839 = vmatpush1.msra.mxu0 0.0
    %1840 = vmatprep.subr.mxu0 0.0
    %1841 = vmatpush1.msra.mxu0 0.0
    %1842 = vmatprep.subr.mxu0 0.0
    %1843 = vmatpush1.msra.mxu0 0.0
    %1844 = vmatprep.subr.mxu0 0.0
    %1845 = vmatpush1.msra.mxu0 0.0
    %1846 = vmatprep.subr.mxu0 0.0
    %1847 = vmatpush1.msra.mxu0 0.0
    %1848 = vmatprep.subr.mxu0 0.0
    %1849 = vmatpush1.msra.mxu0 0.0
    %1850 = vmatprep.subr.mxu0 0.0
    %1851 = vmatpush1.msra.mxu0 0.0
    %1852 = vmatprep.subr.mxu0 0.0
    %1853 = vmatpush1.msra.mxu0 0.0
    %1854 = vmatprep.mubr.f32.mxu0 0.0
    %1855 = vmatmul.mubr.f32.gmra.mrb[0].mxu0 %v1788
    %v1856 = vpop.f32.mrb[0].mxu0
    %v1857 = vadd.f32 0.0, %v1856
    %v1858 = vpop.f32.mrb[0].mxu0
    %1859 = vdwg.mxu0
    %v1860 = vadd.f32 %v113, %v1857
    %v1861 = vxor.u32 %v1860, 2147483648
    %v1862 = vmul.f32 %v1861, 1.442695
    %v1863 = vpow.pop %v1862
    %v1864 = vadd.f32 %v1863, 1.0
    %v1865 = vrcp.pop %v1864
    %v1866 = vmul.f32 1.0, %v1865
    %1867 = vmatprep.subr.mxu0 0.0
    %1868 = vmatpush1.msra.mxu0 %v217
    %1869 = vmatprep.subr.mxu0 0.0
    %1870 = vmatpush1.msra.mxu0 %v218
    %1871 = vmatprep.subr.mxu0 0.0
    %1872 = vmatpush1.msra.mxu0 %v219
    %1873 = vmatprep.subr.mxu0 0.0
    %1874 = vmatpush1.msra.mxu0 %v220
    %1875 = vmatprep.subr.mxu0 0.0
    %1876 = vmatpush1.msra.mxu0 0.0
    %1877 = vmatprep.subr.mxu0 0.0
    %1878 = vmatpush1.msra.mxu0 0.0
    %1879 = vmatprep.subr.mxu0 0.0
    %1880 = vmatpush1.msra.mxu0 0.0
    %1881 = vmatprep.subr.mxu0 0.0
    %1882 = vmatpush1.msra.mxu0 0.0
    %1883 = vmatprep.subr.mxu0 0.0
    %1884 = vmatpush1.msra.mxu0 0.0
    %1885 = vmatprep.subr.mxu0 0.0
    %1886 = vmatpush1.msra.mxu0 0.0
    %1887 = vmatprep.subr.mxu0 0.0
    %1888 = vmatpush1.msra.mxu0 0.0
    %1889 = vmatprep.subr.mxu0 0.0
    %1890 = vmatpush1.msra.mxu0 0.0
    %1891 = vmatprep.subr.mxu0 0.0
    %1892 = vmatpush1.msra.mxu0 0.0
    %1893 = vmatprep.subr.mxu0 0.0
    %1894 = vmatpush1.msra.mxu0 0.0
    %1895 = vmatprep.subr.mxu0 0.0
    %1896 = vmatpush1.msra.mxu0 0.0
    %1897 = vmatprep.subr.mxu0 0.0
    %1898 = vmatpush1.msra.mxu0 0.0
    %1899 = vmatprep.subr.mxu0 0.0
    %1900 = vmatpush1.msra.mxu0 0.0
    %1901 = vmatprep.subr.mxu0 0.0
    %1902 = vmatpush1.msra.mxu0 0.0
    %1903 = vmatprep.subr.mxu0 0.0
    %1904 = vmatpush1.msra.mxu0 0.0
    %1905 = vmatprep.subr.mxu0 0.0
    %1906 = vmatpush1.msra.mxu0 0.0
    %1907 = vmatprep.subr.mxu0 0.0
    %1908 = vmatpush1.msra.mxu0 0.0
    %1909 = vmatprep.subr.mxu0 0.0
    %1910 = vmatpush1.msra.mxu0 0.0
    %1911 = vmatprep.subr.mxu0 0.0
    %1912 = vmatpush1.msra.mxu0 0.0
    %1913 = vmatprep.subr.mxu0 0.0
    %1914 = vmatpush1.msra.mxu0 0.0
    %1915 = vmatprep.subr.mxu0 0.0
    %1916 = vmatpush1.msra.mxu0 0.0
    %1917 = vmatprep.subr.mxu0 0.0
    %1918 = vmatpush1.msra.mxu0 0.0
    %1919 = vmatprep.subr.mxu0 0.0
    %1920 = vmatpush1.msra.mxu0 0.0
    %1921 = vmatprep.subr.mxu0 0.0
    %1922 = vmatpush1.msra.mxu0 0.0
    %1923 = vmatprep.subr.mxu0 0.0
    %1924 = vmatpush1.msra.mxu0 0.0
    %1925 = vmatprep.subr.mxu0 0.0
    %1926 = vmatpush1.msra.mxu0 0.0
    %1927 = vmatprep.subr.mxu0 0.0
    %1928 = vmatpush1.msra.mxu0 0.0
    %1929 = vmatprep.subr.mxu0 0.0
    %1930 = vmatpush1.msra.mxu0 0.0
    %1931 = vmatprep.mubr.f32.mxu0 0.0
    %1932 = vmatmul.mubr.f32.gmra.mrb[0].mxu0 %v1788
    %v1933 = vpop.f32.mrb[0].mxu0
    %v1934 = vadd.f32 0.0, %v1933
    %v1935 = vpop.f32.mrb[0].mxu0
    %1936 = vdwg.mxu0
    %v1937 = vadd.f32 %v145, %v1934
    %v1938 = vxor.u32 %v1937, 2147483648
    %v1939 = vmul.f32 %v1938, 1.442695
    %v1940 = vpow.pop %v1939
    %v1941 = vadd.f32 %v1940, 1.0
    %v1942 = vrcp.pop %v1941
    %v1943 = vmul.f32 1.0, %v1942
    %1944 = vmatprep.subr.mxu0 0.0
    %1945 = vmatpush1.msra.mxu0 %v222
    %1946 = vmatprep.subr.mxu0 0.0
    %1947 = vmatpush1.msra.mxu0 %v223
    %1948 = vmatprep.subr.mxu0 0.0
    %1949 = vmatpush1.msra.mxu0 %v224
    %1950 = vmatprep.subr.mxu0 0.0
    %1951 = vmatpush1.msra.mxu0 %v225
    %1952 = vmatprep.subr.mxu0 0.0
    %1953 = vmatpush1.msra.mxu0 0.0
    %1954 = vmatprep.subr.mxu0 0.0
    %1955 = vmatpush1.msra.mxu0 0.0
    %1956 = vmatprep.subr.mxu0 0.0
    %1957 = vmatpush1.msra.mxu0 0.0
    %1958 = vmatprep.subr.mxu0 0.0
    %1959 = vmatpush1.msra.mxu0 0.0
    %1960 = vmatprep.subr.mxu0 0.0
    %1961 = vmatpush1.msra.mxu0 0.0
    %1962 = vmatprep.subr.mxu0 0.0
    %1963 = vmatpush1.msra.mxu0 0.0
    %1964 = vmatprep.subr.mxu0 0.0
    %1965 = vmatpush1.msra.mxu0 0.0
    %1966 = vmatprep.subr.mxu0 0.0
    %1967 = vmatpush1.msra.mxu0 0.0
    %1968 = vmatprep.subr.mxu0 0.0
    %1969 = vmatpush1.msra.mxu0 0.0
    %1970 = vmatprep.subr.mxu0 0.0
    %1971 = vmatpush1.msra.mxu0 0.0
    %1972 = vmatprep.subr.mxu0 0.0
    %1973 = vmatpush1.msra.mxu0 0.0
    %1974 = vmatprep.subr.mxu0 0.0
    %1975 = vmatpush1.msra.mxu0 0.0
    %1976 = vmatprep.subr.mxu0 0.0
    %1977 = vmatpush1.msra.mxu0 0.0
    %1978 = vmatprep.subr.mxu0 0.0
    %1979 = vmatpush1.msra.mxu0 0.0
    %1980 = vmatprep.subr.mxu0 0.0
    %1981 = vmatpush1.msra.mxu0 0.0
    %1982 = vmatprep.subr.mxu0 0.0
    %1983 = vmatpush1.msra.mxu0 0.0
    %1984 = vmatprep.subr.mxu0 0.0
    %1985 = vmatpush1.msra.mxu0 0.0
    %1986 = vmatprep.subr.mxu0 0.0
    %1987 = vmatpush1.msra.mxu0 0.0
    %1988 = vmatprep.subr.mxu0 0.0
    %1989 = vmatpush1.msra.mxu0 0.0
    %1990 = vmatprep.subr.mxu0 0.0
    %1991 = vmatpush1.msra.mxu0 0.0
    %1992 = vmatprep.subr.mxu0 0.0
    %1993 = vmatpush1.msra.mxu0 0.0
    %1994 = vmatprep.subr.mxu0 0.0
    %1995 = vmatpush1.msra.mxu0 0.0
    %1996 = vmatprep.subr.mxu0 0.0
    %1997 = vmatpush1.msra.mxu0 0.0
    %1998 = vmatprep.subr.mxu0 0.0
    %1999 = vmatpush1.msra.mxu0 0.0
    %2000 = vmatprep.subr.mxu0 0.0
    %2001 = vmatpush1.msra.mxu0 0.0
    %2002 = vmatprep.subr.mxu0 0.0
    %2003 = vmatpush1.msra.mxu0 0.0
    %2004 = vmatprep.subr.mxu0 0.0
    %2005 = vmatpush1.msra.mxu0 0.0
    %2006 = vmatprep.subr.mxu0 0.0
    %2007 = vmatpush1.msra.mxu0 0.0
    %2008 = vmatprep.mubr.f32.mxu0 0.0
    %2009 = vmatmul.mubr.f32.gmra.mrb[0].mxu0 %v1788
    %v2010 = vpop.f32.mrb[0].mxu0
    %v2011 = vadd.f32 0.0, %v2010
    %v2012 = vpop.f32.mrb[0].mxu0
    %2013 = vdwg.mxu0
    %v2014 = vadd.f32 %v177, %v2011
    %v2015 = vtanh.pop %v2014
    %2016 = vmatprep.subr.mxu0 0.0
    %2017 = vmatpush1.msra.mxu0 %v227
    %2018 = vmatprep.subr.mxu0 0.0
    %2019 = vmatpush1.msra.mxu0 %v228
    %2020 = vmatprep.subr.mxu0 0.0
    %2021 = vmatpush1.msra.mxu0 %v229
    %2022 = vmatprep.subr.mxu0 0.0
    %2023 = vmatpush1.msra.mxu0 %v230
    %2024 = vmatprep.subr.mxu0 0.0
    %2025 = vmatpush1.msra.mxu0 0.0
    %2026 = vmatprep.subr.mxu0 0.0
    %2027 = vmatpush1.msra.mxu0 0.0
    %2028 = vmatprep.subr.mxu0 0.0
    %2029 = vmatpush1.msra.mxu0 0.0
    %2030 = vmatprep.subr.mxu0 0.0
    %2031 = vmatpush1.msra.mxu0 0.0
    %2032 = vmatprep.subr.mxu0 0.0
    %2033 = vmatpush1.msra.mxu0 0.0
    %2034 = vmatprep.subr.mxu0 0.0
    %2035 = vmatpush1.msra.mxu0 0.0
    %2036 = vmatprep.subr.mxu0 0.0
    %2037 = vmatpush1.msra.mxu0 0.0
    %2038 = vmatprep.subr.mxu0 0.0
    %2039 = vmatpush1.msra.mxu0 0.0
    %2040 = vmatprep.subr.mxu0 0.0
    %2041 = vmatpush1.msra.mxu0 0.0
    %2042 = vmatprep.subr.mxu0 0.0
    %2043 = vmatpush1.msra.mxu0 0.0
    %2044 = vmatprep.subr.mxu0 0.0
    %2045 = vmatpush1.msra.mxu0 0.0
    %2046 = vmatprep.subr.mxu0 0.0
    %2047 = vmatpush1.msra.mxu0 0.0
    %2048 = vmatprep.subr.mxu0 0.0
    %2049 = vmatpush1.msra.mxu0 0.0
    %2050 = vmatprep.subr.mxu0 0.0
    %2051 = vmatpush1.msra.mxu0 0.0
    %2052 = vmatprep.subr.mxu0 0.0
    %2053 = vmatpush1.msra.mxu0 0.0
    %2054 = vmatprep.subr.mxu0 0.0
    %2055 = vmatpush1.msra.mxu0 0.0
    %2056 = vmatprep.subr.mxu0 0.0
    %2057 = vmatpush1.msra.mxu0 0.0
    %2058 = vmatprep.subr.mxu0 0.0
    %2059 = vmatpush1.msra.mxu0 0.0
    %2060 = vmatprep.subr.mxu0 0.0
    %2061 = vmatpush1.msra.mxu0 0.0
    %2062 = vmatprep.subr.mxu0 0.0
    %2063 = vmatpush1.msra.mxu0 0.0
    %2064 = vmatprep.subr.mxu0 0.0
    %2065 = vmatpush1.msra.mxu0 0.0
    %2066 = vmatprep.subr.mxu0 0.0
    %2067 = vmatpush1.msra.mxu0 0.0
    %2068 = vmatprep.subr.mxu0 0.0
    %2069 = vmatpush1.msra.mxu0 0.0
    %2070 = vmatprep.subr.mxu0 0.0
    %2071 = vmatpush1.msra.mxu0 0.0
    %2072 = vmatprep.subr.mxu0 0.0
    %2073 = vmatpush1.msra.mxu0 0.0
    %2074 = vmatprep.subr.mxu0 0.0
    %2075 = vmatpush1.msra.mxu0 0.0
    %2076 = vmatprep.subr.mxu0 0.0
    %2077 = vmatpush1.msra.mxu0 0.0
    %2078 = vmatprep.subr.mxu0 0.0
    %2079 = vmatpush1.msra.mxu0 0.0
    %2080 = vmatprep.mubr.f32.mxu0 0.0
    %2081 = vmatmul.mubr.f32.gmra.mrb[0].mxu0 %v1788
    %v2082 = vpop.f32.mrb[0].mxu0
    %v2083 = vadd.f32 0.0, %v2082
    %v2084 = vpop.f32.mrb[0].mxu0
    %2085 = vdwg.mxu0
    %v2086 = vadd.f32 %v209, %v2083
    %v2087 = vxor.u32 %v2086, 2147483648
    %v2088 = vmul.f32 %v2087, 1.442695
    %v2089 = vpow.pop %v2088
    %v2090 = vadd.f32 %v2089, 1.0
    %v2091 = vrcp.pop %v2090
    %v2092 = vmul.f32 1.0, %v2091
    %v2093 = vmul.f32 %v1943, %v1784
    %v2094 = vmul.f32 %v1866, %v2015
    %v2095 = vadd.f32 %v2093, %v2094
    %v2096 = vtanh.pop %v2095
    %v2097 = vmul.f32 %v2092, %v2096
    %v2099 = vsel %vm231, %v2097, 0
    %2101 = vmatprep.subr.mxu0 0.0
    %2102 = vmatpush1.msra.mxu0 %v212
    %2103 = vmatprep.subr.mxu0 0.0
    %2104 = vmatpush1.msra.mxu0 %v213
    %2105 = vmatprep.subr.mxu0 0.0
    %2106 = vmatpush1.msra.mxu0 %v214
    %2107 = vmatprep.subr.mxu0 0.0
    %2108 = vmatpush1.msra.mxu0 %v215
    %2109 = vmatprep.subr.mxu0 0.0
    %2110 = vmatpush1.msra.mxu0 0.0
    %2111 = vmatprep.subr.mxu0 0.0
    %2112 = vmatpush1.msra.mxu0 0.0
    %2113 = vmatprep.subr.mxu0 0.0
    %2114 = vmatpush1.msra.mxu0 0.0
    %2115 = vmatprep.subr.mxu0 0.0
    %2116 = vmatpush1.msra.mxu0 0.0
    %2117 = vmatprep.subr.mxu0 0.0
    %2118 = vmatpush1.msra.mxu0 0.0
    %2119 = vmatprep.subr.mxu0 0.0
    %2120 = vmatpush1.msra.mxu0 0.0
    %2121 = vmatprep.subr.mxu0 0.0
    %2122 = vmatpush1.msra.mxu0 0.0
    %2123 = vmatprep.subr.mxu0 0.0
    %2124 = vmatpush1.msra.mxu0 0.0
    %2125 = vmatprep.subr.mxu0 0.0
    %2126 = vmatpush1.msra.mxu0 0.0
    %2127 = vmatprep.subr.mxu0 0.0
    %2128 = vmatpush1.msra.mxu0 0.0
    %2129 = vmatprep.subr.mxu0 0.0
    %2130 = vmatpush1.msra.mxu0 0.0
    %2131 = vmatprep.subr.mxu0 0.0
    %2132 = vmatpush1.msra.mxu0 0.0
    %2133 = vmatprep.subr.mxu0 0.0
    %2134 = vmatpush1.msra.mxu0 0.0
    %2135 = vmatprep.subr.mxu0 0.0
    %2136 = vmatpush1.msra.mxu0 0.0
    %2137 = vmatprep.subr.mxu0 0.0
    %2138 = vmatpush1.msra.mxu0 0.0
    %2139 = vmatprep.subr.mxu0 0.0
    %2140 = vmatpush1.msra.mxu0 0.0
    %2141 = vmatprep.subr.mxu0 0.0
    %2142 = vmatpush1.msra.mxu0 0.0
    %2143 = vmatprep.subr.mxu0 0.0
    %2144 = vmatpush1.msra.mxu0 0.0
    %2145 = vmatprep.subr.mxu0 0.0
    %2146 = vmatpush1.msra.mxu0 0.0
    %2147 = vmatprep.subr.mxu0 0.0
    %2148 = vmatpush1.msra.mxu0 0.0
    %2149 = vmatprep.subr.mxu0 0.0
    %2150 = vmatpush1.msra.mxu0 0.0
    %2151 = vmatprep.subr.mxu0 0.0
    %2152 = vmatpush1.msra.mxu0 0.0
    %2153 = vmatprep.subr.mxu0 0.0
    %2154 = vmatpush1.msra.mxu0 0.0
    %2155 = vmatprep.subr.mxu0 0.0
    %2156 = vmatpush1.msra.mxu0 0.0
    %2157 = vmatprep.subr.mxu0 0.0
    %2158 = vmatpush1.msra.mxu0 0.0
    %2159 = vmatprep.subr.mxu0 0.0
    %2160 = vmatpush1.msra.mxu0 0.0
    %2161 = vmatprep.subr.mxu0 0.0
    %2162 = vmatpush1.msra.mxu0 0.0
    %2163 = vmatprep.subr.mxu0 0.0
    %2164 = vmatpush1.msra.mxu0 0.0
    %2165 = vmatprep.mubr.f32.mxu0 0.0
    %2166 = vmatmul.mubr.f32.gmra.mrb[0].mxu0 %v2099
    %v2167 = vpop.f32.mrb[0].mxu0
    %v2168 = vadd.f32 0.0, %v2167
    %v2169 = vpop.f32.mrb[0].mxu0
    %2170 = vdwg.mxu0
    %v2171 = vadd.f32 %v114, %v2168
    %v2172 = vxor.u32 %v2171, 2147483648
    %v2173 = vmul.f32 %v2172, 1.442695
    %v2174 = vpow.pop %v2173
    %v2175 = vadd.f32 %v2174, 1.0
    %v2176 = vrcp.pop %v2175
    %v2177 = vmul.f32 1.0, %v2176
    %2178 = vmatprep.subr.mxu0 0.0
    %2179 = vmatpush1.msra.mxu0 %v217
    %2180 = vmatprep.subr.mxu0 0.0
    %2181 = vmatpush1.msra.mxu0 %v218
    %2182 = vmatprep.subr.mxu0 0.0
    %2183 = vmatpush1.msra.mxu0 %v219
    %2184 = vmatprep.subr.mxu0 0.0
    %2185 = vmatpush1.msra.mxu0 %v220
    %2186 = vmatprep.subr.mxu0 0.0
    %2187 = vmatpush1.msra.mxu0 0.0
    %2188 = vmatprep.subr.mxu0 0.0
    %2189 = vmatpush1.msra.mxu0 0.0
    %2190 = vmatprep.subr.mxu0 0.0
    %2191 = vmatpush1.msra.mxu0 0.0
    %2192 = vmatprep.subr.mxu0 0.0
    %2193 = vmatpush1.msra.mxu0 0.0
    %2194 = vmatprep.subr.mxu0 0.0
    %2195 = vmatpush1.msra.mxu0 0.0
    %2196 = vmatprep.subr.mxu0 0.0
    %2197 = vmatpush1.msra.mxu0 0.0
    %2198 = vmatprep.subr.mxu0 0.0
    %2199 = vmatpush1.msra.mxu0 0.0
    %2200 = vmatprep.subr.mxu0 0.0
    %2201 = vmatpush1.msra.mxu0 0.0
    %2202 = vmatprep.subr.mxu0 0.0
    %2203 = vmatpush1.msra.mxu0 0.0
    %2204 = vmatprep.subr.mxu0 0.0
    %2205 = vmatpush1.msra.mxu0 0.0
    %2206 = vmatprep.subr.mxu0 0.0
    %2207 = vmatpush1.msra.mxu0 0.0
    %2208 = vmatprep.subr.mxu0 0.0
    %2209 = vmatpush1.msra.mxu0 0.0
    %2210 = vmatprep.subr.mxu0 0.0
    %2211 = vmatpush1.msra.mxu0 0.0
    %2212 = vmatprep.subr.mxu0 0.0
    %2213 = vmatpush1.msra.mxu0 0.0
    %2214 = vmatprep.subr.mxu0 0.0
    %2215 = vmatpush1.msra.mxu0 0.0
    %2216 = vmatprep.subr.mxu0 0.0
    %2217 = vmatpush1.msra.mxu0 0.0
    %2218 = vmatprep.subr.mxu0 0.0
    %2219 = vmatpush1.msra.mxu0 0.0
    %2220 = vmatprep.subr.mxu0 0.0
    %2221 = vmatpush1.msra.mxu0 0.0
    %2222 = vmatprep.subr.mxu0 0.0
    %2223 = vmatpush1.msra.mxu0 0.0
    %2224 = vmatprep.subr.mxu0 0.0
    %2225 = vmatpush1.msra.mxu0 0.0
    %2226 = vmatprep.subr.mxu0 0.0
    %2227 = vmatpush1.msra.mxu0 0.0
    %2228 = vmatprep.subr.mxu0 0.0
    %2229 = vmatpush1.msra.mxu0 0.0
    %2230 = vmatprep.subr.mxu0 0.0
    %2231 = vmatpush1.msra.mxu0 0.0
    %2232 = vmatprep.subr.mxu0 0.0
    %2233 = vmatpush1.msra.mxu0 0.0
    %2234 = vmatprep.subr.mxu0 0.0
    %2235 = vmatpush1.msra.mxu0 0.0
    %2236 = vmatprep.subr.mxu0 0.0
    %2237 = vmatpush1.msra.mxu0 0.0
    %2238 = vmatprep.subr.mxu0 0.0
    %2239 = vmatpush1.msra.mxu0 0.0
    %2240 = vmatprep.subr.mxu0 0.0
    %2241 = vmatpush1.msra.mxu0 0.0
    %2242 = vmatprep.mubr.f32.mxu0 0.0
    %2243 = vmatmul.mubr.f32.gmra.mrb[0].mxu0 %v2099
    %v2244 = vpop.f32.mrb[0].mxu0
    %v2245 = vadd.f32 0.0, %v2244
    %v2246 = vpop.f32.mrb[0].mxu0
    %2247 = vdwg.mxu0
    %v2248 = vadd.f32 %v146, %v2245
    %v2249 = vxor.u32 %v2248, 2147483648
    %v2250 = vmul.f32 %v2249, 1.442695
    %v2251 = vpow.pop %v2250
    %v2252 = vadd.f32 %v2251, 1.0
    %v2253 = vrcp.pop %v2252
    %v2254 = vmul.f32 1.0, %v2253
    %2255 = vmatprep.subr.mxu0 0.0
    %2256 = vmatpush1.msra.mxu0 %v222
    %2257 = vmatprep.subr.mxu0 0.0
    %2258 = vmatpush1.msra.mxu0 %v223
    %2259 = vmatprep.subr.mxu0 0.0
    %2260 = vmatpush1.msra.mxu0 %v224
    %2261 = vmatprep.subr.mxu0 0.0
    %2262 = vmatpush1.msra.mxu0 %v225
    %2263 = vmatprep.subr.mxu0 0.0
    %2264 = vmatpush1.msra.mxu0 0.0
    %2265 = vmatprep.subr.mxu0 0.0
    %2266 = vmatpush1.msra.mxu0 0.0
    %2267 = vmatprep.subr.mxu0 0.0
    %2268 = vmatpush1.msra.mxu0 0.0
    %2269 = vmatprep.subr.mxu0 0.0
    %2270 = vmatpush1.msra.mxu0 0.0
    %2271 = vmatprep.subr.mxu0 0.0
    %2272 = vmatpush1.msra.mxu0 0.0
    %2273 = vmatprep.subr.mxu0 0.0
    %2274 = vmatpush1.msra.mxu0 0.0
    %2275 = vmatprep.subr.mxu0 0.0
    %2276 = vmatpush1.msra.mxu0 0.0
    %2277 = vmatprep.subr.mxu0 0.0
    %2278 = vmatpush1.msra.mxu0 0.0
    %2279 = vmatprep.subr.mxu0 0.0
    %2280 = vmatpush1.msra.mxu0 0.0
    %2281 = vmatprep.subr.mxu0 0.0
    %2282 = vmatpush1.msra.mxu0 0.0
    %2283 = vmatprep.subr.mxu0 0.0
    %2284 = vmatpush1.msra.mxu0 0.0
    %2285 = vmatprep.subr.mxu0 0.0
    %2286 = vmatpush1.msra.mxu0 0.0
    %2287 = vmatprep.subr.mxu0 0.0
    %2288 = vmatpush1.msra.mxu0 0.0
    %2289 = vmatprep.subr.mxu0 0.0
    %2290 = vmatpush1.msra.mxu0 0.0
    %2291 = vmatprep.subr.mxu0 0.0
    %2292 = vmatpush1.msra.mxu0 0.0
    %2293 = vmatprep.subr.mxu0 0.0
    %2294 = vmatpush1.msra.mxu0 0.0
    %2295 = vmatprep.subr.mxu0 0.0
    %2296 = vmatpush1.msra.mxu0 0.0
    %2297 = vmatprep.subr.mxu0 0.0
    %2298 = vmatpush1.msra.mxu0 0.0
    %2299 = vmatprep.subr.mxu0 0.0
    %2300 = vmatpush1.msra.mxu0 0.0
    %2301 = vmatprep.subr.mxu0 0.0
    %2302 = vmatpush1.msra.mxu0 0.0
    %2303 = vmatprep.subr.mxu0 0.0
    %2304 = vmatpush1.msra.mxu0 0.0
    %2305 = vmatprep.subr.mxu0 0.0
    %2306 = vmatpush1.msra.mxu0 0.0
    %2307 = vmatprep.subr.mxu0 0.0
    %2308 = vmatpush1.msra.mxu0 0.0
    %2309 = vmatprep.subr.mxu0 0.0
    %2310 = vmatpush1.msra.mxu0 0.0
    %2311 = vmatprep.subr.mxu0 0.0
    %2312 = vmatpush1.msra.mxu0 0.0
    %2313 = vmatprep.subr.mxu0 0.0
    %2314 = vmatpush1.msra.mxu0 0.0
    %2315 = vmatprep.subr.mxu0 0.0
    %2316 = vmatpush1.msra.mxu0 0.0
    %2317 = vmatprep.subr.mxu0 0.0
    %2318 = vmatpush1.msra.mxu0 0.0
    %2319 = vmatprep.mubr.f32.mxu0 0.0
    %2320 = vmatmul.mubr.f32.gmra.mrb[0].mxu0 %v2099
    %v2321 = vpop.f32.mrb[0].mxu0
    %v2322 = vadd.f32 0.0, %v2321
    %v2323 = vpop.f32.mrb[0].mxu0
    %2324 = vdwg.mxu0
    %v2325 = vadd.f32 %v178, %v2322
    %v2326 = vtanh.pop %v2325
    %2327 = vmatprep.subr.mxu0 0.0
    %2328 = vmatpush1.msra.mxu0 %v227
    %2329 = vmatprep.subr.mxu0 0.0
    %2330 = vmatpush1.msra.mxu0 %v228
    %2331 = vmatprep.subr.mxu0 0.0
    %2332 = vmatpush1.msra.mxu0 %v229
    %2333 = vmatprep.subr.mxu0 0.0
    %2334 = vmatpush1.msra.mxu0 %v230
    %2335 = vmatprep.subr.mxu0 0.0
    %2336 = vmatpush1.msra.mxu0 0.0
    %2337 = vmatprep.subr.mxu0 0.0
    %2338 = vmatpush1.msra.mxu0 0.0
    %2339 = vmatprep.subr.mxu0 0.0
    %2340 = vmatpush1.msra.mxu0 0.0
    %2341 = vmatprep.subr.mxu0 0.0
    %2342 = vmatpush1.msra.mxu0 0.0
    %2343 = vmatprep.subr.mxu0 0.0
    %2344 = vmatpush1.msra.mxu0 0.0
    %2345 = vmatprep.subr.mxu0 0.0
    %2346 = vmatpush1.msra.mxu0 0.0
    %2347 = vmatprep.subr.mxu0 0.0
    %2348 = vmatpush1.msra.mxu0 0.0
    %2349 = vmatprep.subr.mxu0 0.0
    %2350 = vmatpush1.msra.mxu0 0.0
    %2351 = vmatprep.subr.mxu0 0.0
    %2352 = vmatpush1.msra.mxu0 0.0
    %2353 = vmatprep.subr.mxu0 0.0
    %2354 = vmatpush1.msra.mxu0 0.0
    %2355 = vmatprep.subr.mxu0 0.0
    %2356 = vmatpush1.msra.mxu0 0.0
    %2357 = vmatprep.subr.mxu0 0.0
    %2358 = vmatpush1.msra.mxu0 0.0
    %2359 = vmatprep.subr.mxu0 0.0
    %2360 = vmatpush1.msra.mxu0 0.0
    %2361 = vmatprep.subr.mxu0 0.0
    %2362 = vmatpush1.msra.mxu0 0.0
    %2363 = vmatprep.subr.mxu0 0.0
    %2364 = vmatpush1.msra.mxu0 0.0
    %2365 = vmatprep.subr.mxu0 0.0
    %2366 = vmatpush1.msra.mxu0 0.0
    %2367 = vmatprep.subr.mxu0 0.0
    %2368 = vmatpush1.msra.mxu0 0.0
    %2369 = vmatprep.subr.mxu0 0.0
    %2370 = vmatpush1.msra.mxu0 0.0
    %2371 = vmatprep.subr.mxu0 0.0
    %2372 = vmatpush1.msra.mxu0 0.0
    %2373 = vmatprep.subr.mxu0 0.0
    %2374 = vmatpush1.msra.mxu0 0.0
    %2375 = vmatprep.subr.mxu0 0.0
    %2376 = vmatpush1.msra.mxu0 0.0
    %2377 = vmatprep.subr.mxu0 0.0
    %2378 = vmatpush1.msra.mxu0 0.0
    %2379 = vmatprep.subr.mxu0 0.0
    %2380 = vmatpush1.msra.mxu0 0.0
    %2381 = vmatprep.subr.mxu0 0.0
    %2382 = vmatpush1.msra.mxu0 0.0
    %2383 = vmatprep.subr.mxu0 0.0
    %2384 = vmatpush1.msra.mxu0 0.0
    %2385 = vmatprep.subr.mxu0 0.0
    %2386 = vmatpush1.msra.mxu0 0.0
    %2387 = vmatprep.subr.mxu0 0.0
    %2388 = vmatpush1.msra.mxu0 0.0
    %2389 = vmatprep.subr.mxu0 0.0
    %2390 = vmatpush1.msra.mxu0 0.0
    %2391 = vmatprep.mubr.f32.mxu0 0.0
    %2392 = vmatmul.mubr.f32.gmra.mrb[0].mxu0 %v2099
    %v2393 = vpop.f32.mrb[0].mxu0
    %v2394 = vadd.f32 0.0, %v2393
    %v2395 = vpop.f32.mrb[0].mxu0
    %2396 = vdwg.mxu0
    %v2397 = vadd.f32 %v210, %v2394
    %v2398 = vxor.u32 %v2397, 2147483648
    %v2399 = vmul.f32 %v2398, 1.442695
    %v2400 = vpow.pop %v2399
    %v2401 = vadd.f32 %v2400, 1.0
    %v2402 = vrcp.pop %v2401
    %v2403 = vmul.f32 1.0, %v2402
    %v2404 = vmul.f32 %v2254, %v2095
    %v2405 = vmul.f32 %v2177, %v2326
    %v2406 = vadd.f32 %v2404, %v2405
    %v2407 = vtanh.pop %v2406
    %v2408 = vmul.f32 %v2403, %v2407
    %v2410 = vsel %vm231, %v2408, 0
    %2412 = vmatprep.subr.mxu0 0.0
    %2413 = vmatpush1.msra.mxu0 %v212
    %2414 = vmatprep.subr.mxu0 0.0
    %2415 = vmatpush1.msra.mxu0 %v213
    %2416 = vmatprep.subr.mxu0 0.0
    %2417 = vmatpush1.msra.mxu0 %v214
    %2418 = vmatprep.subr.mxu0 0.0
    %2419 = vmatpush1.msra.mxu0 %v215
    %2420 = vmatprep.subr.mxu0 0.0
    %2421 = vmatpush1.msra.mxu0 0.0
    %2422 = vmatprep.subr.mxu0 0.0
    %2423 = vmatpush1.msra.mxu0 0.0
    %2424 = vmatprep.subr.mxu0 0.0
    %2425 = vmatpush1.msra.mxu0 0.0
    %2426 = vmatprep.subr.mxu0 0.0
    %2427 = vmatpush1.msra.mxu0 0.0
    %2428 = vmatprep.subr.mxu0 0.0
    %2429 = vmatpush1.msra.mxu0 0.0
    %2430 = vmatprep.subr.mxu0 0.0
    %2431 = vmatpush1.msra.mxu0 0.0
    %2432 = vmatprep.subr.mxu0 0.0
    %2433 = vmatpush1.msra.mxu0 0.0
    %2434 = vmatprep.subr.mxu0 0.0
    %2435 = vmatpush1.msra.mxu0 0.0
    %2436 = vmatprep.subr.mxu0 0.0
    %2437 = vmatpush1.msra.mxu0 0.0
    %2438 = vmatprep.subr.mxu0 0.0
    %2439 = vmatpush1.msra.mxu0 0.0
    %2440 = vmatprep.subr.mxu0 0.0
    %2441 = vmatpush1.msra.mxu0 0.0
    %2442 = vmatprep.subr.mxu0 0.0
    %2443 = vmatpush1.msra.mxu0 0.0
    %2444 = vmatprep.subr.mxu0 0.0
    %2445 = vmatpush1.msra.mxu0 0.0
    %2446 = vmatprep.subr.mxu0 0.0
    %2447 = vmatpush1.msra.mxu0 0.0
    %2448 = vmatprep.subr.mxu0 0.0
    %2449 = vmatpush1.msra.mxu0 0.0
    %2450 = vmatprep.subr.mxu0 0.0
    %2451 = vmatpush1.msra.mxu0 0.0
    %2452 = vmatprep.subr.mxu0 0.0
    %2453 = vmatpush1.msra.mxu0 0.0
    %2454 = vmatprep.subr.mxu0 0.0
    %2455 = vmatpush1.msra.mxu0 0.0
    %2456 = vmatprep.subr.mxu0 0.0
    %2457 = vmatpush1.msra.mxu0 0.0
    %2458 = vmatprep.subr.mxu0 0.0
    %2459 = vmatpush1.msra.mxu0 0.0
    %2460 = vmatprep.subr.mxu0 0.0
    %2461 = vmatpush1.msra.mxu0 0.0
    %2462 = vmatprep.subr.mxu0 0.0
    %2463 = vmatpush1.msra.mxu0 0.0
    %2464 = vmatprep.subr.mxu0 0.0
    %2465 = vmatpush1.msra.mxu0 0.0
    %2466 = vmatprep.subr.mxu0 0.0
    %2467 = vmatpush1.msra.mxu0 0.0
    %2468 = vmatprep.subr.mxu0 0.0
    %2469 = vmatpush1.msra.mxu0 0.0
    %2470 = vmatprep.subr.mxu0 0.0
    %2471 = vmatpush1.msra.mxu0 0.0
    %2472 = vmatprep.subr.mxu0 0.0
    %2473 = vmatpush1.msra.mxu0 0.0
    %2474 = vmatprep.subr.mxu0 0.0
    %2475 = vmatpush1.msra.mxu0 0.0
    %2476 = vmatprep.mubr.f32.mxu0 0.0
    %2477 = vmatmul.mubr.f32.gmra.mrb[0].mxu0 %v2410
    %v2478 = vpop.f32.mrb[0].mxu0
    %v2479 = vadd.f32 0.0, %v2478
    %v2480 = vpop.f32.mrb[0].mxu0
    %2481 = vdwg.mxu0
    %v2482 = vadd.f32 %v115, %v2479
    %v2483 = vxor.u32 %v2482, 2147483648
    %v2484 = vmul.f32 %v2483, 1.442695
    %v2485 = vpow.pop %v2484
    %v2486 = vadd.f32 %v2485, 1.0
    %v2487 = vrcp.pop %v2486
    %v2488 = vmul.f32 1.0, %v2487
    %2489 = vmatprep.subr.mxu0 0.0
    %2490 = vmatpush1.msra.mxu0 %v217
    %2491 = vmatprep.subr.mxu0 0.0
    %2492 = vmatpush1.msra.mxu0 %v218
    %2493 = vmatprep.subr.mxu0 0.0
    %2494 = vmatpush1.msra.mxu0 %v219
    %2495 = vmatprep.subr.mxu0 0.0
    %2496 = vmatpush1.msra.mxu0 %v220
    %2497 = vmatprep.subr.mxu0 0.0
    %2498 = vmatpush1.msra.mxu0 0.0
    %2499 = vmatprep.subr.mxu0 0.0
    %2500 = vmatpush1.msra.mxu0 0.0
    %2501 = vmatprep.subr.mxu0 0.0
    %2502 = vmatpush1.msra.mxu0 0.0
    %2503 = vmatprep.subr.mxu0 0.0
    %2504 = vmatpush1.msra.mxu0 0.0
    %2505 = vmatprep.subr.mxu0 0.0
    %2506 = vmatpush1.msra.mxu0 0.0
    %2507 = vmatprep.subr.mxu0 0.0
    %2508 = vmatpush1.msra.mxu0 0.0
    %2509 = vmatprep.subr.mxu0 0.0
    %2510 = vmatpush1.msra.mxu0 0.0
    %2511 = vmatprep.subr.mxu0 0.0
    %2512 = vmatpush1.msra.mxu0 0.0
    %2513 = vmatprep.subr.mxu0 0.0
    %2514 = vmatpush1.msra.mxu0 0.0
    %2515 = vmatprep.subr.mxu0 0.0
    %2516 = vmatpush1.msra.mxu0 0.0
    %2517 = vmatprep.subr.mxu0 0.0
    %2518 = vmatpush1.msra.mxu0 0.0
    %2519 = vmatprep.subr.mxu0 0.0
    %2520 = vmatpush1.msra.mxu0 0.0
    %2521 = vmatprep.subr.mxu0 0.0
    %2522 = vmatpush1.msra.mxu0 0.0
    %2523 = vmatprep.subr.mxu0 0.0
    %2524 = vmatpush1.msra.mxu0 0.0
    %2525 = vmatprep.subr.mxu0 0.0
    %2526 = vmatpush1.msra.mxu0 0.0
    %2527 = vmatprep.subr.mxu0 0.0
    %2528 = vmatpush1.msra.mxu0 0.0
    %2529 = vmatprep.subr.mxu0 0.0
    %2530 = vmatpush1.msra.mxu0 0.0
    %2531 = vmatprep.subr.mxu0 0.0
    %2532 = vmatpush1.msra.mxu0 0.0
    %2533 = vmatprep.subr.mxu0 0.0
    %2534 = vmatpush1.msra.mxu0 0.0
    %2535 = vmatprep.subr.mxu0 0.0
    %2536 = vmatpush1.msra.mxu0 0.0
    %2537 = vmatprep.subr.mxu0 0.0
    %2538 = vmatpush1.msra.mxu0 0.0
    %2539 = vmatprep.subr.mxu0 0.0
    %2540 = vmatpush1.msra.mxu0 0.0
    %2541 = vmatprep.subr.mxu0 0.0
    %2542 = vmatpush1.msra.mxu0 0.0
    %2543 = vmatprep.subr.mxu0 0.0
    %2544 = vmatpush1.msra.mxu0 0.0
    %2545 = vmatprep.subr.mxu0 0.0
    %2546 = vmatpush1.msra.mxu0 0.0
    %2547 = vmatprep.subr.mxu0 0.0
    %2548 = vmatpush1.msra.mxu0 0.0
    %2549 = vmatprep.subr.mxu0 0.0
    %2550 = vmatpush1.msra.mxu0 0.0
    %2551 = vmatprep.subr.mxu0 0.0
    %2552 = vmatpush1.msra.mxu0 0.0
    %2553 = vmatprep.mubr.f32.mxu0 0.0
    %2554 = vmatmul.mubr.f32.gmra.mrb[0].mxu0 %v2410
    %v2555 = vpop.f32.mrb[0].mxu0
    %v2556 = vadd.f32 0.0, %v2555
    %v2557 = vpop.f32.mrb[0].mxu0
    %2558 = vdwg.mxu0
    %v2559 = vadd.f32 %v147, %v2556
    %v2560 = vxor.u32 %v2559, 2147483648
    %v2561 = vmul.f32 %v2560, 1.442695
    %v2562 = vpow.pop %v2561
    %v2563 = vadd.f32 %v2562, 1.0
    %v2564 = vrcp.pop %v2563
    %v2565 = vmul.f32 1.0, %v2564
    %2566 = vmatprep.subr.mxu0 0.0
    %2567 = vmatpush1.msra.mxu0 %v222
    %2568 = vmatprep.subr.mxu0 0.0
    %2569 = vmatpush1.msra.mxu0 %v223
    %2570 = vmatprep.subr.mxu0 0.0
    %2571 = vmatpush1.msra.mxu0 %v224
    %2572 = vmatprep.subr.mxu0 0.0
    %2573 = vmatpush1.msra.mxu0 %v225
    %2574 = vmatprep.subr.mxu0 0.0
    %2575 = vmatpush1.msra.mxu0 0.0
    %2576 = vmatprep.subr.mxu0 0.0
    %2577 = vmatpush1.msra.mxu0 0.0
    %2578 = vmatprep.subr.mxu0 0.0
    %2579 = vmatpush1.msra.mxu0 0.0
    %2580 = vmatprep.subr.mxu0 0.0
    %2581 = vmatpush1.msra.mxu0 0.0
    %2582 = vmatprep.subr.mxu0 0.0
    %2583 = vmatpush1.msra.mxu0 0.0
    %2584 = vmatprep.subr.mxu0 0.0
    %2585 = vmatpush1.msra.mxu0 0.0
    %2586 = vmatprep.subr.mxu0 0.0
    %2587 = vmatpush1.msra.mxu0 0.0
    %2588 = vmatprep.subr.mxu0 0.0
    %2589 = vmatpush1.msra.mxu0 0.0
    %2590 = vmatprep.subr.mxu0 0.0
    %2591 = vmatpush1.msra.mxu0 0.0
    %2592 = vmatprep.subr.mxu0 0.0
    %2593 = vmatpush1.msra.mxu0 0.0
    %2594 = vmatprep.subr.mxu0 0.0
    %2595 = vmatpush1.msra.mxu0 0.0
    %2596 = vmatprep.subr.mxu0 0.0
    %2597 = vmatpush1.msra.mxu0 0.0
    %2598 = vmatprep.subr.mxu0 0.0
    %2599 = vmatpush1.msra.mxu0 0.0
    %2600 = vmatprep.subr.mxu0 0.0
    %2601 = vmatpush1.msra.mxu0 0.0
    %2602 = vmatprep.subr.mxu0 0.0
    %2603 = vmatpush1.msra.mxu0 0.0
    %2604 = vmatprep.subr.mxu0 0.0
    %2605 = vmatpush1.msra.mxu0 0.0
    %2606 = vmatprep.subr.mxu0 0.0
    %2607 = vmatpush1.msra.mxu0 0.0
    %2608 = vmatprep.subr.mxu0 0.0
    %2609 = vmatpush1.msra.mxu0 0.0
    %2610 = vmatprep.subr.mxu0 0.0
    %2611 = vmatpush1.msra.mxu0 0.0
    %2612 = vmatprep.subr.mxu0 0.0
    %2613 = vmatpush1.msra.mxu0 0.0
    %2614 = vmatprep.subr.mxu0 0.0
    %2615 = vmatpush1.msra.mxu0 0.0
    %2616 = vmatprep.subr.mxu0 0.0
    %2617 = vmatpush1.msra.mxu0 0.0
    %2618 = vmatprep.subr.mxu0 0.0
    %2619 = vmatpush1.msra.mxu0 0.0
    %2620 = vmatprep.subr.mxu0 0.0
    %2621 = vmatpush1.msra.mxu0 0.0
    %2622 = vmatprep.subr.mxu0 0.0
    %2623 = vmatpush1.msra.mxu0 0.0
    %2624 = vmatprep.subr.mxu0 0.0
    %2625 = vmatpush1.msra.mxu0 0.0
    %2626 = vmatprep.subr.mxu0 0.0
    %2627 = vmatpush1.msra.mxu0 0.0
    %2628 = vmatprep.subr.mxu0 0.0
    %2629 = vmatpush1.msra.mxu0 0.0
    %2630 = vmatprep.mubr.f32.mxu0 0.0
    %2631 = vmatmul.mubr.f32.gmra.mrb[0].mxu0 %v2410
    %v2632 = vpop.f32.mrb[0].mxu0
    %v2633 = vadd.f32 0.0, %v2632
    %v2634 = vpop.f32.mrb[0].mxu0
    %2635 = vdwg.mxu0
    %v2636 = vadd.f32 %v179, %v2633
    %v2637 = vtanh.pop %v2636
    %2638 = vmatprep.subr.mxu0 0.0
    %2639 = vmatpush1.msra.mxu0 %v227
    %2640 = vmatprep.subr.mxu0 0.0
    %2641 = vmatpush1.msra.mxu0 %v228
    %2642 = vmatprep.subr.mxu0 0.0
    %2643 = vmatpush1.msra.mxu0 %v229
    %2644 = vmatprep.subr.mxu0 0.0
    %2645 = vmatpush1.msra.mxu0 %v230
    %2646 = vmatprep.subr.mxu0 0.0
    %2647 = vmatpush1.msra.mxu0 0.0
    %2648 = vmatprep.subr.mxu0 0.0
    %2649 = vmatpush1.msra.mxu0 0.0
    %2650 = vmatprep.subr.mxu0 0.0
    %2651 = vmatpush1.msra.mxu0 0.0
    %2652 = vmatprep.subr.mxu0 0.0
    %2653 = vmatpush1.msra.mxu0 0.0
    %2654 = vmatprep.subr.mxu0 0.0
    %2655 = vmatpush1.msra.mxu0 0.0
    %2656 = vmatprep.subr.mxu0 0.0
    %2657 = vmatpush1.msra.mxu0 0.0
    %2658 = vmatprep.subr.mxu0 0.0
    %2659 = vmatpush1.msra.mxu0 0.0
    %2660 = vmatprep.subr.mxu0 0.0
    %2661 = vmatpush1.msra.mxu0 0.0
    %2662 = vmatprep.subr.mxu0 0.0
    %2663 = vmatpush1.msra.mxu0 0.0
    %2664 = vmatprep.subr.mxu0 0.0
    %2665 = vmatpush1.msra.mxu0 0.0
    %2666 = vmatprep.subr.mxu0 0.0
    %2667 = vmatpush1.msra.mxu0 0.0
    %2668 = vmatprep.subr.mxu0 0.0
    %2669 = vmatpush1.msra.mxu0 0.0
    %2670 = vmatprep.subr.mxu0 0.0
    %2671 = vmatpush1.msra.mxu0 0.0
    %2672 = vmatprep.subr.mxu0 0.0
    %2673 = vmatpush1.msra.mxu0 0.0
    %2674 = vmatprep.subr.mxu0 0.0
    %2675 = vmatpush1.msra.mxu0 0.0
    %2676 = vmatprep.subr.mxu0 0.0
    %2677 = vmatpush1.msra.mxu0 0.0
    %2678 = vmatprep.subr.mxu0 0.0
    %2679 = vmatpush1.msra.mxu0 0.0
    %2680 = vmatprep.subr.mxu0 0.0
    %2681 = vmatpush1.msra.mxu0 0.0
    %2682 = vmatprep.subr.mxu0 0.0
    %2683 = vmatpush1.msra.mxu0 0.0
    %2684 = vmatprep.subr.mxu0 0.0
    %2685 = vmatpush1.msra.mxu0 0.0
    %2686 = vmatprep.subr.mxu0 0.0
    %2687 = vmatpush1.msra.mxu0 0.0
    %2688 = vmatprep.subr.mxu0 0.0
    %2689 = vmatpush1.msra.mxu0 0.0
    %2690 = vmatprep.subr.mxu0 0.0
    %2691 = vmatpush1.msra.mxu0 0.0
    %2692 = vmatprep.subr.mxu0 0.0
    %2693 = vmatpush1.msra.mxu0 0.0
    %2694 = vmatprep.subr.mxu0 0.0
    %2695 = vmatpush1.msra.mxu0 0.0
    %2696 = vmatprep.subr.mxu0 0.0
    %2697 = vmatpush1.msra.mxu0 0.0
    %2698 = vmatprep.subr.mxu0 0.0
    %2699 = vmatpush1.msra.mxu0 0.0
    %2700 = vmatprep.subr.mxu0 0.0
    %2701 = vmatpush1.msra.mxu0 0.0
    %2702 = vmatprep.mubr.f32.mxu0 0.0
    %2703 = vmatmul.mubr.f32.gmra.mrb[0].mxu0 %v2410
    %v2704 = vpop.f32.mrb[0].mxu0
    %v2705 = vadd.f32 0.0, %v2704
    %v2706 = vpop.f32.mrb[0].mxu0
    %2707 = vdwg.mxu0
    %v2708 = vadd.f32 %v211, %v2705
    %v2709 = vxor.u32 %v2708, 2147483648
    %v2710 = vmul.f32 %v2709, 1.442695
    %v2711 = vpow.pop %v2710
    %v2712 = vadd.f32 %v2711, 1.0
    %v2713 = vrcp.pop %v2712
    %v2714 = vmul.f32 1.0, %v2713
    %v2715 = vmul.f32 %v2565, %v2406
    %v2716 = vmul.f32 %v2488, %v2637
    %v2717 = vadd.f32 %v2715, %v2716
    %v2718 = vtanh.pop %v2717
    %v2719 = vmul.f32 %v2714, %v2718
    %v2720 = vld [vmem:[%s4] sm:$0xff]
    %v2721 = vld [vmem:[%s4 + $0x8] sm:$0xff]
    %v2722 = vld [vmem:[%s4 + $0x10] sm:$0xff]
    %v2723 = vld [vmem:[%s4 + $0x18] sm:$0xff]
    %v2724 = vld [vmem:[%s5] sm:$0x1]
    %v2726 = vlaneseq
    %v2727 = vshrl.u32 %v2726, 7
    %v2728 = vsub.s32 0, %v2727
    %v2729 = vrot.slane %v2724, %v2728
    %v2732 = vsel %vm231, %v2719, 0
    %2734 = vmatprep.subr.mxu0 0.0
    %2735 = vmatpush1.msra.mxu0 %v2720
    %2736 = vmatprep.subr.mxu0 0.0
    %2737 = vmatpush1.msra.mxu0 %v2721
    %2738 = vmatprep.subr.mxu0 0.0
    %2739 = vmatpush1.msra.mxu0 %v2722
    %2740 = vmatprep.subr.mxu0 0.0
    %2741 = vmatpush1.msra.mxu0 %v2723
    %2742 = vmatprep.subr.mxu0 0.0
    %2743 = vmatpush1.msra.mxu0 0.0
    %2744 = vmatprep.subr.mxu0 0.0
    %2745 = vmatpush1.msra.mxu0 0.0
    %2746 = vmatprep.subr.mxu0 0.0
    %2747 = vmatpush1.msra.mxu0 0.0
    %2748 = vmatprep.subr.mxu0 0.0
    %2749 = vmatpush1.msra.mxu0 0.0
    %2750 = vmatprep.subr.mxu0 0.0
    %2751 = vmatpush1.msra.mxu0 0.0
    %2752 = vmatprep.subr.mxu0 0.0
    %2753 = vmatpush1.msra.mxu0 0.0
    %2754 = vmatprep.subr.mxu0 0.0
    %2755 = vmatpush1.msra.mxu0 0.0
    %2756 = vmatprep.subr.mxu0 0.0
    %2757 = vmatpush1.msra.mxu0 0.0
    %2758 = vmatprep.subr.mxu0 0.0
    %2759 = vmatpush1.msra.mxu0 0.0
    %2760 = vmatprep.subr.mxu0 0.0
    %2761 = vmatpush1.msra.mxu0 0.0
    %2762 = vmatprep.subr.mxu0 0.0
    %2763 = vmatpush1.msra.mxu0 0.0
    %2764 = vmatprep.subr.mxu0 0.0
    %2765 = vmatpush1.msra.mxu0 0.0
    %2766 = vmatprep.subr.mxu0 0.0
    %2767 = vmatpush1.msra.mxu0 0.0
    %2768 = vmatprep.subr.mxu0 0.0
    %2769 = vmatpush1.msra.mxu0 0.0
    %2770 = vmatprep.subr.mxu0 0.0
    %2771 = vmatpush1.msra.mxu0 0.0
    %2772 = vmatprep.subr.mxu0 0.0
    %2773 = vmatpush1.msra.mxu0 0.0
    %2774 = vmatprep.subr.mxu0 0.0
    %2775 = vmatpush1.msra.mxu0 0.0
    %2776 = vmatprep.subr.mxu0 0.0
    %2777 = vmatpush1.msra.mxu0 0.0
    %2778 = vmatprep.subr.mxu0 0.0
    %2779 = vmatpush1.msra.mxu0 0.0
    %2780 = vmatprep.subr.mxu0 0.0
    %2781 = vmatpush1.msra.mxu0 0.0
    %2782 = vmatprep.subr.mxu0 0.0
    %2783 = vmatpush1.msra.mxu0 0.0
    %2784 = vmatprep.subr.mxu0 0.0
    %2785 = vmatpush1.msra.mxu0 0.0
    %2786 = vmatprep.subr.mxu0 0.0
    %2787 = vmatpush1.msra.mxu0 0.0
    %2788 = vmatprep.subr.mxu0 0.0
    %2789 = vmatpush1.msra.mxu0 0.0
    %2790 = vmatprep.subr.mxu0 0.0
    %2791 = vmatpush1.msra.mxu0 0.0
    %2792 = vmatprep.subr.mxu0 0.0
    %2793 = vmatpush1.msra.mxu0 0.0
    %2794 = vmatprep.subr.mxu0 0.0
    %2795 = vmatpush1.msra.mxu0 0.0
    %2796 = vmatprep.subr.mxu0 0.0
    %2797 = vmatpush1.msra.mxu0 0.0
    %2798 = vmatprep.mubr.f32.mxu0 0.0
    %2799 = vmatmul.mubr.f32.gmra.mrb[0].mxu0 %v2732
    %v2800 = vpop.f32.mrb[0].mxu0
    %v2801 = vadd.f32 %v2729, %v2800
    %v2802 = vpop.f32.mrb[0].mxu0
    %2803 = vdwg.mxu0
    %vm2804 = vcmask 123904
    %v2805 = vsel %vm2804, %v2801, -inf
    %v2806 = vrot.slane %v2805, 4
    %v2807 = vmax.f32 %v2805, %v2806
    %v2808 = vrot.slane %v2807, 2
    %v2809 = vmax.f32 %v2807, %v2808
    %v2810 = vrot.slane %v2809, 1
    %v2811 = vmax.f32 %v2809, %v2810
    %v2812 = vsub.f32 %v2801, %v2811
    %v2813 = vmul.f32 %v2812, 1.442695
    %v2814 = vpow.pop %v2813
    %v2815 = vsel %vm2804, %v2814, 0.0
    %v2816 = vrot.slane %v2815, 4
    %v2817 = vadd.f32 %v2815, %v2816
    %v2818 = vrot.slane %v2817, 2
    %v2819 = vadd.f32 %v2817, %v2818
    %v2820 = vrot.slane %v2819, 1
    %v2821 = vadd.f32 %v2819, %v2820
    %v2822 = vlog2.pop %v2821
    %v2823 = vmul.f32 %v2822, 0.6931472
    %v2824 = vsub.f32 %v2812, %v2823
    %2825 = vst.msk [vmem:[#allocation5] sm:$0x3] %vm2804, %v2824
    // Predicated region
    $region30: #{tpu_custom_call.1} parent=1 // pred_check
      _
    $region31: #{tpu_custom_call.1} parent=1 // pred_check_branch
      %2827 = sbr.rel (0) target = $region33
    $region32: #{tpu_custom_call.1} parent=1 // pred_region
      %s2829 = ssub.s32 32, 32
      %2830 = vsyncadd [#allocation4], %s2829
      %s2832 = sshll.u32 [#allocation5], 4
      %s2833 = int_to_ptr.vmem [resolvable:$true] %s2832
      %2835 = dma.vmem_to_hbm [thread:$0]  %s2833, 32, %s6, [#allocation4]
    $region33: #{tpu_custom_call.1} parent=1 // pred_fallthru
      _
    // Predicated region
    $region34: #{tpu_custom_call.1} parent=1 // pred_check
      _
    $region35: #{tpu_custom_call.1} parent=1 // pred_check_branch
      %2837 = sbr.rel (0) target = $region37
    $region36: #{tpu_custom_call.1} parent=1 // pred_region
      %2838 = dma.done [#allocation4], 32
    $region37: #{tpu_custom_call.1} parent=1 // pred_fallthru
      _
    %2839 = vsyncpa [#allocation3], 1
    %2840 = vsyncpa [#allocation4], 1

</llo_original>
